<compile_context>
chip_gen: v5e
topology: v5e:2x2
jax: 0.10.0
libtpu: 0.0.40
codegen_flags: <defaults>
</compile_context>

<pallas_src>
import functools
import math

import jax
import jax.numpy as jnp
from jax.experimental import pallas as pl
from jax.experimental.pallas import tpu as pltpu


def _ba_kernel(x_ref, wk_ref, b_ref, o_ref, col_ref, acc_ref, *, H, W, C):
    # x_ref:   (H, W, C)      input image (f32), channels on lanes
    # wk_ref:  (3, 3*C, C)    weights, dx folded into K: [dy, dx*C + ci, co] (bf16)
    # b_ref:   (1, C)         conv bias (f32)
    # o_ref:   (H, W, C)      output
    # col_ref: (H+2, W, 3*C)  bf16 scratch: col[a, w, dx*C + ci] = xpad[a, w+dx, ci]
    # acc_ref: (H*W, C)       f32 conv accumulator scratch
    xf = x_ref[...]                       # single VMEM load of x (f32)
    xb = xf.astype(jnp.bfloat16)          # MXU operand

    # --- build the zero-padded, dx-folded slab ------------------------------------
    # Halo-only zeroing (rows 0 / H+1 and the two wrap columns); interior bands are
    # fully overwritten below, so no full-slab memset. Re-done every grid step (no
    # pl.when gating) so it stays correct under megacore "parallel" sharding.
    zrow = jnp.zeros((1, W, 3 * C), jnp.bfloat16)
    zcol = jnp.zeros((H, 1, C), jnp.bfloat16)
    col_ref[0:1] = zrow
    col_ref[H + 1:H + 2] = zrow
    col_ref[1:H + 1, :, C:2 * C] = xb                       # dx = 1 (center), full width
    col_ref[1:H + 1, 1:W, 0:C] = xb[:, 0:W - 1, :]          # dx = 0 (left neighbor)
    col_ref[1:H + 1, 0:1, 0:C] = zcol                       #   w = 0 halo
    col_ref[1:H + 1, 0:W - 1, 2 * C:3 * C] = xb[:, 1:W, :]  # dx = 2 (right neighbor)
    col_ref[1:H + 1, W - 1:W, 2 * C:3 * C] = zcol           #   w = W-1 halo
    # TODO(synk): the two offset band stores above lower to masked vst; a pltpu.roll /
    # full-width-store variant would remove the masking on v5e if the packed-bf16
    # sublane rotate is supported by the target toolchain.

    # --- three deep-K MXU matmuls (M = H*W, K = 3*C, N = C), f32 acc in VMEM -------
    acc_ref[...] = jnp.dot(col_ref[0:H].reshape(H * W, 3 * C), wk_ref[0],
                           preferred_element_type=jnp.float32)
    acc_ref[...] += jnp.dot(col_ref[1:H + 1].reshape(H * W, 3 * C), wk_ref[1],
                            preferred_element_type=jnp.float32)
    acc_ref[...] += jnp.dot(col_ref[2:H + 2].reshape(H * W, 3 * C), wk_ref[2],
                            preferred_element_type=jnp.float32)

    # --- f32 epilogue: bias, sigmoid (EUP exp + approx reciprocal), multiply -------
    z = acc_ref[...] + b_ref[...]
    att = pl.reciprocal(1.0 + jnp.exp(-z), approx=True)
    o_ref[...] = (xf.reshape(H * W, C) * att).reshape(H, W, C).astype(o_ref.dtype)


def ba_prepare_params(w_oihw, bias):
    """One-time re-layout of the PyTorch conv params (hoisted out of the hot path)."""
    C = w_oihw.shape[0]
    assert w_oihw.shape == (C, C, 3, 3)
    # (Cout, Cin, 3, 3) -> [dy, dx*Cin + ci, co]; bf16 for the MXU.
    wk = jnp.transpose(w_oihw, (2, 3, 1, 0)).reshape(3, 3 * C, C).astype(jnp.bfloat16)
    b2 = bias.reshape(1, C).astype(jnp.float32)
    return wk, b2


def ba_forward_nhwc(x_nhwc, wk, b2):
    """Hot path: NHWC in / NHWC out with pre-prepared params (no wrapper transposes)."""
    N, H, W, C = x_nhwc.shape
    assert wk.shape == (3, 3 * C, C) and b2.shape == (1, C)
    # Lane-dense layout assumptions (unmasked vst); pad inputs otherwise.
    assert C % 128 == 0, "C must be a multiple of 128 (lane width)"
    assert W % 16 == 0, "W must be a multiple of 16 (packed bf16 sublane tile)"
    assert (H * W) % 8 == 0

    # TODO(synk): for large H*W add a parallel row-tile grid axis (2-row halo) and set
    # vmem_limit_bytes so the col scratch stays within v7x's 64 MiB VMEM; on v5e/v6e
    # with tiny batches, folding batch into M would remove the ~0.35us/step grid cost.
    return pl.pallas_call(
        functools.partial(_ba_kernel, H=H, W=W, C=C),
        out_shape=jax.ShapeDtypeStruct((N, H, W, C), x_nhwc.dtype),
        grid=(N,),
        in_specs=[
            pl.BlockSpec((None, H, W, C), lambda b: (b, 0, 0, 0)),
            pl.BlockSpec((3, 3 * C, C), lambda b: (0, 0, 0)),
            pl.BlockSpec((1, C), lambda b: (0, 0)),
        ],
        out_specs=pl.BlockSpec((None, H, W, C), lambda b: (b, 0, 0, 0)),
        scratch_shapes=[
            pltpu.VMEM((H + 2, W, 3 * C), jnp.bfloat16),   # dx-folded im2col slab
            pltpu.VMEM((H * W, C), jnp.float32),           # f32 conv accumulator
        ],
        compiler_params=pltpu.CompilerParams(
            dimension_semantics=("parallel",)),
    )(x_nhwc, wk, b2)


def ba_forward_nchw(x_nchw, w_oihw, bias):
    """PyTorch-layout compatibility wrapper: NCHW in / NCHW out."""
    wk, b2 = ba_prepare_params(w_oihw, bias)
    x = jnp.transpose(x_nchw, (0, 2, 3, 1))
    out = ba_forward_nhwc(x, wk, b2)
    return jnp.transpose(out, (0, 3, 1, 2))


def _reference(x, w, b):
    conv = jax.lax.conv_general_dilated(
        x, w, window_strides=(1, 1), padding=((1, 1), (1, 1)),
        dimension_numbers=("NCHW", "OIHW", "NCHW"))
    att = jax.nn.sigmoid(conv + b[None, :, None, None])
    return x * att


if __name__ == "__main__":
    key = jax.random.PRNGKey(0)
    kx, kw, kb = jax.random.split(key, 3)

    # Small but MXU/lane-friendly shapes: batch=2, channels=128, 16x16 spatial.
    N, C, H, W = 2, 128, 16, 16
    x_nchw = jax.random.normal(kx, (N, C, H, W), jnp.float32)

    # PyTorch-style uniform init, bound = 1/sqrt(fan_in).
    bound = 1.0 / math.sqrt(C * 9)
    w = jax.random.uniform(kw, (C, C, 3, 3), jnp.float32, -bound, bound)
    b = jax.random.uniform(kb, (C,), jnp.float32, -bound, bound)

    # Hot path: params prepared once, activations kept NHWC (no per-call transposes).
    wk, b2 = ba_prepare_params(w, b)
    x_nhwc = jnp.transpose(x_nchw, (0, 2, 3, 1))
    fwd = jax.jit(ba_forward_nhwc)
    out_nhwc = jax.block_until_ready(fwd(x_nhwc, wk, b2))
    out = jnp.transpose(out_nhwc, (0, 3, 1, 2))

    ref = _reference(x_nchw, w, b)
    assert out.shape == (N, C, H, W), out.shape
    # bf16 MXU operands + approx reciprocal -> relaxed tolerance vs the f32 reference.
    err = float(jnp.max(jnp.abs(out - ref)))
    assert jnp.allclose(out, ref, atol=3e-2, rtol=3e-2), err
    print("KERNEL_OK")
</pallas_src>

<mosaic_0001>
module attributes {stable_mosaic.version = 11 : i64} {
  func.func @_ba_kernel(%arg0: i32, %arg1: memref<1x16x16x128xf32, #tpu.memory_space<vmem>>, %arg2: memref<3x384x128xbf16, #tpu.memory_space<vmem>>, %arg3: memref<1x128xf32, #tpu.memory_space<vmem>>, %arg4: memref<1x16x16x128xf32, #tpu.memory_space<vmem>>, %arg5: memref<18x16x384xbf16, #tpu.memory_space<vmem>>, %arg6: memref<256x128xf32, #tpu.memory_space<vmem>>) attributes {dimension_semantics = [#tpu.dimension_semantics<parallel>], iteration_bounds = array<i64: 2>, scalar_prefetch = 0 : i64, scratch_operands = 2 : i64, tpu.core_type = #tpu.core_type<tc>, window_params = [{transform_indices = @transform_0, window_bounds = array<i64: 1, 16, 16, 128>}, {pipeline_mode = #tpu.pipeline_mode<synchronous>, transform_indices = @transform_1, window_bounds = array<i64: 3, 384, 128>}, {pipeline_mode = #tpu.pipeline_mode<synchronous>, transform_indices = @transform_2, window_bounds = array<i64: 1, 128>}, {transform_indices = @transform_3, window_bounds = array<i64: 1, 16, 16, 128>}]} {
    %c0 = arith.constant 0 : index
    %c0_0 = arith.constant 0 : index
    %c0_1 = arith.constant 0 : index
    %c0_2 = arith.constant 0 : index
    %0 = vector.load %arg1[%c0, %c0_0, %c0_1, %c0_2] : memref<1x16x16x128xf32, #tpu.memory_space<vmem>>, vector<1x16x16x128xf32>
    %1 = vector.shape_cast %0 : vector<1x16x16x128xf32> to vector<16x16x128xf32>
    %2 = arith.truncf %1 : vector<16x16x128xf32> to vector<16x16x128xbf16>
    %cst = arith.constant 0.000000e+00 : bf16
    %3 = vector.broadcast %cst : bf16 to vector<1x16x384xbf16>
    %cst_3 = arith.constant 0.000000e+00 : bf16
    %4 = vector.broadcast %cst_3 : bf16 to vector<16x1x128xbf16>
    %c0_4 = arith.constant 0 : index
    %c0_5 = arith.constant 0 : index
    %c0_6 = arith.constant 0 : index
    %5 = vector.load %arg5[%c0_4, %c0_5, %c0_6] : memref<18x16x384xbf16, #tpu.memory_space<vmem>>, vector<1x16x384xbf16>
    tpu.vector_store %arg5[%c0_4, %c0_5, %c0_6], %3 {strides = array<i32>} : memref<18x16x384xbf16, #tpu.memory_space<vmem>>, vector<1x16x384xbf16>,
    %c17 = arith.constant 17 : index
    %c0_7 = arith.constant 0 : index
    %c0_8 = arith.constant 0 : index
    %6 = vector.load %arg5[%c17, %c0_7, %c0_8] : memref<18x16x384xbf16, #tpu.memory_space<vmem>>, vector<1x16x384xbf16>
    tpu.vector_store %arg5[%c17, %c0_7, %c0_8], %3 {strides = array<i32>} : memref<18x16x384xbf16, #tpu.memory_space<vmem>>, vector<1x16x384xbf16>,
    %c1 = arith.constant 1 : index
    %c0_9 = arith.constant 0 : index
    %c128 = arith.constant 128 : index
    %7 = vector.load %arg5[%c1, %c0_9, %c128] : memref<18x16x384xbf16, #tpu.memory_space<vmem>>, vector<16x16x128xbf16>
    tpu.vector_store %arg5[%c1, %c0_9, %c128], %2 {strides = array<i32>} : memref<18x16x384xbf16, #tpu.memory_space<vmem>>, vector<16x16x128xbf16>,
    %8 = vector.extract_strided_slice %2 {offsets = [0, 0, 0], sizes = [16, 15, 128], strides = [1, 1, 1]} : vector<16x16x128xbf16> to vector<16x15x128xbf16>
    %c1_10 = arith.constant 1 : index
    %c1_11 = arith.constant 1 : index
    %c0_12 = arith.constant 0 : index
    %9 = vector.load %arg5[%c1_10, %c1_11, %c0_12] : memref<18x16x384xbf16, #tpu.memory_space<vmem>>, vector<16x15x128xbf16>
    tpu.vector_store %arg5[%c1_10, %c1_11, %c0_12], %8 {strides = array<i32>} : memref<18x16x384xbf16, #tpu.memory_space<vmem>>, vector<16x15x128xbf16>,
    %c1_13 = arith.constant 1 : index
    %c0_14 = arith.constant 0 : index
    %c0_15 = arith.constant 0 : index
    %10 = vector.load %arg5[%c1_13, %c0_14, %c0_15] : memref<18x16x384xbf16, #tpu.memory_space<vmem>>, vector<16x1x128xbf16>
    tpu.vector_store %arg5[%c1_13, %c0_14, %c0_15], %4 {strides = array<i32>} : memref<18x16x384xbf16, #tpu.memory_space<vmem>>, vector<16x1x128xbf16>,
    %11 = vector.extract_strided_slice %2 {offsets = [0, 1, 0], sizes = [16, 15, 128], strides = [1, 1, 1]} : vector<16x16x128xbf16> to vector<16x15x128xbf16>
    %c1_16 = arith.constant 1 : index
    %c0_17 = arith.constant 0 : index
    %c256 = arith.constant 256 : index
    %12 = vector.load %arg5[%c1_16, %c0_17, %c256] : memref<18x16x384xbf16, #tpu.memory_space<vmem>>, vector<16x15x128xbf16>
    tpu.vector_store %arg5[%c1_16, %c0_17, %c256], %11 {strides = array<i32>} : memref<18x16x384xbf16, #tpu.memory_space<vmem>>, vector<16x15x128xbf16>,
    %c1_18 = arith.constant 1 : index
    %c15 = arith.constant 15 : index
    %c256_19 = arith.constant 256 : index
    %13 = vector.load %arg5[%c1_18, %c15, %c256_19] : memref<18x16x384xbf16, #tpu.memory_space<vmem>>, vector<16x1x128xbf16>
    tpu.vector_store %arg5[%c1_18, %c15, %c256_19], %4 {strides = array<i32>} : memref<18x16x384xbf16, #tpu.memory_space<vmem>>, vector<16x1x128xbf16>,
    %c0_20 = arith.constant 0 : index
    %c0_21 = arith.constant 0 : index
    %c0_22 = arith.constant 0 : index
    %14 = vector.load %arg5[%c0_20, %c0_21, %c0_22] : memref<18x16x384xbf16, #tpu.memory_space<vmem>>, vector<16x16x384xbf16>
    %15 = vector.shape_cast %14 : vector<16x16x384xbf16> to vector<256x384xbf16>
    %c0_23 = arith.constant 0 : index
    %c0_24 = arith.constant 0 : index
    %c0_25 = arith.constant 0 : index
    %16 = vector.load %arg2[%c0_23, %c0_24, %c0_25] : memref<3x384x128xbf16, #tpu.memory_space<vmem>>, vector<1x384x128xbf16>
    %17 = vector.shape_cast %16 : vector<1x384x128xbf16> to vector<384x128xbf16>
    %cst_26 = arith.constant dense<0.000000e+00> : vector<256x128xf32>
    %18 = tpu.matmul %15, %17, %cst_26 {dimension_numbers = #tpu.dot_dimension_numbers<[1], [0], [0], [1], [0, 0, 1, 1], [], []>} : vector<256x384xbf16>, vector<384x128xbf16>, vector<256x128xf32> -> vector<256x128xf32>
    %c0_27 = arith.constant 0 : index
    %c0_28 = arith.constant 0 : index
    %19 = vector.load %arg6[%c0_27, %c0_28] : memref<256x128xf32, #tpu.memory_space<vmem>>, vector<256x128xf32>
    tpu.vector_store %arg6[%c0_27, %c0_28], %18 {strides = array<i32>} : memref<256x128xf32, #tpu.memory_space<vmem>>, vector<256x128xf32>,
    %c0_29 = arith.constant 0 : index
    %c0_30 = arith.constant 0 : index
    %20 = vector.load %arg6[%c0_29, %c0_30] : memref<256x128xf32, #tpu.memory_space<vmem>>, vector<256x128xf32>
    %c1_31 = arith.constant 1 : index
    %c0_32 = arith.constant 0 : index
    %c0_33 = arith.constant 0 : index
    %21 = vector.load %arg5[%c1_31, %c0_32, %c0_33] : memref<18x16x384xbf16, #tpu.memory_space<vmem>>, vector<16x16x384xbf16>
    %22 = vector.shape_cast %21 : vector<16x16x384xbf16> to vector<256x384xbf16>
    %c1_34 = arith.constant 1 : index
    %c0_35 = arith.constant 0 : index
    %c0_36 = arith.constant 0 : index
    %23 = vector.load %arg2[%c1_34, %c0_35, %c0_36] : memref<3x384x128xbf16, #tpu.memory_space<vmem>>, vector<1x384x128xbf16>
    %24 = vector.shape_cast %23 : vector<1x384x128xbf16> to vector<384x128xbf16>
    %cst_37 = arith.constant dense<0.000000e+00> : vector<256x128xf32>
    %25 = tpu.matmul %22, %24, %cst_37 {dimension_numbers = #tpu.dot_dimension_numbers<[1], [0], [0], [1], [0, 0, 1, 1], [], []>} : vector<256x384xbf16>, vector<384x128xbf16>, vector<256x128xf32> -> vector<256x128xf32>
    %26 = arith.addf %20, %25 : vector<256x128xf32>
    %c0_38 = arith.constant 0 : index
    %c0_39 = arith.constant 0 : index
    %27 = vector.load %arg6[%c0_38, %c0_39] : memref<256x128xf32, #tpu.memory_space<vmem>>, vector<256x128xf32>
    tpu.vector_store %arg6[%c0_38, %c0_39], %26 {strides = array<i32>} : memref<256x128xf32, #tpu.memory_space<vmem>>, vector<256x128xf32>,
    %c0_40 = arith.constant 0 : index
    %c0_41 = arith.constant 0 : index
    %28 = vector.load %arg6[%c0_40, %c0_41] : memref<256x128xf32, #tpu.memory_space<vmem>>, vector<256x128xf32>
    %c2 = arith.constant 2 : index
    %c0_42 = arith.constant 0 : index
    %c0_43 = arith.constant 0 : index
    %29 = vector.load %arg5[%c2, %c0_42, %c0_43] : memref<18x16x384xbf16, #tpu.memory_space<vmem>>, vector<16x16x384xbf16>
    %30 = vector.shape_cast %29 : vector<16x16x384xbf16> to vector<256x384xbf16>
    %c2_44 = arith.constant 2 : index
    %c0_45 = arith.constant 0 : index
    %c0_46 = arith.constant 0 : index
    %31 = vector.load %arg2[%c2_44, %c0_45, %c0_46] : memref<3x384x128xbf16, #tpu.memory_space<vmem>>, vector<1x384x128xbf16>
    %32 = vector.shape_cast %31 : vector<1x384x128xbf16> to vector<384x128xbf16>
    %cst_47 = arith.constant dense<0.000000e+00> : vector<256x128xf32>
    %33 = tpu.matmul %30, %32, %cst_47 {dimension_numbers = #tpu.dot_dimension_numbers<[1], [0], [0], [1], [0, 0, 1, 1], [], []>} : vector<256x384xbf16>, vector<384x128xbf16>, vector<256x128xf32> -> vector<256x128xf32>
    %34 = arith.addf %28, %33 : vector<256x128xf32>
    %c0_48 = arith.constant 0 : index
    %c0_49 = arith.constant 0 : index
    %35 = vector.load %arg6[%c0_48, %c0_49] : memref<256x128xf32, #tpu.memory_space<vmem>>, vector<256x128xf32>
    tpu.vector_store %arg6[%c0_48, %c0_49], %34 {strides = array<i32>} : memref<256x128xf32, #tpu.memory_space<vmem>>, vector<256x128xf32>,
    %c0_50 = arith.constant 0 : index
    %c0_51 = arith.constant 0 : index
    %36 = vector.load %arg6[%c0_50, %c0_51] : memref<256x128xf32, #tpu.memory_space<vmem>>, vector<256x128xf32>
    %c0_52 = arith.constant 0 : index
    %c0_53 = arith.constant 0 : index
    %37 = vector.load %arg3[%c0_52, %c0_53] : memref<1x128xf32, #tpu.memory_space<vmem>>, vector<1x128xf32>
    %38 = vector.broadcast %37 : vector<1x128xf32> to vector<256x128xf32>
    %39 = arith.addf %36, %38 : vector<256x128xf32>
    %cst_54 = arith.constant 0.000000e+00 : f32
    %40 = vector.broadcast %cst_54 : f32 to vector<256x128xf32>
    %41 = arith.subf %40, %39 : vector<256x128xf32>
    %42 = math.exp %41 : vector<256x128xf32>
    %cst_55 = arith.constant 1.000000e+00 : f32
    %43 = vector.broadcast %cst_55 : f32 to vector<256x128xf32>
    %44 = arith.addf %43, %42 : vector<256x128xf32>
    %45 = tpu.reciprocal %44 {approx = true} : vector<256x128xf32> -> vector<256x128xf32>
    %46 = vector.shape_cast %1 : vector<16x16x128xf32> to vector<256x128xf32>
    %47 = arith.mulf %46, %45 : vector<256x128xf32>
    %48 = vector.shape_cast %47 : vector<256x128xf32> to vector<16x16x128xf32>
    %c0_56 = arith.constant 0 : index
    %c0_57 = arith.constant 0 : index
    %c0_58 = arith.constant 0 : index
    %c0_59 = arith.constant 0 : index
    %49 = vector.load %arg4[%c0_56, %c0_57, %c0_58, %c0_59] : memref<1x16x16x128xf32, #tpu.memory_space<vmem>>, vector<1x16x16x128xf32>
    %50 = vector.shape_cast %49 : vector<1x16x16x128xf32> to vector<16x16x128xf32>
    %51 = vector.shape_cast %48 : vector<16x16x128xf32> to vector<1x16x16x128xf32>
    tpu.vector_store %arg4[%c0_56, %c0_57, %c0_58, %c0_59], %51 {strides = array<i32>} : memref<1x16x16x128xf32, #tpu.memory_space<vmem>>, vector<1x16x16x128xf32>,
    return
  }
  func.func @transform_0(%arg0: i32) -> (i32, i32, i32, i32) {
    %c0_i32 = arith.constant 0 : i32
    %c0_i32_0 = arith.constant 0 : i32
    %c0_i32_1 = arith.constant 0 : i32
    %c0_i32_2 = arith.constant 0 : i32
    return %arg0, %c0_i32, %c0_i32_0, %c0_i32_1 : i32, i32, i32, i32
  }
  func.func @transform_1(%arg0: i32) -> (i32, i32, i32) {
    %c0_i32 = arith.constant 0 : i32
    %c0_i32_0 = arith.constant 0 : i32
    %c0_i32_1 = arith.constant 0 : i32
    %c0_i32_2 = arith.constant 0 : i32
    return %c0_i32, %c0_i32_0, %c0_i32_1 : i32, i32, i32
  }
  func.func @transform_2(%arg0: i32) -> (i32, i32) {
    %c0_i32 = arith.constant 0 : i32
    %c0_i32_0 = arith.constant 0 : i32
    %c0_i32_1 = arith.constant 0 : i32
    return %c0_i32, %c0_i32_0 : i32, i32
  }
  func.func @transform_3(%arg0: i32) -> (i32, i32, i32, i32) {
    %c0_i32 = arith.constant 0 : i32
    %c0_i32_0 = arith.constant 0 : i32
    %c0_i32_1 = arith.constant 0 : i32
    %c0_i32_2 = arith.constant 0 : i32
    return %arg0, %c0_i32, %c0_i32_0, %c0_i32_1 : i32, i32, i32, i32
  }
}

</mosaic_0001>

<llo_original>
// kernel: ba_forward_nhwc.1
$region0: #{ba_forward_nhwc.1}
  #allocation0 [shape = 'u32[]', space=smem, size = 0x4, offset = 0x4, fixed_abs, tag = 'smem constant byte address 0x4 - core index']
  #allocation1 [shape = 'u32[72,128]{1,0:T(1,128)}', space=vmem, size = 0x9000, scoped, tag = 'internal scratch']
  #allocation2 [shape = 'bf16[18,16,384]{2,1,0:T(8,128)(2,1)}', space=vmem, size = 0x36000, scoped, tag = 'scratch operand']
  #allocation3 [shape = 'f32[256,128]{1,0:T(8,128)}', space=vmem, size = 0x20000, scoped, tag = 'scratch operand']
  %s0 = inlined_call_operand.hbm [shape: f32[2,16,16,128], index: 0, kind: input, shape index: {}]
  %s1 = inlined_call_operand.hbm [shape: bf16[3,384,128], index: 1, kind: input, shape index: {}]
  %s2 = inlined_call_operand.vmem [shape: f32[1,128], index: 2, kind: input, shape index: {}]
  %s3 = inlined_call_operand.hbm [shape: f32[2,16,16,128], index: 3, kind: output, shape index: {}]
  %s4 = sld [smem:[#allocation0]]
  $region53: #{ba_forward_nhwc.1} parent=0
    _
  %s6 = ssub.s32 1, %s4
  %s7 = scalar_select 0, %s6, %s4
  $region1: #{ba_forward_nhwc.1} parent=0
    #allocation4 [shape = 'u8[262144]{0}', space=vmem, size = 0x40000, scoped, tag = 'input window, operand 0']
    #allocation5 [shape = 's32[2]{0}', space=sflag, size = 0x8, scoped, tag = 'scoped memory for ba_forward_nhwc.1']
    #allocation6 [shape = 's32[2]{0}', space=sflag, size = 0x8, scoped, tag = 'scoped memory for ba_forward_nhwc.1']
    #allocation7 [shape = 'u8[294912]{0}', space=vmem, size = 0x48000, scoped, tag = 'input window, operand 1, single buffered']
    #allocation8 [shape = 's32[1]{0}', space=sflag, size = 0x4, scoped, tag = 'scoped memory for ba_forward_nhwc.1']
    #allocation9 [shape = 'u8[262144]{0}', space=vmem, size = 0x40000, scoped, tag = 'output window, operand 0']
    %8 = vsyncpa [#allocation5], 0
    %s9 = scalar_lea.sflag [#allocation5], 1
    %10 = vsyncpa %s9, 0
    %11 = vsyncpa [#allocation8], 0
    %12 = vsyncpa [#allocation6], 0
    %s13 = scalar_lea.sflag [#allocation6], 1
    %14 = vsyncpa %s13, 0
    loop: start=0, step=1, limit=4
    $region2: #{ba_forward_nhwc.1} parent=1 // loop_pre_header
      _
    $region3: #{ba_forward_nhwc.1} parent=1 // loop_header
      %s16 = sphi 0, %s20
      %p17 = scmp.ge.s32.totalorder %s16, 4
      %s26 = sphi 0, %s28
      %s29 = sphi 0, %s26
      %s30 = sphi 0, %s29
      %s46 = sphi 0, %s30
      %s50 = sphi 0, %s50
      %s52 = sphi 0, %s50
      %s53 = sphi 0, %s52
      %s67 = sphi 0, %s53
      %s71 = sphi 0, %s71
      %s73 = sphi 0, %s71
      %s74 = sphi 0, %s73
      %s88 = sphi 0, %s74
      %s94 = sphi 0, %s96
      %s97 = sphi 0, %s94
      %s98 = sphi 0, %s97
      %s114 = sphi 0, %s98
    $region4: #{ba_forward_nhwc.1} parent=1 // loop_header_branch
      %19 = sbr.rel (%p17) target = $region8
    $region5: #{ba_forward_nhwc.1} parent=1 // loop_body
      %s21 = ssub.s32 %s16, 1
      %s22 = ssub.s32 %s16, 2
      %s23 = sadd.s32 %s16, 1
      %s24 = ssub.s32 %s16, %s23
      %p25 = scmp.eq.s32.totalorder %s24, 0
      %s27 = sadd.s32 %s26, 1
      %s28 = scalar_select %p25, %s26, %s27
      %p31 = pneg %p25
      %p32 = scmp.eq.s32.totalorder %s16, 1
      %p33 = por %p31, %p32
      %p34 = scmp.ne.s32.totalorder %s26, %s29
      %p35 = scmp.eq.s32.totalorder %s16, 0
      %p36 = por %p34, %p35
      %p37 = scmp.ne.s32.totalorder %s26, %s29
      %p38 = scmp.eq.s32.totalorder %s21, 1
      %p39 = por %p37, %p38
      %p40 = scmp.ne.s32.totalorder %s29, %s30
      %p41 = scmp.eq.s32.totalorder %s21, 0
      %p42 = por %p40, %p41
      %p43 = scmp.ne.s32.totalorder %s29, %s30
      %p44 = scmp.eq.s32.totalorder %s22, 1
      %p45 = por %p43, %p44
      %p47 = scmp.ne.s32.totalorder %s30, %s46
      %p48 = scmp.eq.s32.totalorder %s22, 0
      %p49 = por %p47, %p48
      %s51 = sadd.s32 %s50, 1
      %p54 = scmp.eq.s32.totalorder %s16, 1
      %p55 = scmp.ne.s32.totalorder %s50, %s52
      %p56 = scmp.eq.s32.totalorder %s16, 0
      %p57 = por %p55, %p56
      %p58 = scmp.ne.s32.totalorder %s50, %s52
      %p59 = scmp.eq.s32.totalorder %s21, 1
      %p60 = por %p58, %p59
      %p61 = scmp.ne.s32.totalorder %s52, %s53
      %p62 = scmp.eq.s32.totalorder %s21, 0
      %p63 = por %p61, %p62
      %p64 = scmp.ne.s32.totalorder %s52, %s53
      %p65 = scmp.eq.s32.totalorder %s22, 1
      %p66 = por %p64, %p65
      %p68 = scmp.ne.s32.totalorder %s53, %s67
      %p69 = scmp.eq.s32.totalorder %s22, 0
      %p70 = por %p68, %p69
      %s72 = sadd.s32 %s71, 1
      %p75 = scmp.eq.s32.totalorder %s16, 1
      %p76 = scmp.ne.s32.totalorder %s71, %s73
      %p77 = scmp.eq.s32.totalorder %s16, 0
      %p78 = por %p76, %p77
      %p79 = scmp.ne.s32.totalorder %s71, %s73
      %p80 = scmp.eq.s32.totalorder %s21, 1
      %p81 = por %p79, %p80
      %p82 = scmp.ne.s32.totalorder %s73, %s74
      %p83 = scmp.eq.s32.totalorder %s21, 0
      %p84 = por %p82, %p83
      %p85 = scmp.ne.s32.totalorder %s73, %s74
      %p86 = scmp.eq.s32.totalorder %s22, 1
      %p87 = por %p85, %p86
      %p89 = scmp.ne.s32.totalorder %s74, %s88
      %p90 = scmp.eq.s32.totalorder %s22, 0
      %p91 = por %p89, %p90
      %s92 = ssub.s32 %s16, %s23
      %p93 = scmp.eq.s32.totalorder %s92, 0
      %s95 = sadd.s32 %s94, 1
      %s96 = scalar_select %p93, %s94, %s95
      %p99 = pneg %p93
      %p100 = scmp.eq.s32.totalorder %s16, 1
      %p101 = por %p99, %p100
      %p102 = scmp.ne.s32.totalorder %s94, %s97
      %p103 = scmp.eq.s32.totalorder %s16, 0
      %p104 = por %p102, %p103
      %p105 = scmp.ne.s32.totalorder %s94, %s97
      %p106 = scmp.eq.s32.totalorder %s21, 1
      %p107 = por %p105, %p106
      %p108 = scmp.ne.s32.totalorder %s97, %s98
      %p109 = scmp.eq.s32.totalorder %s21, 0
      %p110 = por %p108, %p109
      %p111 = scmp.ne.s32.totalorder %s97, %s98
      %p112 = scmp.eq.s32.totalorder %s22, 1
      %p113 = por %p111, %p112
      %p115 = scmp.ne.s32.totalorder %s98, %s114
      %p116 = scmp.eq.s32.totalorder %s22, 0
      %p117 = por %p115, %p116
      %p118 = scmp.le.s32.totalorder 1, %s16
      %p119 = scmp.lt.s32.totalorder %s16, 3
      %p120 = pnand %p118, %p119
      %p121 = pneg %p120
      // Predicated region
      $region9: #{ba_forward_nhwc.1} parent=5 // pred_check
        _
      $region10: #{ba_forward_nhwc.1} parent=5 // pred_check_branch
        %123 = sbr.rel (%p120) target = $region12
      $region11: #{ba_forward_nhwc.1} parent=5 // pred_region
        %s124 = ssub.s32 %s16, 1
        // Predicated region
        $region13: #{ba_forward_nhwc.1} parent=11 // pred_check
          %p125 = pneg %p63
        $region14: #{ba_forward_nhwc.1} parent=11 // pred_check_branch
          %127 = sbr.rel (%p125) target = $region16
        $region15: #{ba_forward_nhwc.1} parent=11 // pred_region
          %129 = vsyncadd [#allocation8], 0
          %s130 = sshll.u32 %s1, 4
          %s131 = int_to_ptr.hbm [resolvable:$true] %s130
          %s132 = sshll.u32 [#allocation7], 4
          %s133 = int_to_ptr.vmem [resolvable:$true] %s132
          %138 = dma.hbm_to_vmem [thread:$0]  %s131, 9216, %s133, [#allocation8], 64, 64, 4
        $region16: #{ba_forward_nhwc.1} parent=11 // pred_fallthru
          _
        // Predicated region
        $region17: #{ba_forward_nhwc.1} parent=11 // pred_check
          %p139 = pneg %p84
        $region18: #{ba_forward_nhwc.1} parent=11 // pred_check_branch
          %141 = sbr.rel (%p139) target = $region20
        $region19: #{ba_forward_nhwc.1} parent=11 // pred_region
          _
        $region20: #{ba_forward_nhwc.1} parent=11 // pred_fallthru
          _
      $region12: #{ba_forward_nhwc.1} parent=5 // pred_fallthru
        _
      %p142 = scmp.lt.s32.totalorder %s16, 2
      // Predicated region
      $region21: #{ba_forward_nhwc.1} parent=5 // pred_check
        %p143 = pneg %p142
      $region22: #{ba_forward_nhwc.1} parent=5 // pred_check_branch
        %145 = sbr.rel (%p143) target = $region24
      $region23: #{ba_forward_nhwc.1} parent=5 // pred_region
        // Predicated region
        $region25: #{ba_forward_nhwc.1} parent=23 // pred_check
          %p146 = pneg %p36
        $region26: #{ba_forward_nhwc.1} parent=23 // pred_check_branch
          %148 = sbr.rel (%p146) target = $region28
        $region27: #{ba_forward_nhwc.1} parent=23 // pred_region
          %s149 = sand.u32 %s26, 1
          %s150 = scalar_lea.sflag [#allocation5], %s149
          %s151 = sand.u32 %s26, 1
          %s152 = smul.addr %s151, 256
          %s153 = scalar_lea.vmem [#allocation4], %s152
          %155 = vsyncadd %s150, 0
          %s156 = smul.addr %s16, 32
          %s157 = smul.addr %s156, 8
          %s158 = scalar_lea.hbm %s0, %s157
          %s159 = sshll.u32 %s158, 4
          %s160 = int_to_ptr.hbm [resolvable:$true] %s159
          %s161 = sshll.u32 %s153, 4
          %s162 = int_to_ptr.vmem [resolvable:$true] %s161
          %167 = dma.hbm_to_vmem [thread:$0]  %s160, 4096, %s162, %s150, 128, 128, 8
        $region28: #{ba_forward_nhwc.1} parent=23 // pred_fallthru
          _
      $region24: #{ba_forward_nhwc.1} parent=5 // pred_fallthru
        _
      %p168 = scmp.le.s32.totalorder 1, %s16
      %p169 = scmp.lt.s32.totalorder %s16, 3
      %p170 = pnand %p168, %p169
      %p171 = pneg %p170
      // Predicated region
      $region29: #{ba_forward_nhwc.1} parent=5 // pred_check
        _
      $region30: #{ba_forward_nhwc.1} parent=5 // pred_check_branch
        %173 = sbr.rel (%p170) target = $region32
      $region31: #{ba_forward_nhwc.1} parent=5 // pred_region
        %s174 = ssub.s32 %s16, 1
        %s175 = sand.u32 %s29, 1
        %s176 = scalar_lea.sflag [#allocation5], %s175
        %s177 = sand.u32 %s29, 1
        %s178 = smul.addr %s177, 256
        %s179 = scalar_lea.vmem [#allocation4], %s178
        // Predicated region
        $region33: #{ba_forward_nhwc.1} parent=31 // pred_check
          %p180 = pneg %p42
        $region34: #{ba_forward_nhwc.1} parent=31 // pred_check_branch
          %182 = sbr.rel (%p180) target = $region36
        $region35: #{ba_forward_nhwc.1} parent=31 // pred_region
          %184 = dma.done %s176, 4096
        $region36: #{ba_forward_nhwc.1} parent=31 // pred_fallthru
          _
        // Predicated region
        $region37: #{ba_forward_nhwc.1} parent=31 // pred_check
          %p185 = pneg %p63
        $region38: #{ba_forward_nhwc.1} parent=31 // pred_check_branch
          %187 = sbr.rel (%p185) target = $region40
        $region39: #{ba_forward_nhwc.1} parent=31 // pred_region
          %189 = dma.done [#allocation8], 9216
        $region40: #{ba_forward_nhwc.1} parent=31 // pred_fallthru
          _
        %s190 = sand.u32 %s29, 1
        %s191 = scalar_lea.sflag [#allocation5], %s190
        %s192 = sand.u32 %s29, 1
        %s193 = smul.addr %s192, 256
        %s194 = scalar_lea.vmem [#allocation4], %s193
        %p195 = pneg %p42
        %p196 = pneg %p39
        %p197 = pneg %p63
        %p198 = pneg %p60
        %p199 = pneg %p84
        %p200 = pneg %p81
        %p201 = pneg %p110
        %p202 = pneg %p107
        %s203 = sand.u32 %s97, 1
        %s204 = scalar_lea.sflag [#allocation6], %s203
        %s205 = sand.u32 %s97, 1
        %s206 = smul.addr %s205, 256
        %s207 = scalar_lea.vmem [#allocation9], %s206
        %v209 = vld [vmem:[%s179] sm:$0xff]
        %v210 = vld [vmem:[%s179 + $0x8] sm:$0xff]
        %v211 = vld [vmem:[%s179 + $0x10] sm:$0xff]
        %v212 = vld [vmem:[%s179 + $0x18] sm:$0xff]
        %v213 = vld [vmem:[%s179 + $0x20] sm:$0xff]
        %v214 = vld [vmem:[%s179 + $0x28] sm:$0xff]
        %v215 = vld [vmem:[%s179 + $0x30] sm:$0xff]
        %v216 = vld [vmem:[%s179 + $0x38] sm:$0xff]
        %v217 = vld [vmem:[%s179 + $0x40] sm:$0xff]
        %v218 = vld [vmem:[%s179 + $0x48] sm:$0xff]
        %v219 = vld [vmem:[%s179 + $0x50] sm:$0xff]
        %v220 = vld [vmem:[%s179 + $0x58] sm:$0xff]
        %v221 = vld [vmem:[%s179 + $0x60] sm:$0xff]
        %v222 = vld [vmem:[%s179 + $0x68] sm:$0xff]
        %v223 = vld [vmem:[%s179 + $0x70] sm:$0xff]
        %v224 = vld [vmem:[%s179 + $0x78] sm:$0xff]
        %v225 = vld [vmem:[%s179 + $0x80] sm:$0xff]
        %v226 = vld [vmem:[%s179 + $0x88] sm:$0xff]
        %v227 = vld [vmem:[%s179 + $0x90] sm:$0xff]
        %v228 = vld [vmem:[%s179 + $0x98] sm:$0xff]
        %v229 = vld [vmem:[%s179 + $0xa0] sm:$0xff]
        %v230 = vld [vmem:[%s179 + $0xa8] sm:$0xff]
        %v231 = vld [vmem:[%s179 + $0xb0] sm:$0xff]
        %v232 = vld [vmem:[%s179 + $0xb8] sm:$0xff]
        %v233 = vld [vmem:[%s179 + $0xc0] sm:$0xff]
        %v234 = vld [vmem:[%s179 + $0xc8] sm:$0xff]
        %v235 = vld [vmem:[%s179 + $0xd0] sm:$0xff]
        %v236 = vld [vmem:[%s179 + $0xd8] sm:$0xff]
        %v237 = vld [vmem:[%s179 + $0xe0] sm:$0xff]
        %v238 = vld [vmem:[%s179 + $0xe8] sm:$0xff]
        %v239 = vld [vmem:[%s179 + $0xf0] sm:$0xff]
        %v240 = vld [vmem:[%s179 + $0xf8] sm:$0xff]
        %v241 = vpack.c.bf16 %v209, %v209
        %v242 = vpack.c.bf16 %v210, %v210
        %v243 = vpack.c.bf16 %v211, %v211
        %v244 = vpack.c.bf16 %v212, %v212
        %v245 = vpack.c.bf16 %v213, %v213
        %v246 = vpack.c.bf16 %v214, %v214
        %v247 = vpack.c.bf16 %v215, %v215
        %v248 = vpack.c.bf16 %v216, %v216
        %v249 = vpack.c.bf16 %v217, %v217
        %v250 = vpack.c.bf16 %v218, %v218
        %v251 = vpack.c.bf16 %v219, %v219
        %v252 = vpack.c.bf16 %v220, %v220
        %v253 = vpack.c.bf16 %v221, %v221
        %v254 = vpack.c.bf16 %v222, %v222
        %v255 = vpack.c.bf16 %v223, %v223
        %v256 = vpack.c.bf16 %v224, %v224
        %v257 = vpack.c.bf16 %v225, %v225
        %v258 = vpack.c.bf16 %v226, %v226
        %v259 = vpack.c.bf16 %v227, %v227
        %v260 = vpack.c.bf16 %v228, %v228
        %v261 = vpack.c.bf16 %v229, %v229
        %v262 = vpack.c.bf16 %v230, %v230
        %v263 = vpack.c.bf16 %v231, %v231
        %v264 = vpack.c.bf16 %v232, %v232
        %v265 = vpack.c.bf16 %v233, %v233
        %v266 = vpack.c.bf16 %v234, %v234
        %v267 = vpack.c.bf16 %v235, %v235
        %v268 = vpack.c.bf16 %v236, %v236
        %v269 = vpack.c.bf16 %v237, %v237
        %v270 = vpack.c.bf16 %v238, %v238
        %v271 = vpack.c.bf16 %v239, %v239
        %v272 = vpack.c.bf16 %v240, %v240
        %273 = vst [vmem:[#allocation2] sm:$0xff] 0
        %274 = vst [vmem:[#allocation2 + $0x8] sm:$0xf] 0
        %275 = vst [vmem:[#allocation2 + $0xc] sm:$0xff] 0
        %276 = vst [vmem:[#allocation2 + $0x14] sm:$0xf] 0
        %s277 = scalar_lea.vmem [#allocation2], 408
        %278 = vst [vmem:[%s277] sm:$0xff] 0
        %279 = vst [vmem:[%s277 + $0x8] sm:$0xf] 0
        %280 = vst [vmem:[%s277 + $0xc] sm:$0xff] 0
        %281 = vst [vmem:[%s277 + $0x14] sm:$0xf] 0
        %s282 = scalar_lea.vmem [#allocation2], 24
        %283 = vst [vmem:[%s282 + $0x4] sm:$0xf] %v241
        %284 = vst [vmem:[%s282 + $0x10] sm:$0xf] %v242
        %285 = vst [vmem:[%s282 + $0x1c] sm:$0xf] %v243
        %286 = vst [vmem:[%s282 + $0x28] sm:$0xf] %v244
        %287 = vst [vmem:[%s282 + $0x34] sm:$0xf] %v245
        %288 = vst [vmem:[%s282 + $0x40] sm:$0xf] %v246
        %289 = vst [vmem:[%s282 + $0x4c] sm:$0xf] %v247
        %290 = vst [vmem:[%s282 + $0x58] sm:$0xf] %v248
        %291 = vst [vmem:[%s282 + $0x64] sm:$0xf] %v249
        %292 = vst [vmem:[%s282 + $0x70] sm:$0xf] %v250
        %293 = vst [vmem:[%s282 + $0x7c] sm:$0xf] %v251
        %294 = vst [vmem:[%s282 + $0x88] sm:$0xf] %v252
        %295 = vst [vmem:[%s282 + $0x94] sm:$0xf] %v253
        %296 = vst [vmem:[%s282 + $0xa0] sm:$0xf] %v254
        %297 = vst [vmem:[%s282 + $0xac] sm:$0xf] %v255
        %298 = vst [vmem:[%s282 + $0xb8] sm:$0xf] %v256
        %299 = vst [vmem:[%s282 + $0xc4] sm:$0xf] %v257
        %300 = vst [vmem:[%s282 + $0xd0] sm:$0xf] %v258
        %301 = vst [vmem:[%s282 + $0xdc] sm:$0xf] %v259
        %302 = vst [vmem:[%s282 + $0xe8] sm:$0xf] %v260
        %303 = vst [vmem:[%s282 + $0xf4] sm:$0xf] %v261
        %304 = vst [vmem:[%s282 + $0x100] sm:$0xf] %v262
        %305 = vst [vmem:[%s282 + $0x10c] sm:$0xf] %v263
        %306 = vst [vmem:[%s282 + $0x118] sm:$0xf] %v264
        %307 = vst [vmem:[%s282 + $0x124] sm:$0xf] %v265
        %308 = vst [vmem:[%s282 + $0x130] sm:$0xf] %v266
        %309 = vst [vmem:[%s282 + $0x13c] sm:$0xf] %v267
        %310 = vst [vmem:[%s282 + $0x148] sm:$0xf] %v268
        %311 = vst [vmem:[%s282 + $0x154] sm:$0xf] %v269
        %312 = vst [vmem:[%s282 + $0x160] sm:$0xf] %v270
        %313 = vst [vmem:[%s282 + $0x16c] sm:$0xf] %v271
        %314 = vst [vmem:[%s282 + $0x178] sm:$0xf] %v272
        %vm315 = vsmask.f32 256
        %vm316 = vsmask.f32 4368
        %vm317 = vmor %vm315, %vm316
        %v319 = vshrl.u32 %v241, 16
        %v321 = vrot.slane %v319, 7
        %v322 = vshll.u32 %v241, 16
        %v324 = vor.u32 %v321, %v322
        %v325 = vrot.slane %v321, 4
        %v327 = vshrl.u32 %v242, 16
        %v329 = vrot.slane %v327, 7
        %v330 = vshll.u32 %v242, 16
        %v332 = vor.u32 %v329, %v330
        %v333 = vsel %vm317, %v325, %v332
        %v335 = vshrl.u32 %v243, 16
        %v337 = vrot.slane %v335, 7
        %v338 = vshll.u32 %v243, 16
        %v340 = vor.u32 %v337, %v338
        %v341 = vrot.slane %v337, 4
        %v343 = vshrl.u32 %v244, 16
        %v345 = vrot.slane %v343, 7
        %v346 = vshll.u32 %v244, 16
        %v348 = vor.u32 %v345, %v346
        %v349 = vsel %vm317, %v341, %v348
        %v351 = vshrl.u32 %v245, 16
        %v353 = vrot.slane %v351, 7
        %v354 = vshll.u32 %v245, 16
        %v356 = vor.u32 %v353, %v354
        %v357 = vrot.slane %v353, 4
        %v359 = vshrl.u32 %v246, 16
        %v361 = vrot.slane %v359, 7
        %v362 = vshll.u32 %v246, 16
        %v364 = vor.u32 %v361, %v362
        %v365 = vsel %vm317, %v357, %v364
        %v367 = vshrl.u32 %v247, 16
        %v369 = vrot.slane %v367, 7
        %v370 = vshll.u32 %v247, 16
        %v372 = vor.u32 %v369, %v370
        %v373 = vrot.slane %v369, 4
        %v375 = vshrl.u32 %v248, 16
        %v377 = vrot.slane %v375, 7
        %v378 = vshll.u32 %v248, 16
        %v380 = vor.u32 %v377, %v378
        %v381 = vsel %vm317, %v373, %v380
        %v383 = vshrl.u32 %v249, 16
        %v385 = vrot.slane %v383, 7
        %v386 = vshll.u32 %v249, 16
        %v388 = vor.u32 %v385, %v386
        %v389 = vrot.slane %v385, 4
        %v391 = vshrl.u32 %v250, 16
        %v393 = vrot.slane %v391, 7
        %v394 = vshll.u32 %v250, 16
        %v396 = vor.u32 %v393, %v394
        %v397 = vsel %vm317, %v389, %v396
        %v399 = vshrl.u32 %v251, 16
        %v401 = vrot.slane %v399, 7
        %v402 = vshll.u32 %v251, 16
        %v404 = vor.u32 %v401, %v402
        %v405 = vrot.slane %v401, 4
        %v407 = vshrl.u32 %v252, 16
        %v409 = vrot.slane %v407, 7
        %v410 = vshll.u32 %v252, 16
        %v412 = vor.u32 %v409, %v410
        %v413 = vsel %vm317, %v405, %v412
        %v415 = vshrl.u32 %v253, 16
        %v417 = vrot.slane %v415, 7
        %v418 = vshll.u32 %v253, 16
        %v420 = vor.u32 %v417, %v418
        %v421 = vrot.slane %v417, 4
        %v423 = vshrl.u32 %v254, 16
        %v425 = vrot.slane %v423, 7
        %v426 = vshll.u32 %v254, 16
        %v428 = vor.u32 %v425, %v426
        %v429 = vsel %vm317, %v421, %v428
        %v431 = vshrl.u32 %v255, 16
        %v433 = vrot.slane %v431, 7
        %v434 = vshll.u32 %v255, 16
        %v436 = vor.u32 %v433, %v434
        %v437 = vrot.slane %v433, 4
        %v439 = vshrl.u32 %v256, 16
        %v441 = vrot.slane %v439, 7
        %v442 = vshll.u32 %v256, 16
        %v444 = vor.u32 %v441, %v442
        %v445 = vsel %vm317, %v437, %v444
        %v447 = vshrl.u32 %v257, 16
        %v449 = vrot.slane %v447, 7
        %v450 = vshll.u32 %v257, 16
        %v452 = vor.u32 %v449, %v450
        %v453 = vrot.slane %v449, 4
        %v455 = vshrl.u32 %v258, 16
        %v457 = vrot.slane %v455, 7
        %v458 = vshll.u32 %v258, 16
        %v460 = vor.u32 %v457, %v458
        %v461 = vsel %vm317, %v453, %v460
        %v463 = vshrl.u32 %v259, 16
        %v465 = vrot.slane %v463, 7
        %v466 = vshll.u32 %v259, 16
        %v468 = vor.u32 %v465, %v466
        %v469 = vrot.slane %v465, 4
        %v471 = vshrl.u32 %v260, 16
        %v473 = vrot.slane %v471, 7
        %v474 = vshll.u32 %v260, 16
        %v476 = vor.u32 %v473, %v474
        %v477 = vsel %vm317, %v469, %v476
        %v479 = vshrl.u32 %v261, 16
        %v481 = vrot.slane %v479, 7
        %v482 = vshll.u32 %v261, 16
        %v484 = vor.u32 %v481, %v482
        %v485 = vrot.slane %v481, 4
        %v487 = vshrl.u32 %v262, 16
        %v489 = vrot.slane %v487, 7
        %v490 = vshll.u32 %v262, 16
        %v492 = vor.u32 %v489, %v490
        %v493 = vsel %vm317, %v485, %v492
        %v495 = vshrl.u32 %v263, 16
        %v497 = vrot.slane %v495, 7
        %v498 = vshll.u32 %v263, 16
        %v500 = vor.u32 %v497, %v498
        %v501 = vrot.slane %v497, 4
        %v503 = vshrl.u32 %v264, 16
        %v505 = vrot.slane %v503, 7
        %v506 = vshll.u32 %v264, 16
        %v508 = vor.u32 %v505, %v506
        %v509 = vsel %vm317, %v501, %v508
        %v511 = vshrl.u32 %v265, 16
        %v513 = vrot.slane %v511, 7
        %v514 = vshll.u32 %v265, 16
        %v516 = vor.u32 %v513, %v514
        %v517 = vrot.slane %v513, 4
        %v519 = vshrl.u32 %v266, 16
        %v521 = vrot.slane %v519, 7
        %v522 = vshll.u32 %v266, 16
        %v524 = vor.u32 %v521, %v522
        %v525 = vsel %vm317, %v517, %v524
        %v527 = vshrl.u32 %v267, 16
        %v529 = vrot.slane %v527, 7
        %v530 = vshll.u32 %v267, 16
        %v532 = vor.u32 %v529, %v530
        %v533 = vrot.slane %v529, 4
        %v535 = vshrl.u32 %v268, 16
        %v537 = vrot.slane %v535, 7
        %v538 = vshll.u32 %v268, 16
        %v540 = vor.u32 %v537, %v538
        %v541 = vsel %vm317, %v533, %v540
        %v543 = vshrl.u32 %v269, 16
        %v545 = vrot.slane %v543, 7
        %v546 = vshll.u32 %v269, 16
        %v548 = vor.u32 %v545, %v546
        %v549 = vrot.slane %v545, 4
        %v551 = vshrl.u32 %v270, 16
        %v553 = vrot.slane %v551, 7
        %v554 = vshll.u32 %v270, 16
        %v556 = vor.u32 %v553, %v554
        %v557 = vsel %vm317, %v549, %v556
        %v559 = vshrl.u32 %v271, 16
        %v561 = vrot.slane %v559, 7
        %v562 = vshll.u32 %v271, 16
        %v564 = vor.u32 %v561, %v562
        %v565 = vrot.slane %v561, 4
        %v567 = vshrl.u32 %v272, 16
        %v569 = vrot.slane %v567, 7
        %v570 = vshll.u32 %v272, 16
        %v572 = vor.u32 %v569, %v570
        %v573 = vsel %vm317, %v565, %v572
        %vm606 = vcmask 1043456
        %vm607 = vsmask.f32 7938
        %vm608 = vmand %vm606, %vm607
        %v609 = vld [vmem:[%s282] sm:$0xf]
        %v610 = vsel %vm608, %v324, %v609
        %611 = vst [vmem:[%s282] sm:$0xf] %v610
        %612 = vst [vmem:[%s282 + $0xc] sm:$0xf] %v333
        %v613 = vld [vmem:[%s282 + $0x18] sm:$0xf]
        %v614 = vsel %vm608, %v340, %v613
        %615 = vst [vmem:[%s282 + $0x18] sm:$0xf] %v614
        %616 = vst [vmem:[%s282 + $0x24] sm:$0xf] %v349
        %v617 = vld [vmem:[%s282 + $0x30] sm:$0xf]
        %v618 = vsel %vm608, %v356, %v617
        %619 = vst [vmem:[%s282 + $0x30] sm:$0xf] %v618
        %620 = vst [vmem:[%s282 + $0x3c] sm:$0xf] %v365
        %v621 = vld [vmem:[%s282 + $0x48] sm:$0xf]
        %v622 = vsel %vm608, %v372, %v621
        %623 = vst [vmem:[%s282 + $0x48] sm:$0xf] %v622
        %624 = vst [vmem:[%s282 + $0x54] sm:$0xf] %v381
        %v625 = vld [vmem:[%s282 + $0x60] sm:$0xf]
        %v626 = vsel %vm608, %v388, %v625
        %627 = vst [vmem:[%s282 + $0x60] sm:$0xf] %v626
        %628 = vst [vmem:[%s282 + $0x6c] sm:$0xf] %v397
        %v629 = vld [vmem:[%s282 + $0x78] sm:$0xf]
        %v630 = vsel %vm608, %v404, %v629
        %631 = vst [vmem:[%s282 + $0x78] sm:$0xf] %v630
        %632 = vst [vmem:[%s282 + $0x84] sm:$0xf] %v413
        %v633 = vld [vmem:[%s282 + $0x90] sm:$0xf]
        %v634 = vsel %vm608, %v420, %v633
        %635 = vst [vmem:[%s282 + $0x90] sm:$0xf] %v634
        %636 = vst [vmem:[%s282 + $0x9c] sm:$0xf] %v429
        %v637 = vld [vmem:[%s282 + $0xa8] sm:$0xf]
        %v638 = vsel %vm608, %v436, %v637
        %639 = vst [vmem:[%s282 + $0xa8] sm:$0xf] %v638
        %640 = vst [vmem:[%s282 + $0xb4] sm:$0xf] %v445
        %v641 = vld [vmem:[%s282 + $0xc0] sm:$0xf]
        %v642 = vsel %vm608, %v452, %v641
        %643 = vst [vmem:[%s282 + $0xc0] sm:$0xf] %v642
        %644 = vst [vmem:[%s282 + $0xcc] sm:$0xf] %v461
        %v645 = vld [vmem:[%s282 + $0xd8] sm:$0xf]
        %v646 = vsel %vm608, %v468, %v645
        %647 = vst [vmem:[%s282 + $0xd8] sm:$0xf] %v646
        %648 = vst [vmem:[%s282 + $0xe4] sm:$0xf] %v477
        %v649 = vld [vmem:[%s282 + $0xf0] sm:$0xf]
        %v650 = vsel %vm608, %v484, %v649
        %651 = vst [vmem:[%s282 + $0xf0] sm:$0xf] %v650
        %652 = vst [vmem:[%s282 + $0xfc] sm:$0xf] %v493
        %v653 = vld [vmem:[%s282 + $0x108] sm:$0xf]
        %v654 = vsel %vm608, %v500, %v653
        %655 = vst [vmem:[%s282 + $0x108] sm:$0xf] %v654
        %656 = vst [vmem:[%s282 + $0x114] sm:$0xf] %v509
        %v657 = vld [vmem:[%s282 + $0x120] sm:$0xf]
        %v658 = vsel %vm608, %v516, %v657
        %659 = vst [vmem:[%s282 + $0x120] sm:$0xf] %v658
        %660 = vst [vmem:[%s282 + $0x12c] sm:$0xf] %v525
        %v661 = vld [vmem:[%s282 + $0x138] sm:$0xf]
        %v662 = vsel %vm608, %v532, %v661
        %663 = vst [vmem:[%s282 + $0x138] sm:$0xf] %v662
        %664 = vst [vmem:[%s282 + $0x144] sm:$0xf] %v541
        %v665 = vld [vmem:[%s282 + $0x150] sm:$0xf]
        %v666 = vsel %vm608, %v548, %v665
        %667 = vst [vmem:[%s282 + $0x150] sm:$0xf] %v666
        %668 = vst [vmem:[%s282 + $0x15c] sm:$0xf] %v557
        %v669 = vld [vmem:[%s282 + $0x168] sm:$0xf]
        %v670 = vsel %vm608, %v564, %v669
        %671 = vst [vmem:[%s282 + $0x168] sm:$0xf] %v670
        %672 = vst [vmem:[%s282 + $0x174] sm:$0xf] %v573
        %vm673 = vcmask 1040384
        %vm674 = vmand %vm673, %vm315
        %v675 = vld [vmem:[%s282] sm:$0x1]
        %v676 = vsel %vm674, 0, %v675
        %677 = vst [vmem:[%s282] sm:$0x1] %v676
        %v678 = vld [vmem:[%s282 + $0x18] sm:$0x1]
        %v679 = vsel %vm674, 0, %v678
        %680 = vst [vmem:[%s282 + $0x18] sm:$0x1] %v679
        %v681 = vld [vmem:[%s282 + $0x30] sm:$0x1]
        %v682 = vsel %vm674, 0, %v681
        %683 = vst [vmem:[%s282 + $0x30] sm:$0x1] %v682
        %v684 = vld [vmem:[%s282 + $0x48] sm:$0x1]
        %v685 = vsel %vm674, 0, %v684
        %686 = vst [vmem:[%s282 + $0x48] sm:$0x1] %v685
        %v687 = vld [vmem:[%s282 + $0x60] sm:$0x1]
        %v688 = vsel %vm674, 0, %v687
        %689 = vst [vmem:[%s282 + $0x60] sm:$0x1] %v688
        %v690 = vld [vmem:[%s282 + $0x78] sm:$0x1]
        %v691 = vsel %vm674, 0, %v690
        %692 = vst [vmem:[%s282 + $0x78] sm:$0x1] %v691
        %v693 = vld [vmem:[%s282 + $0x90] sm:$0x1]
        %v694 = vsel %vm674, 0, %v693
        %695 = vst [vmem:[%s282 + $0x90] sm:$0x1] %v694
        %v696 = vld [vmem:[%s282 + $0xa8] sm:$0x1]
        %v697 = vsel %vm674, 0, %v696
        %698 = vst [vmem:[%s282 + $0xa8] sm:$0x1] %v697
        %v699 = vld [vmem:[%s282 + $0xc0] sm:$0x1]
        %v700 = vsel %vm674, 0, %v699
        %701 = vst [vmem:[%s282 + $0xc0] sm:$0x1] %v700
        %v702 = vld [vmem:[%s282 + $0xd8] sm:$0x1]
        %v703 = vsel %vm674, 0, %v702
        %704 = vst [vmem:[%s282 + $0xd8] sm:$0x1] %v703
        %v705 = vld [vmem:[%s282 + $0xf0] sm:$0x1]
        %v706 = vsel %vm674, 0, %v705
        %707 = vst [vmem:[%s282 + $0xf0] sm:$0x1] %v706
        %v708 = vld [vmem:[%s282 + $0x108] sm:$0x1]
        %v709 = vsel %vm674, 0, %v708
        %710 = vst [vmem:[%s282 + $0x108] sm:$0x1] %v709
        %v711 = vld [vmem:[%s282 + $0x120] sm:$0x1]
        %v712 = vsel %vm674, 0, %v711
        %713 = vst [vmem:[%s282 + $0x120] sm:$0x1] %v712
        %v714 = vld [vmem:[%s282 + $0x138] sm:$0x1]
        %v715 = vsel %vm674, 0, %v714
        %716 = vst [vmem:[%s282 + $0x138] sm:$0x1] %v715
        %v717 = vld [vmem:[%s282 + $0x150] sm:$0x1]
        %v718 = vsel %vm674, 0, %v717
        %719 = vst [vmem:[%s282 + $0x150] sm:$0x1] %v718
        %v720 = vld [vmem:[%s282 + $0x168] sm:$0x1]
        %v721 = vsel %vm674, 0, %v720
        %722 = vst [vmem:[%s282 + $0x168] sm:$0x1] %v721
        %vm723 = vsmask.f32 3328
        %vm724 = vsmask.f32 7440
        %vm725 = vmor %vm723, %vm724
        %v726 = vrot.slane %v319, 4
        %v727 = vrot.slane %v322, 5
        %v728 = vor.u32 %v726, %v727
        %v729 = vrot.slane %v728, 4
        %v730 = vrot.slane %v330, 5
        %v731 = vsel %vm725, %v729, %v730
        %v732 = vrot.slane %v327, 4
        %v733 = vor.u32 %v732, %v730
        %v734 = vrot.slane %v733, 4
        %v735 = vrot.slane %v335, 4
        %v736 = vrot.slane %v338, 5
        %v737 = vor.u32 %v735, %v736
        %v738 = vrot.slane %v737, 4
        %v739 = vrot.slane %v346, 5
        %v740 = vsel %vm725, %v738, %v739
        %v741 = vrot.slane %v343, 4
        %v742 = vor.u32 %v741, %v739
        %v743 = vrot.slane %v742, 4
        %v744 = vrot.slane %v351, 4
        %v745 = vrot.slane %v354, 5
        %v746 = vor.u32 %v744, %v745
        %v747 = vrot.slane %v746, 4
        %v748 = vrot.slane %v362, 5
        %v749 = vsel %vm725, %v747, %v748
        %v750 = vrot.slane %v359, 4
        %v751 = vor.u32 %v750, %v748
        %v752 = vrot.slane %v751, 4
        %v753 = vrot.slane %v367, 4
        %v754 = vrot.slane %v370, 5
        %v755 = vor.u32 %v753, %v754
        %v756 = vrot.slane %v755, 4
        %v757 = vrot.slane %v378, 5
        %v758 = vsel %vm725, %v756, %v757
        %v759 = vrot.slane %v375, 4
        %v760 = vor.u32 %v759, %v757
        %v761 = vrot.slane %v760, 4
        %v762 = vrot.slane %v383, 4
        %v763 = vrot.slane %v386, 5
        %v764 = vor.u32 %v762, %v763
        %v765 = vrot.slane %v764, 4
        %v766 = vrot.slane %v394, 5
        %v767 = vsel %vm725, %v765, %v766
        %v768 = vrot.slane %v391, 4
        %v769 = vor.u32 %v768, %v766
        %v770 = vrot.slane %v769, 4
        %v771 = vrot.slane %v399, 4
        %v772 = vrot.slane %v402, 5
        %v773 = vor.u32 %v771, %v772
        %v774 = vrot.slane %v773, 4
        %v775 = vrot.slane %v410, 5
        %v776 = vsel %vm725, %v774, %v775
        %v777 = vrot.slane %v407, 4
        %v778 = vor.u32 %v777, %v775
        %v779 = vrot.slane %v778, 4
        %v780 = vrot.slane %v415, 4
        %v781 = vrot.slane %v418, 5
        %v782 = vor.u32 %v780, %v781
        %v783 = vrot.slane %v782, 4
        %v784 = vrot.slane %v426, 5
        %v785 = vsel %vm725, %v783, %v784
        %v786 = vrot.slane %v423, 4
        %v787 = vor.u32 %v786, %v784
        %v788 = vrot.slane %v787, 4
        %v789 = vrot.slane %v431, 4
        %v790 = vrot.slane %v434, 5
        %v791 = vor.u32 %v789, %v790
        %v792 = vrot.slane %v791, 4
        %v793 = vrot.slane %v442, 5
        %v794 = vsel %vm725, %v792, %v793
        %v795 = vrot.slane %v439, 4
        %v796 = vor.u32 %v795, %v793
        %v797 = vrot.slane %v796, 4
        %v798 = vrot.slane %v447, 4
        %v799 = vrot.slane %v450, 5
        %v800 = vor.u32 %v798, %v799
        %v801 = vrot.slane %v800, 4
        %v802 = vrot.slane %v458, 5
        %v803 = vsel %vm725, %v801, %v802
        %v804 = vrot.slane %v455, 4
        %v805 = vor.u32 %v804, %v802
        %v806 = vrot.slane %v805, 4
        %v807 = vrot.slane %v463, 4
        %v808 = vrot.slane %v466, 5
        %v809 = vor.u32 %v807, %v808
        %v810 = vrot.slane %v809, 4
        %v811 = vrot.slane %v474, 5
        %v812 = vsel %vm725, %v810, %v811
        %v813 = vrot.slane %v471, 4
        %v814 = vor.u32 %v813, %v811
        %v815 = vrot.slane %v814, 4
        %v816 = vrot.slane %v479, 4
        %v817 = vrot.slane %v482, 5
        %v818 = vor.u32 %v816, %v817
        %v819 = vrot.slane %v818, 4
        %v820 = vrot.slane %v490, 5
        %v821 = vsel %vm725, %v819, %v820
        %v822 = vrot.slane %v487, 4
        %v823 = vor.u32 %v822, %v820
        %v824 = vrot.slane %v823, 4
        %v825 = vrot.slane %v495, 4
        %v826 = vrot.slane %v498, 5
        %v827 = vor.u32 %v825, %v826
        %v828 = vrot.slane %v827, 4
        %v829 = vrot.slane %v506, 5
        %v830 = vsel %vm725, %v828, %v829
        %v831 = vrot.slane %v503, 4
        %v832 = vor.u32 %v831, %v829
        %v833 = vrot.slane %v832, 4
        %v834 = vrot.slane %v511, 4
        %v835 = vrot.slane %v514, 5
        %v836 = vor.u32 %v834, %v835
        %v837 = vrot.slane %v836, 4
        %v838 = vrot.slane %v522, 5
        %v839 = vsel %vm725, %v837, %v838
        %v840 = vrot.slane %v519, 4
        %v841 = vor.u32 %v840, %v838
        %v842 = vrot.slane %v841, 4
        %v843 = vrot.slane %v527, 4
        %v844 = vrot.slane %v530, 5
        %v845 = vor.u32 %v843, %v844
        %v846 = vrot.slane %v845, 4
        %v847 = vrot.slane %v538, 5
        %v848 = vsel %vm725, %v846, %v847
        %v849 = vrot.slane %v535, 4
        %v850 = vor.u32 %v849, %v847
        %v851 = vrot.slane %v850, 4
        %v852 = vrot.slane %v543, 4
        %v853 = vrot.slane %v546, 5
        %v854 = vor.u32 %v852, %v853
        %v855 = vrot.slane %v854, 4
        %v856 = vrot.slane %v554, 5
        %v857 = vsel %vm725, %v855, %v856
        %v858 = vrot.slane %v551, 4
        %v859 = vor.u32 %v858, %v856
        %v860 = vrot.slane %v859, 4
        %v861 = vrot.slane %v559, 4
        %v862 = vrot.slane %v562, 5
        %v863 = vor.u32 %v861, %v862
        %v864 = vrot.slane %v863, 4
        %v865 = vrot.slane %v570, 5
        %v866 = vsel %vm725, %v864, %v865
        %v867 = vrot.slane %v567, 4
        %v868 = vor.u32 %v867, %v865
        %v869 = vrot.slane %v868, 4
        %902 = vst [vmem:[%s282 + $0x8] sm:$0xf] %v731
        %vm903 = vmand %vm606, %vm723
        %v904 = vld [vmem:[%s282 + $0x14] sm:$0xf]
        %v905 = vsel %vm903, %v734, %v904
        %906 = vst [vmem:[%s282 + $0x14] sm:$0xf] %v905
        %907 = vst [vmem:[%s282 + $0x20] sm:$0xf] %v740
        %v908 = vld [vmem:[%s282 + $0x2c] sm:$0xf]
        %v909 = vsel %vm903, %v743, %v908
        %910 = vst [vmem:[%s282 + $0x2c] sm:$0xf] %v909
        %911 = vst [vmem:[%s282 + $0x38] sm:$0xf] %v749
        %v912 = vld [vmem:[%s282 + $0x44] sm:$0xf]
        %v913 = vsel %vm903, %v752, %v912
        %914 = vst [vmem:[%s282 + $0x44] sm:$0xf] %v913
        %915 = vst [vmem:[%s282 + $0x50] sm:$0xf] %v758
        %v916 = vld [vmem:[%s282 + $0x5c] sm:$0xf]
        %v917 = vsel %vm903, %v761, %v916
        %918 = vst [vmem:[%s282 + $0x5c] sm:$0xf] %v917
        %919 = vst [vmem:[%s282 + $0x68] sm:$0xf] %v767
        %v920 = vld [vmem:[%s282 + $0x74] sm:$0xf]
        %v921 = vsel %vm903, %v770, %v920
        %922 = vst [vmem:[%s282 + $0x74] sm:$0xf] %v921
        %923 = vst [vmem:[%s282 + $0x80] sm:$0xf] %v776
        %v924 = vld [vmem:[%s282 + $0x8c] sm:$0xf]
        %v925 = vsel %vm903, %v779, %v924
        %926 = vst [vmem:[%s282 + $0x8c] sm:$0xf] %v925
        %927 = vst [vmem:[%s282 + $0x98] sm:$0xf] %v785
        %v928 = vld [vmem:[%s282 + $0xa4] sm:$0xf]
        %v929 = vsel %vm903, %v788, %v928
        %930 = vst [vmem:[%s282 + $0xa4] sm:$0xf] %v929
        %931 = vst [vmem:[%s282 + $0xb0] sm:$0xf] %v794
        %v932 = vld [vmem:[%s282 + $0xbc] sm:$0xf]
        %v933 = vsel %vm903, %v797, %v932
        %934 = vst [vmem:[%s282 + $0xbc] sm:$0xf] %v933
        %935 = vst [vmem:[%s282 + $0xc8] sm:$0xf] %v803
        %v936 = vld [vmem:[%s282 + $0xd4] sm:$0xf]
        %v937 = vsel %vm903, %v806, %v936
        %938 = vst [vmem:[%s282 + $0xd4] sm:$0xf] %v937
        %939 = vst [vmem:[%s282 + $0xe0] sm:$0xf] %v812
        %v940 = vld [vmem:[%s282 + $0xec] sm:$0xf]
        %v941 = vsel %vm903, %v815, %v940
        %942 = vst [vmem:[%s282 + $0xec] sm:$0xf] %v941
        %943 = vst [vmem:[%s282 + $0xf8] sm:$0xf] %v821
        %v944 = vld [vmem:[%s282 + $0x104] sm:$0xf]
        %v945 = vsel %vm903, %v824, %v944
        %946 = vst [vmem:[%s282 + $0x104] sm:$0xf] %v945
        %947 = vst [vmem:[%s282 + $0x110] sm:$0xf] %v830
        %v948 = vld [vmem:[%s282 + $0x11c] sm:$0xf]
        %v949 = vsel %vm903, %v833, %v948
        %950 = vst [vmem:[%s282 + $0x11c] sm:$0xf] %v949
        %951 = vst [vmem:[%s282 + $0x128] sm:$0xf] %v839
        %v952 = vld [vmem:[%s282 + $0x134] sm:$0xf]
        %v953 = vsel %vm903, %v842, %v952
        %954 = vst [vmem:[%s282 + $0x134] sm:$0xf] %v953
        %955 = vst [vmem:[%s282 + $0x140] sm:$0xf] %v848
        %v956 = vld [vmem:[%s282 + $0x14c] sm:$0xf]
        %v957 = vsel %vm903, %v851, %v956
        %958 = vst [vmem:[%s282 + $0x14c] sm:$0xf] %v957
        %959 = vst [vmem:[%s282 + $0x158] sm:$0xf] %v857
        %v960 = vld [vmem:[%s282 + $0x164] sm:$0xf]
        %v961 = vsel %vm903, %v860, %v960
        %962 = vst [vmem:[%s282 + $0x164] sm:$0xf] %v961
        %963 = vst [vmem:[%s282 + $0x170] sm:$0xf] %v866
        %v964 = vld [vmem:[%s282 + $0x17c] sm:$0xf]
        %v965 = vsel %vm903, %v869, %v964
        %966 = vst [vmem:[%s282 + $0x17c] sm:$0xf] %v965
        %vm967 = vcmask 1043459
        %vm968 = vsmask.f32 7950
        %vm969 = vmand %vm967, %vm968
        %v970 = vld [vmem:[%s282 + $0x14] sm:$0x8]
        %v971 = vsel %vm969, 0, %v970
        %972 = vst [vmem:[%s282 + $0x14] sm:$0x8] %v971
        %v973 = vld [vmem:[%s282 + $0x2c] sm:$0x8]
        %v974 = vsel %vm969, 0, %v973
        %975 = vst [vmem:[%s282 + $0x2c] sm:$0x8] %v974
        %v976 = vld [vmem:[%s282 + $0x44] sm:$0x8]
        %v977 = vsel %vm969, 0, %v976
        %978 = vst [vmem:[%s282 + $0x44] sm:$0x8] %v977
        %v979 = vld [vmem:[%s282 + $0x5c] sm:$0x8]
        %v980 = vsel %vm969, 0, %v979
        %981 = vst [vmem:[%s282 + $0x5c] sm:$0x8] %v980
        %v982 = vld [vmem:[%s282 + $0x74] sm:$0x8]
        %v983 = vsel %vm969, 0, %v982
        %984 = vst [vmem:[%s282 + $0x74] sm:$0x8] %v983
        %v985 = vld [vmem:[%s282 + $0x8c] sm:$0x8]
        %v986 = vsel %vm969, 0, %v985
        %987 = vst [vmem:[%s282 + $0x8c] sm:$0x8] %v986
        %v988 = vld [vmem:[%s282 + $0xa4] sm:$0x8]
        %v989 = vsel %vm969, 0, %v988
        %990 = vst [vmem:[%s282 + $0xa4] sm:$0x8] %v989
        %v991 = vld [vmem:[%s282 + $0xbc] sm:$0x8]
        %v992 = vsel %vm969, 0, %v991
        %993 = vst [vmem:[%s282 + $0xbc] sm:$0x8] %v992
        %v994 = vld [vmem:[%s282 + $0xd4] sm:$0x8]
        %v995 = vsel %vm969, 0, %v994
        %996 = vst [vmem:[%s282 + $0xd4] sm:$0x8] %v995
        %v997 = vld [vmem:[%s282 + $0xec] sm:$0x8]
        %v998 = vsel %vm969, 0, %v997
        %999 = vst [vmem:[%s282 + $0xec] sm:$0x8] %v998
        %v1000 = vld [vmem:[%s282 + $0x104] sm:$0x8]
        %v1001 = vsel %vm969, 0, %v1000
        %1002 = vst [vmem:[%s282 + $0x104] sm:$0x8] %v1001
        %v1003 = vld [vmem:[%s282 + $0x11c] sm:$0x8]
        %v1004 = vsel %vm969, 0, %v1003
        %1005 = vst [vmem:[%s282 + $0x11c] sm:$0x8] %v1004
        %v1006 = vld [vmem:[%s282 + $0x134] sm:$0x8]
        %v1007 = vsel %vm969, 0, %v1006
        %1008 = vst [vmem:[%s282 + $0x134] sm:$0x8] %v1007
        %v1009 = vld [vmem:[%s282 + $0x14c] sm:$0x8]
        %v1010 = vsel %vm969, 0, %v1009
        %1011 = vst [vmem:[%s282 + $0x14c] sm:$0x8] %v1010
        %v1012 = vld [vmem:[%s282 + $0x164] sm:$0x8]
        %v1013 = vsel %vm969, 0, %v1012
        %1014 = vst [vmem:[%s282 + $0x164] sm:$0x8] %v1013
        %v1015 = vld [vmem:[%s282 + $0x17c] sm:$0x8]
        %v1016 = vsel %vm969, 0, %v1015
        %1017 = vst [vmem:[%s282 + $0x17c] sm:$0x8] %v1016
        %v1018 = vld [vmem:[#allocation2] sm:$0xff]
        %v1019 = vld [vmem:[#allocation2 + $0x8] sm:$0xf]
        %v1020 = vld [vmem:[#allocation2 + $0xc] sm:$0xff]
        %v1021 = vld [vmem:[#allocation2 + $0x14] sm:$0xf]
        %v1022 = vld [vmem:[#allocation2 + $0x18] sm:$0xff]
        %v1023 = vld [vmem:[#allocation2 + $0x20] sm:$0xf]
        %v1024 = vld [vmem:[#allocation2 + $0x24] sm:$0xff]
        %v1025 = vld [vmem:[#allocation2 + $0x2c] sm:$0xf]
        %v1026 = vld [vmem:[#allocation2 + $0x30] sm:$0xff]
        %v1027 = vld [vmem:[#allocation2 + $0x38] sm:$0xf]
        %v1028 = vld [vmem:[#allocation2 + $0x3c] sm:$0xff]
        %v1029 = vld [vmem:[#allocation2 + $0x44] sm:$0xf]
        %v1030 = vld [vmem:[#allocation2 + $0x48] sm:$0xff]
        %v1031 = vld [vmem:[#allocation2 + $0x50] sm:$0xf]
        %v1032 = vld [vmem:[#allocation2 + $0x54] sm:$0xff]
        %v1033 = vld [vmem:[#allocation2 + $0x5c] sm:$0xf]
        %v1034 = vld [vmem:[#allocation2 + $0x60] sm:$0xff]
        %v1035 = vld [vmem:[#allocation2 + $0x68] sm:$0xf]
        %v1036 = vld [vmem:[#allocation2 + $0x6c] sm:$0xff]
        %v1037 = vld [vmem:[#allocation2 + $0x74] sm:$0xf]
        %v1038 = vld [vmem:[#allocation2 + $0x78] sm:$0xff]
        %v1039 = vld [vmem:[#allocation2 + $0x80] sm:$0xf]
        %v1040 = vld [vmem:[#allocation2 + $0x84] sm:$0xff]
        %v1041 = vld [vmem:[#allocation2 + $0x8c] sm:$0xf]
        %v1042 = vld [vmem:[#allocation2 + $0x90] sm:$0xff]
        %v1043 = vld [vmem:[#allocation2 + $0x98] sm:$0xf]
        %v1044 = vld [vmem:[#allocation2 + $0x9c] sm:$0xff]
        %v1045 = vld [vmem:[#allocation2 + $0xa4] sm:$0xf]
        %v1046 = vld [vmem:[#allocation2 + $0xa8] sm:$0xff]
        %v1047 = vld [vmem:[#allocation2 + $0xb0] sm:$0xf]
        %v1048 = vld [vmem:[#allocation2 + $0xb4] sm:$0xff]
        %v1049 = vld [vmem:[#allocation2 + $0xbc] sm:$0xf]
        %v1050 = vld [vmem:[#allocation2 + $0xc0] sm:$0xff]
        %v1051 = vld [vmem:[#allocation2 + $0xc8] sm:$0xf]
        %v1052 = vld [vmem:[#allocation2 + $0xcc] sm:$0xff]
        %v1053 = vld [vmem:[#allocation2 + $0xd4] sm:$0xf]
        %v1054 = vld [vmem:[#allocation2 + $0xd8] sm:$0xff]
        %v1055 = vld [vmem:[#allocation2 + $0xe0] sm:$0xf]
        %v1056 = vld [vmem:[#allocation2 + $0xe4] sm:$0xff]
        %v1057 = vld [vmem:[#allocation2 + $0xec] sm:$0xf]
        %v1058 = vld [vmem:[#allocation2 + $0xf0] sm:$0xff]
        %v1059 = vld [vmem:[#allocation2 + $0xf8] sm:$0xf]
        %v1060 = vld [vmem:[#allocation2 + $0xfc] sm:$0xff]
        %v1061 = vld [vmem:[#allocation2 + $0x104] sm:$0xf]
        %v1062 = vld [vmem:[#allocation2 + $0x108] sm:$0xff]
        %v1063 = vld [vmem:[#allocation2 + $0x110] sm:$0xf]
        %v1064 = vld [vmem:[#allocation2 + $0x114] sm:$0xff]
        %v1065 = vld [vmem:[#allocation2 + $0x11c] sm:$0xf]
        %v1066 = vld [vmem:[#allocation2 + $0x120] sm:$0xff]
        %v1067 = vld [vmem:[#allocation2 + $0x128] sm:$0xf]
        %v1068 = vld [vmem:[#allocation2 + $0x12c] sm:$0xff]
        %v1069 = vld [vmem:[#allocation2 + $0x134] sm:$0xf]
        %v1070 = vld [vmem:[#allocation2 + $0x138] sm:$0xff]
        %v1071 = vld [vmem:[#allocation2 + $0x140] sm:$0xf]
        %v1072 = vld [vmem:[#allocation2 + $0x144] sm:$0xff]
        %v1073 = vld [vmem:[#allocation2 + $0x14c] sm:$0xf]
        %v1074 = vld [vmem:[#allocation2 + $0x150] sm:$0xff]
        %v1075 = vld [vmem:[#allocation2 + $0x158] sm:$0xf]
        %v1076 = vld [vmem:[#allocation2 + $0x15c] sm:$0xff]
        %v1077 = vld [vmem:[#allocation2 + $0x164] sm:$0xf]
        %v1078 = vld [vmem:[#allocation2 + $0x168] sm:$0xff]
        %v1079 = vld [vmem:[#allocation2 + $0x170] sm:$0xf]
        %v1080 = vld [vmem:[#allocation2 + $0x174] sm:$0xff]
        %v1081 = vld [vmem:[#allocation2 + $0x17c] sm:$0xf]
        %v1082 = vld [vmem:[#allocation7] sm:$0xf]
        %v1083 = vld [vmem:[#allocation7 + $0x4] sm:$0xf]
        %v1084 = vld [vmem:[#allocation7 + $0x8] sm:$0xf]
        %v1085 = vld [vmem:[#allocation7 + $0xc] sm:$0xf]
        %v1086 = vld [vmem:[#allocation7 + $0x10] sm:$0xf]
        %v1087 = vld [vmem:[#allocation7 + $0x14] sm:$0xf]
        %v1088 = vld [vmem:[#allocation7 + $0x18] sm:$0xf]
        %v1089 = vld [vmem:[#allocation7 + $0x1c] sm:$0xf]
        %v1090 = vld [vmem:[#allocation7 + $0x20] sm:$0xf]
        %v1091 = vld [vmem:[#allocation7 + $0x24] sm:$0xf]
        %v1092 = vld [vmem:[#allocation7 + $0x28] sm:$0xf]
        %v1093 = vld [vmem:[#allocation7 + $0x2c] sm:$0xf]
        %v1094 = vld [vmem:[#allocation7 + $0x30] sm:$0xf]
        %v1095 = vld [vmem:[#allocation7 + $0x34] sm:$0xf]
        %v1096 = vld [vmem:[#allocation7 + $0x38] sm:$0xf]
        %v1097 = vld [vmem:[#allocation7 + $0x3c] sm:$0xf]
        %v1098 = vld [vmem:[#allocation7 + $0x40] sm:$0xf]
        %v1099 = vld [vmem:[#allocation7 + $0x44] sm:$0xf]
        %v1100 = vld [vmem:[#allocation7 + $0x48] sm:$0xf]
        %v1101 = vld [vmem:[#allocation7 + $0x4c] sm:$0xf]
        %v1102 = vld [vmem:[#allocation7 + $0x50] sm:$0xf]
        %v1103 = vld [vmem:[#allocation7 + $0x54] sm:$0xf]
        %v1104 = vld [vmem:[#allocation7 + $0x58] sm:$0xf]
        %v1105 = vld [vmem:[#allocation7 + $0x5c] sm:$0xf]
        %v1106 = vld [vmem:[#allocation7 + $0x60] sm:$0xf]
        %v1107 = vld [vmem:[#allocation7 + $0x64] sm:$0xf]
        %v1108 = vld [vmem:[#allocation7 + $0x68] sm:$0xf]
        %v1109 = vld [vmem:[#allocation7 + $0x6c] sm:$0xf]
        %v1110 = vld [vmem:[#allocation7 + $0x70] sm:$0xf]
        %v1111 = vld [vmem:[#allocation7 + $0x74] sm:$0xf]
        %v1112 = vld [vmem:[#allocation7 + $0x78] sm:$0xf]
        %v1113 = vld [vmem:[#allocation7 + $0x7c] sm:$0xf]
        %v1114 = vld [vmem:[#allocation7 + $0x80] sm:$0xf]
        %v1115 = vld [vmem:[#allocation7 + $0x84] sm:$0xf]
        %v1116 = vld [vmem:[#allocation7 + $0x88] sm:$0xf]
        %v1117 = vld [vmem:[#allocation7 + $0x8c] sm:$0xf]
        %v1118 = vld [vmem:[#allocation7 + $0x90] sm:$0xf]
        %v1119 = vld [vmem:[#allocation7 + $0x94] sm:$0xf]
        %v1120 = vld [vmem:[#allocation7 + $0x98] sm:$0xf]
        %v1121 = vld [vmem:[#allocation7 + $0x9c] sm:$0xf]
        %v1122 = vld [vmem:[#allocation7 + $0xa0] sm:$0xf]
        %v1123 = vld [vmem:[#allocation7 + $0xa4] sm:$0xf]
        %v1124 = vld [vmem:[#allocation7 + $0xa8] sm:$0xf]
        %v1125 = vld [vmem:[#allocation7 + $0xac] sm:$0xf]
        %v1126 = vld [vmem:[#allocation7 + $0xb0] sm:$0xf]
        %v1127 = vld [vmem:[#allocation7 + $0xb4] sm:$0xf]
        %v1128 = vld [vmem:[#allocation7 + $0xb8] sm:$0xf]
        %v1129 = vld [vmem:[#allocation7 + $0xbc] sm:$0xf]
        %v1194 = vunpack.c.l.b16 %v1018
        %v1195 = vunpack.c.h.b16 %v1018
        %v1196 = vunpack.c.l.b16 %v1019
        %v1197 = vunpack.c.l.b16 %v1020
        %v1198 = vunpack.c.h.b16 %v1020
        %v1199 = vunpack.c.l.b16 %v1021
        %v1200 = vunpack.c.l.b16 %v1022
        %v1201 = vunpack.c.h.b16 %v1022
        %v1202 = vunpack.c.l.b16 %v1023
        %v1203 = vunpack.c.l.b16 %v1024
        %v1204 = vunpack.c.h.b16 %v1024
        %v1205 = vunpack.c.l.b16 %v1025
        %v1206 = vunpack.c.l.b16 %v1026
        %v1207 = vunpack.c.h.b16 %v1026
        %v1208 = vunpack.c.l.b16 %v1027
        %v1209 = vunpack.c.l.b16 %v1028
        %v1210 = vunpack.c.h.b16 %v1028
        %v1211 = vunpack.c.l.b16 %v1029
        %v1212 = vunpack.c.l.b16 %v1030
        %v1213 = vunpack.c.h.b16 %v1030
        %v1214 = vunpack.c.l.b16 %v1031
        %v1215 = vunpack.c.l.b16 %v1032
        %v1216 = vunpack.c.h.b16 %v1032
        %v1217 = vunpack.c.l.b16 %v1033
        %v1218 = vunpack.c.l.b16 %v1034
        %v1219 = vunpack.c.h.b16 %v1034
        %v1220 = vunpack.c.l.b16 %v1035
        %v1221 = vunpack.c.l.b16 %v1036
        %v1222 = vunpack.c.h.b16 %v1036
        %v1223 = vunpack.c.l.b16 %v1037
        %v1224 = vunpack.c.l.b16 %v1038
        %v1225 = vunpack.c.h.b16 %v1038
        %v1226 = vunpack.c.l.b16 %v1039
        %v1227 = vunpack.c.l.b16 %v1040
        %v1228 = vunpack.c.h.b16 %v1040
        %v1229 = vunpack.c.l.b16 %v1041
        %v1230 = vunpack.c.l.b16 %v1042
        %v1231 = vunpack.c.h.b16 %v1042
        %v1232 = vunpack.c.l.b16 %v1043
        %v1233 = vunpack.c.l.b16 %v1044
        %v1234 = vunpack.c.h.b16 %v1044
        %v1235 = vunpack.c.l.b16 %v1045
        %v1236 = vunpack.c.l.b16 %v1046
        %v1237 = vunpack.c.h.b16 %v1046
        %v1238 = vunpack.c.l.b16 %v1047
        %v1239 = vunpack.c.l.b16 %v1048
        %v1240 = vunpack.c.h.b16 %v1048
        %v1241 = vunpack.c.l.b16 %v1049
        %v1242 = vunpack.c.l.b16 %v1050
        %v1243 = vunpack.c.h.b16 %v1050
        %v1244 = vunpack.c.l.b16 %v1051
        %v1245 = vunpack.c.l.b16 %v1052
        %v1246 = vunpack.c.h.b16 %v1052
        %v1247 = vunpack.c.l.b16 %v1053
        %v1248 = vunpack.c.l.b16 %v1054
        %v1249 = vunpack.c.h.b16 %v1054
        %v1250 = vunpack.c.l.b16 %v1055
        %v1251 = vunpack.c.l.b16 %v1056
        %v1252 = vunpack.c.h.b16 %v1056
        %v1253 = vunpack.c.l.b16 %v1057
        %v1254 = vunpack.c.l.b16 %v1058
        %v1255 = vunpack.c.h.b16 %v1058
        %v1256 = vunpack.c.l.b16 %v1059
        %v1257 = vunpack.c.l.b16 %v1060
        %v1258 = vunpack.c.h.b16 %v1060
        %v1259 = vunpack.c.l.b16 %v1061
        %v1260 = vunpack.c.l.b16 %v1062
        %v1261 = vunpack.c.h.b16 %v1062
        %v1262 = vunpack.c.l.b16 %v1063
        %v1263 = vunpack.c.l.b16 %v1064
        %v1264 = vunpack.c.h.b16 %v1064
        %v1265 = vunpack.c.l.b16 %v1065
        %v1266 = vunpack.c.l.b16 %v1066
        %v1267 = vunpack.c.h.b16 %v1066
        %v1268 = vunpack.c.l.b16 %v1067
        %v1269 = vunpack.c.l.b16 %v1068
        %v1270 = vunpack.c.h.b16 %v1068
        %v1271 = vunpack.c.l.b16 %v1069
        %v1272 = vunpack.c.l.b16 %v1070
        %v1273 = vunpack.c.h.b16 %v1070
        %v1274 = vunpack.c.l.b16 %v1071
        %v1275 = vunpack.c.l.b16 %v1072
        %v1276 = vunpack.c.h.b16 %v1072
        %v1277 = vunpack.c.l.b16 %v1073
        %v1278 = vunpack.c.l.b16 %v1074
        %v1279 = vunpack.c.h.b16 %v1074
        %v1280 = vunpack.c.l.b16 %v1075
        %v1281 = vunpack.c.l.b16 %v1076
        %v1282 = vunpack.c.h.b16 %v1076
        %v1283 = vunpack.c.l.b16 %v1077
        %v1284 = vunpack.c.l.b16 %v1078
        %v1285 = vunpack.c.h.b16 %v1078
        %v1286 = vunpack.c.l.b16 %v1079
        %v1287 = vunpack.c.l.b16 %v1080
        %v1288 = vunpack.c.h.b16 %v1080
        %v1289 = vunpack.c.l.b16 %v1081
        %v1290 = vpack.c.b16 %v1197, %v1194
        %v1291 = vpack.c.b16 %v1198, %v1195
        %v1292 = vpack.c.b16 %v1199, %v1196
        %v1293 = vpack.c.b16 %v1203, %v1200
        %v1294 = vpack.c.b16 %v1204, %v1201
        %v1295 = vpack.c.b16 %v1205, %v1202
        %v1296 = vpack.c.b16 %v1209, %v1206
        %v1297 = vpack.c.b16 %v1210, %v1207
        %v1298 = vpack.c.b16 %v1211, %v1208
        %v1299 = vpack.c.b16 %v1215, %v1212
        %v1300 = vpack.c.b16 %v1216, %v1213
        %v1301 = vpack.c.b16 %v1217, %v1214
        %v1302 = vpack.c.b16 %v1221, %v1218
        %v1303 = vpack.c.b16 %v1222, %v1219
        %v1304 = vpack.c.b16 %v1223, %v1220
        %v1305 = vpack.c.b16 %v1227, %v1224
        %v1306 = vpack.c.b16 %v1228, %v1225
        %v1307 = vpack.c.b16 %v1229, %v1226
        %v1308 = vpack.c.b16 %v1233, %v1230
        %v1309 = vpack.c.b16 %v1234, %v1231
        %v1310 = vpack.c.b16 %v1235, %v1232
        %v1311 = vpack.c.b16 %v1239, %v1236
        %v1312 = vpack.c.b16 %v1240, %v1237
        %v1313 = vpack.c.b16 %v1241, %v1238
        %v1314 = vpack.c.b16 %v1245, %v1242
        %v1315 = vpack.c.b16 %v1246, %v1243
        %v1316 = vpack.c.b16 %v1247, %v1244
        %v1317 = vpack.c.b16 %v1251, %v1248
        %v1318 = vpack.c.b16 %v1252, %v1249
        %v1319 = vpack.c.b16 %v1253, %v1250
        %v1320 = vpack.c.b16 %v1257, %v1254
        %v1321 = vpack.c.b16 %v1258, %v1255
        %v1322 = vpack.c.b16 %v1259, %v1256
        %v1323 = vpack.c.b16 %v1263, %v1260
        %v1324 = vpack.c.b16 %v1264, %v1261
        %v1325 = vpack.c.b16 %v1265, %v1262
        %v1326 = vpack.c.b16 %v1269, %v1266
        %v1327 = vpack.c.b16 %v1270, %v1267
        %v1328 = vpack.c.b16 %v1271, %v1268
        %v1329 = vpack.c.b16 %v1275, %v1272
        %v1330 = vpack.c.b16 %v1276, %v1273
        %v1331 = vpack.c.b16 %v1277, %v1274
        %v1332 = vpack.c.b16 %v1281, %v1278
        %v1333 = vpack.c.b16 %v1282, %v1279
        %v1334 = vpack.c.b16 %v1283, %v1280
        %v1335 = vpack.c.b16 %v1287, %v1284
        %v1336 = vpack.c.b16 %v1288, %v1285
        %v1337 = vpack.c.b16 %v1289, %v1286
        %v1434 = vunpack.c.l.b16 %v1082
        %v1435 = vunpack.c.l.b16 %v1083
        %v1436 = vunpack.c.l.b16 %v1084
        %v1437 = vunpack.c.l.b16 %v1085
        %v1438 = vunpack.c.l.b16 %v1086
        %v1439 = vunpack.c.l.b16 %v1087
        %v1440 = vunpack.c.l.b16 %v1088
        %v1441 = vunpack.c.l.b16 %v1089
        %v1442 = vunpack.c.l.b16 %v1090
        %v1443 = vunpack.c.l.b16 %v1091
        %v1444 = vunpack.c.l.b16 %v1092
        %v1445 = vunpack.c.l.b16 %v1093
        %v1446 = vunpack.c.l.b16 %v1094
        %v1447 = vunpack.c.l.b16 %v1095
        %v1448 = vunpack.c.l.b16 %v1096
        %v1449 = vunpack.c.l.b16 %v1097
        %v1450 = vunpack.c.l.b16 %v1098
        %v1451 = vunpack.c.l.b16 %v1099
        %v1452 = vunpack.c.l.b16 %v1100
        %v1453 = vunpack.c.l.b16 %v1101
        %v1454 = vunpack.c.l.b16 %v1102
        %v1455 = vunpack.c.l.b16 %v1103
        %v1456 = vunpack.c.l.b16 %v1104
        %v1457 = vunpack.c.l.b16 %v1105
        %v1458 = vunpack.c.l.b16 %v1106
        %v1459 = vunpack.c.l.b16 %v1107
        %v1460 = vunpack.c.l.b16 %v1108
        %v1461 = vunpack.c.l.b16 %v1109
        %v1462 = vunpack.c.l.b16 %v1110
        %v1463 = vunpack.c.l.b16 %v1111
        %v1464 = vunpack.c.l.b16 %v1112
        %v1465 = vunpack.c.l.b16 %v1113
        %v1466 = vunpack.c.l.b16 %v1114
        %v1467 = vunpack.c.l.b16 %v1115
        %v1468 = vunpack.c.l.b16 %v1116
        %v1469 = vunpack.c.l.b16 %v1117
        %v1470 = vunpack.c.l.b16 %v1118
        %v1471 = vunpack.c.l.b16 %v1119
        %v1472 = vunpack.c.l.b16 %v1120
        %v1473 = vunpack.c.l.b16 %v1121
        %v1474 = vunpack.c.l.b16 %v1122
        %v1475 = vunpack.c.l.b16 %v1123
        %v1476 = vunpack.c.l.b16 %v1124
        %v1477 = vunpack.c.l.b16 %v1125
        %v1478 = vunpack.c.l.b16 %v1126
        %v1479 = vunpack.c.l.b16 %v1127
        %v1480 = vunpack.c.l.b16 %v1128
        %v1481 = vunpack.c.l.b16 %v1129
        %v1482 = vpack.c.b16 %v1435, %v1434
        %v1483 = vpack.c.b16 %v1437, %v1436
        %v1484 = vpack.c.b16 %v1439, %v1438
        %v1485 = vpack.c.b16 %v1441, %v1440
        %v1486 = vpack.c.b16 %v1443, %v1442
        %v1487 = vpack.c.b16 %v1445, %v1444
        %v1488 = vpack.c.b16 %v1447, %v1446
        %v1489 = vpack.c.b16 %v1449, %v1448
        %v1490 = vpack.c.b16 %v1451, %v1450
        %v1491 = vpack.c.b16 %v1453, %v1452
        %v1492 = vpack.c.b16 %v1455, %v1454
        %v1493 = vpack.c.b16 %v1457, %v1456
        %v1494 = vpack.c.b16 %v1459, %v1458
        %v1495 = vpack.c.b16 %v1461, %v1460
        %v1496 = vpack.c.b16 %v1463, %v1462
        %v1497 = vpack.c.b16 %v1465, %v1464
        %v1498 = vpack.c.b16 %v1467, %v1466
        %v1499 = vpack.c.b16 %v1469, %v1468
        %v1500 = vpack.c.b16 %v1471, %v1470
        %v1501 = vpack.c.b16 %v1473, %v1472
        %v1502 = vpack.c.b16 %v1475, %v1474
        %v1503 = vpack.c.b16 %v1477, %v1476
        %v1504 = vpack.c.b16 %v1479, %v1478
        %v1505 = vpack.c.b16 %v1481, %v1480
        %1530 = vmatpush.bf16.msra.mxu0 %v1489
        %1531 = vmatpush.bf16.msra.mxu0 %v1488
        %1532 = vmatpush.bf16.msra.mxu0 %v1487
        %1533 = vmatpush.bf16.msra.mxu0 %v1486
        %1534 = vmatpush.bf16.msra.mxu0 %v1485
        %1535 = vmatpush.bf16.msra.mxu0 %v1484
        %1536 = vmatpush.bf16.msra.mxu0 %v1483
        %1537 = vmatpush.bf16.msra.mxu0 %v1482
        %1538 = vmatmul.bf16.gmra.mxu0 %v1290
        %v1539 = vpop.f32.mrf.mxu0
        %v1540 = vadd.f32 0.0, %v1539
        %v1541 = vpop.f32.mrf.mxu0
        %v1542 = vadd.f32 0.0, %v1541
        %1543 = vmatmul.bf16.gmra.mxu0 %v1293
        %v1544 = vpop.f32.mrf.mxu0
        %v1545 = vadd.f32 0.0, %v1544
        %v1546 = vpop.f32.mrf.mxu0
        %v1547 = vadd.f32 0.0, %v1546
        %1548 = vmatmul.bf16.gmra.mxu0 %v1296
        %v1549 = vpop.f32.mrf.mxu0
        %v1550 = vadd.f32 0.0, %v1549
        %v1551 = vpop.f32.mrf.mxu0
        %v1552 = vadd.f32 0.0, %v1551
        %1553 = vmatmul.bf16.gmra.mxu0 %v1299
        %v1554 = vpop.f32.mrf.mxu0
        %v1555 = vadd.f32 0.0, %v1554
        %v1556 = vpop.f32.mrf.mxu0
        %v1557 = vadd.f32 0.0, %v1556
        %1558 = vmatmul.bf16.gmra.mxu0 %v1302
        %v1559 = vpop.f32.mrf.mxu0
        %v1560 = vadd.f32 0.0, %v1559
        %v1561 = vpop.f32.mrf.mxu0
        %v1562 = vadd.f32 0.0, %v1561
        %1563 = vmatmul.bf16.gmra.mxu0 %v1305
        %v1564 = vpop.f32.mrf.mxu0
        %v1565 = vadd.f32 0.0, %v1564
        %v1566 = vpop.f32.mrf.mxu0
        %v1567 = vadd.f32 0.0, %v1566
        %1568 = vmatmul.bf16.gmra.mxu0 %v1308
        %v1569 = vpop.f32.mrf.mxu0
        %v1570 = vadd.f32 0.0, %v1569
        %v1571 = vpop.f32.mrf.mxu0
        %v1572 = vadd.f32 0.0, %v1571
        %1573 = vmatmul.bf16.gmra.mxu0 %v1311
        %v1574 = vpop.f32.mrf.mxu0
        %v1575 = vadd.f32 0.0, %v1574
        %v1576 = vpop.f32.mrf.mxu0
        %v1577 = vadd.f32 0.0, %v1576
        %1578 = vmatmul.bf16.gmra.mxu0 %v1314
        %v1579 = vpop.f32.mrf.mxu0
        %v1580 = vadd.f32 0.0, %v1579
        %v1581 = vpop.f32.mrf.mxu0
        %v1582 = vadd.f32 0.0, %v1581
        %1583 = vmatmul.bf16.gmra.mxu0 %v1317
        %v1584 = vpop.f32.mrf.mxu0
        %v1585 = vadd.f32 0.0, %v1584
        %v1586 = vpop.f32.mrf.mxu0
        %v1587 = vadd.f32 0.0, %v1586
        %1588 = vmatmul.bf16.gmra.mxu0 %v1320
        %v1589 = vpop.f32.mrf.mxu0
        %v1590 = vadd.f32 0.0, %v1589
        %v1591 = vpop.f32.mrf.mxu0
        %v1592 = vadd.f32 0.0, %v1591
        %1593 = vmatmul.bf16.gmra.mxu0 %v1323
        %v1594 = vpop.f32.mrf.mxu0
        %v1595 = vadd.f32 0.0, %v1594
        %v1596 = vpop.f32.mrf.mxu0
        %v1597 = vadd.f32 0.0, %v1596
        %1598 = vmatmul.bf16.gmra.mxu0 %v1326
        %v1599 = vpop.f32.mrf.mxu0
        %v1600 = vadd.f32 0.0, %v1599
        %v1601 = vpop.f32.mrf.mxu0
        %v1602 = vadd.f32 0.0, %v1601
        %1603 = vmatmul.bf16.gmra.mxu0 %v1329
        %v1604 = vpop.f32.mrf.mxu0
        %v1605 = vadd.f32 0.0, %v1604
        %v1606 = vpop.f32.mrf.mxu0
        %v1607 = vadd.f32 0.0, %v1606
        %1608 = vmatmul.bf16.gmra.mxu0 %v1332
        %v1609 = vpop.f32.mrf.mxu0
        %v1610 = vadd.f32 0.0, %v1609
        %v1611 = vpop.f32.mrf.mxu0
        %v1612 = vadd.f32 0.0, %v1611
        %1613 = vmatmul.bf16.gmra.mxu0 %v1335
        %v1614 = vpop.f32.mrf.mxu0
        %v1615 = vadd.f32 0.0, %v1614
        %v1616 = vpop.f32.mrf.mxu0
        %v1617 = vadd.f32 0.0, %v1616
        %1618 = vdwg.mxu0
        %1619 = vmatpush.bf16.msra.mxu0 %v1497
        %1620 = vmatpush.bf16.msra.mxu0 %v1496
        %1621 = vmatpush.bf16.msra.mxu0 %v1495
        %1622 = vmatpush.bf16.msra.mxu0 %v1494
        %1623 = vmatpush.bf16.msra.mxu0 %v1493
        %1624 = vmatpush.bf16.msra.mxu0 %v1492
        %1625 = vmatpush.bf16.msra.mxu0 %v1491
        %1626 = vmatpush.bf16.msra.mxu0 %v1490
        %1627 = vmatmul.bf16.gmra.mxu0 %v1291
        %v1628 = vpop.f32.mrf.mxu0
        %v1629 = vadd.f32 %v1540, %v1628
        %v1630 = vpop.f32.mrf.mxu0
        %v1631 = vadd.f32 %v1542, %v1630
        %1632 = vmatmul.bf16.gmra.mxu0 %v1294
        %v1633 = vpop.f32.mrf.mxu0
        %v1634 = vadd.f32 %v1545, %v1633
        %v1635 = vpop.f32.mrf.mxu0
        %v1636 = vadd.f32 %v1547, %v1635
        %1637 = vmatmul.bf16.gmra.mxu0 %v1297
        %v1638 = vpop.f32.mrf.mxu0
        %v1639 = vadd.f32 %v1550, %v1638
        %v1640 = vpop.f32.mrf.mxu0
        %v1641 = vadd.f32 %v1552, %v1640
        %1642 = vmatmul.bf16.gmra.mxu0 %v1300
        %v1643 = vpop.f32.mrf.mxu0
        %v1644 = vadd.f32 %v1555, %v1643
        %v1645 = vpop.f32.mrf.mxu0
        %v1646 = vadd.f32 %v1557, %v1645
        %1647 = vmatmul.bf16.gmra.mxu0 %v1303
        %v1648 = vpop.f32.mrf.mxu0
        %v1649 = vadd.f32 %v1560, %v1648
        %v1650 = vpop.f32.mrf.mxu0
        %v1651 = vadd.f32 %v1562, %v1650
        %1652 = vmatmul.bf16.gmra.mxu0 %v1306
        %v1653 = vpop.f32.mrf.mxu0
        %v1654 = vadd.f32 %v1565, %v1653
        %v1655 = vpop.f32.mrf.mxu0
        %v1656 = vadd.f32 %v1567, %v1655
        %1657 = vmatmul.bf16.gmra.mxu0 %v1309
        %v1658 = vpop.f32.mrf.mxu0
        %v1659 = vadd.f32 %v1570, %v1658
        %v1660 = vpop.f32.mrf.mxu0
        %v1661 = vadd.f32 %v1572, %v1660
        %1662 = vmatmul.bf16.gmra.mxu0 %v1312
        %v1663 = vpop.f32.mrf.mxu0
        %v1664 = vadd.f32 %v1575, %v1663
        %v1665 = vpop.f32.mrf.mxu0
        %v1666 = vadd.f32 %v1577, %v1665
        %1667 = vmatmul.bf16.gmra.mxu0 %v1315
        %v1668 = vpop.f32.mrf.mxu0
        %v1669 = vadd.f32 %v1580, %v1668
        %v1670 = vpop.f32.mrf.mxu0
        %v1671 = vadd.f32 %v1582, %v1670
        %1672 = vmatmul.bf16.gmra.mxu0 %v1318
        %v1673 = vpop.f32.mrf.mxu0
        %v1674 = vadd.f32 %v1585, %v1673
        %v1675 = vpop.f32.mrf.mxu0
        %v1676 = vadd.f32 %v1587, %v1675
        %1677 = vmatmul.bf16.gmra.mxu0 %v1321
        %v1678 = vpop.f32.mrf.mxu0
        %v1679 = vadd.f32 %v1590, %v1678
        %v1680 = vpop.f32.mrf.mxu0
        %v1681 = vadd.f32 %v1592, %v1680
        %1682 = vmatmul.bf16.gmra.mxu0 %v1324
        %v1683 = vpop.f32.mrf.mxu0
        %v1684 = vadd.f32 %v1595, %v1683
        %v1685 = vpop.f32.mrf.mxu0
        %v1686 = vadd.f32 %v1597, %v1685
        %1687 = vmatmul.bf16.gmra.mxu0 %v1327
        %v1688 = vpop.f32.mrf.mxu0
        %v1689 = vadd.f32 %v1600, %v1688
        %v1690 = vpop.f32.mrf.mxu0
        %v1691 = vadd.f32 %v1602, %v1690
        %1692 = vmatmul.bf16.gmra.mxu0 %v1330
        %v1693 = vpop.f32.mrf.mxu0
        %v1694 = vadd.f32 %v1605, %v1693
        %v1695 = vpop.f32.mrf.mxu0
        %v1696 = vadd.f32 %v1607, %v1695
        %1697 = vmatmul.bf16.gmra.mxu0 %v1333
        %v1698 = vpop.f32.mrf.mxu0
        %v1699 = vadd.f32 %v1610, %v1698
        %v1700 = vpop.f32.mrf.mxu0
        %v1701 = vadd.f32 %v1612, %v1700
        %1702 = vmatmul.bf16.gmra.mxu0 %v1336
        %v1703 = vpop.f32.mrf.mxu0
        %v1704 = vadd.f32 %v1615, %v1703
        %v1705 = vpop.f32.mrf.mxu0
        %v1706 = vadd.f32 %v1617, %v1705
        %1707 = vdwg.mxu0
        %1708 = vmatpush.bf16.msra.mxu0 %v1505
        %1709 = vmatpush.bf16.msra.mxu0 %v1504
        %1710 = vmatpush.bf16.msra.mxu0 %v1503
        %1711 = vmatpush.bf16.msra.mxu0 %v1502
        %1712 = vmatpush.bf16.msra.mxu0 %v1501
        %1713 = vmatpush.bf16.msra.mxu0 %v1500
        %1714 = vmatpush.bf16.msra.mxu0 %v1499
        %1715 = vmatpush.bf16.msra.mxu0 %v1498
        %1716 = vmatmul.bf16.gmra.mxu0 %v1292
        %v1717 = vpop.f32.mrf.mxu0
        %v1718 = vadd.f32 %v1629, %v1717
        %v1719 = vpop.f32.mrf.mxu0
        %v1720 = vadd.f32 %v1631, %v1719
        %1721 = vmatmul.bf16.gmra.mxu0 %v1295
        %v1722 = vpop.f32.mrf.mxu0
        %v1723 = vadd.f32 %v1634, %v1722
        %v1724 = vpop.f32.mrf.mxu0
        %v1725 = vadd.f32 %v1636, %v1724
        %1726 = vmatmul.bf16.gmra.mxu0 %v1298
        %v1727 = vpop.f32.mrf.mxu0
        %v1728 = vadd.f32 %v1639, %v1727
        %v1729 = vpop.f32.mrf.mxu0
        %v1730 = vadd.f32 %v1641, %v1729
        %1731 = vmatmul.bf16.gmra.mxu0 %v1301
        %v1732 = vpop.f32.mrf.mxu0
        %v1733 = vadd.f32 %v1644, %v1732
        %v1734 = vpop.f32.mrf.mxu0
        %v1735 = vadd.f32 %v1646, %v1734
        %1736 = vmatmul.bf16.gmra.mxu0 %v1304
        %v1737 = vpop.f32.mrf.mxu0
        %v1738 = vadd.f32 %v1649, %v1737
        %v1739 = vpop.f32.mrf.mxu0
        %v1740 = vadd.f32 %v1651, %v1739
        %1741 = vmatmul.bf16.gmra.mxu0 %v1307
        %v1742 = vpop.f32.mrf.mxu0
        %v1743 = vadd.f32 %v1654, %v1742
        %v1744 = vpop.f32.mrf.mxu0
        %v1745 = vadd.f32 %v1656, %v1744
        %1746 = vmatmul.bf16.gmra.mxu0 %v1310
        %v1747 = vpop.f32.mrf.mxu0
        %v1748 = vadd.f32 %v1659, %v1747
        %v1749 = vpop.f32.mrf.mxu0
        %v1750 = vadd.f32 %v1661, %v1749
        %1751 = vmatmul.bf16.gmra.mxu0 %v1313
        %v1752 = vpop.f32.mrf.mxu0
        %v1753 = vadd.f32 %v1664, %v1752
        %v1754 = vpop.f32.mrf.mxu0
        %v1755 = vadd.f32 %v1666, %v1754
        %1756 = vmatmul.bf16.gmra.mxu0 %v1316
        %v1757 = vpop.f32.mrf.mxu0
        %v1758 = vadd.f32 %v1669, %v1757
        %v1759 = vpop.f32.mrf.mxu0
        %v1760 = vadd.f32 %v1671, %v1759
        %1761 = vmatmul.bf16.gmra.mxu0 %v1319
        %v1762 = vpop.f32.mrf.mxu0
        %v1763 = vadd.f32 %v1674, %v1762
        %v1764 = vpop.f32.mrf.mxu0
        %v1765 = vadd.f32 %v1676, %v1764
        %1766 = vmatmul.bf16.gmra.mxu0 %v1322
        %v1767 = vpop.f32.mrf.mxu0
        %v1768 = vadd.f32 %v1679, %v1767
        %v1769 = vpop.f32.mrf.mxu0
        %v1770 = vadd.f32 %v1681, %v1769
        %1771 = vmatmul.bf16.gmra.mxu0 %v1325
        %v1772 = vpop.f32.mrf.mxu0
        %v1773 = vadd.f32 %v1684, %v1772
        %v1774 = vpop.f32.mrf.mxu0
        %v1775 = vadd.f32 %v1686, %v1774
        %1776 = vmatmul.bf16.gmra.mxu0 %v1328
        %v1777 = vpop.f32.mrf.mxu0
        %v1778 = vadd.f32 %v1689, %v1777
        %v1779 = vpop.f32.mrf.mxu0
        %v1780 = vadd.f32 %v1691, %v1779
        %1781 = vmatmul.bf16.gmra.mxu0 %v1331
        %v1782 = vpop.f32.mrf.mxu0
        %v1783 = vadd.f32 %v1694, %v1782
        %v1784 = vpop.f32.mrf.mxu0
        %v1785 = vadd.f32 %v1696, %v1784
        %1786 = vmatmul.bf16.gmra.mxu0 %v1334
        %v1787 = vpop.f32.mrf.mxu0
        %v1788 = vadd.f32 %v1699, %v1787
        %v1789 = vpop.f32.mrf.mxu0
        %v1790 = vadd.f32 %v1701, %v1789
        %1791 = vmatmul.bf16.gmra.mxu0 %v1337
        %v1792 = vpop.f32.mrf.mxu0
        %v1793 = vadd.f32 %v1704, %v1792
        %v1794 = vpop.f32.mrf.mxu0
        %v1795 = vadd.f32 %v1706, %v1794
        %1796 = vdwg.mxu0
        %1797 = vst [vmem:[#allocation3] sm:$0xff] %v1718
        %1798 = vst [vmem:[#allocation3 + $0x8] sm:$0xff] %v1720
        %1799 = vst [vmem:[#allocation3 + $0x10] sm:$0xff] %v1723
        %1800 = vst [vmem:[#allocation3 + $0x18] sm:$0xff] %v1725
        %1801 = vst [vmem:[#allocation3 + $0x20] sm:$0xff] %v1728
        %1802 = vst [vmem:[#allocation3 + $0x28] sm:$0xff] %v1730
        %1803 = vst [vmem:[#allocation3 + $0x30] sm:$0xff] %v1733
        %1804 = vst [vmem:[#allocation3 + $0x38] sm:$0xff] %v1735
        %1805 = vst [vmem:[#allocation3 + $0x40] sm:$0xff] %v1738
        %1806 = vst [vmem:[#allocation3 + $0x48] sm:$0xff] %v1740
        %1807 = vst [vmem:[#allocation3 + $0x50] sm:$0xff] %v1743
        %1808 = vst [vmem:[#allocation3 + $0x58] sm:$0xff] %v1745
        %1809 = vst [vmem:[#allocation3 + $0x60] sm:$0xff] %v1748
        %1810 = vst [vmem:[#allocation3 + $0x68] sm:$0xff] %v1750
        %1811 = vst [vmem:[#allocation3 + $0x70] sm:$0xff] %v1753
        %1812 = vst [vmem:[#allocation3 + $0x78] sm:$0xff] %v1755
        %1813 = vst [vmem:[#allocation3 + $0x80] sm:$0xff] %v1758
        %1814 = vst [vmem:[#allocation3 + $0x88] sm:$0xff] %v1760
        %1815 = vst [vmem:[#allocation3 + $0x90] sm:$0xff] %v1763
        %1816 = vst [vmem:[#allocation3 + $0x98] sm:$0xff] %v1765
        %1817 = vst [vmem:[#allocation3 + $0xa0] sm:$0xff] %v1768
        %1818 = vst [vmem:[#allocation3 + $0xa8] sm:$0xff] %v1770
        %1819 = vst [vmem:[#allocation3 + $0xb0] sm:$0xff] %v1773
        %1820 = vst [vmem:[#allocation3 + $0xb8] sm:$0xff] %v1775
        %1821 = vst [vmem:[#allocation3 + $0xc0] sm:$0xff] %v1778
        %1822 = vst [vmem:[#allocation3 + $0xc8] sm:$0xff] %v1780
        %1823 = vst [vmem:[#allocation3 + $0xd0] sm:$0xff] %v1783
        %1824 = vst [vmem:[#allocation3 + $0xd8] sm:$0xff] %v1785
        %1825 = vst [vmem:[#allocation3 + $0xe0] sm:$0xff] %v1788
        %1826 = vst [vmem:[#allocation3 + $0xe8] sm:$0xff] %v1790
        %1827 = vst [vmem:[#allocation3 + $0xf0] sm:$0xff] %v1793
        %1828 = vst [vmem:[#allocation3 + $0xf8] sm:$0xff] %v1795
        %v1829 = vld [vmem:[#allocation3] sm:$0xff]
        %v1830 = vld [vmem:[#allocation3 + $0x8] sm:$0xff]
        %v1831 = vld [vmem:[#allocation3 + $0x10] sm:$0xff]
        %v1832 = vld [vmem:[#allocation3 + $0x18] sm:$0xff]
        %v1833 = vld [vmem:[#allocation3 + $0x20] sm:$0xff]
        %v1834 = vld [vmem:[#allocation3 + $0x28] sm:$0xff]
        %v1835 = vld [vmem:[#allocation3 + $0x30] sm:$0xff]
        %v1836 = vld [vmem:[#allocation3 + $0x38] sm:$0xff]
        %v1837 = vld [vmem:[#allocation3 + $0x40] sm:$0xff]
        %v1838 = vld [vmem:[#allocation3 + $0x48] sm:$0xff]
        %v1839 = vld [vmem:[#allocation3 + $0x50] sm:$0xff]
        %v1840 = vld [vmem:[#allocation3 + $0x58] sm:$0xff]
        %v1841 = vld [vmem:[#allocation3 + $0x60] sm:$0xff]
        %v1842 = vld [vmem:[#allocation3 + $0x68] sm:$0xff]
        %v1843 = vld [vmem:[#allocation3 + $0x70] sm:$0xff]
        %v1844 = vld [vmem:[#allocation3 + $0x78] sm:$0xff]
        %v1845 = vld [vmem:[#allocation3 + $0x80] sm:$0xff]
        %v1846 = vld [vmem:[#allocation3 + $0x88] sm:$0xff]
        %v1847 = vld [vmem:[#allocation3 + $0x90] sm:$0xff]
        %v1848 = vld [vmem:[#allocation3 + $0x98] sm:$0xff]
        %v1849 = vld [vmem:[#allocation3 + $0xa0] sm:$0xff]
        %v1850 = vld [vmem:[#allocation3 + $0xa8] sm:$0xff]
        %v1851 = vld [vmem:[#allocation3 + $0xb0] sm:$0xff]
        %v1852 = vld [vmem:[#allocation3 + $0xb8] sm:$0xff]
        %v1853 = vld [vmem:[#allocation3 + $0xc0] sm:$0xff]
        %v1854 = vld [vmem:[#allocation3 + $0xc8] sm:$0xff]
        %v1855 = vld [vmem:[#allocation3 + $0xd0] sm:$0xff]
        %v1856 = vld [vmem:[#allocation3 + $0xd8] sm:$0xff]
        %v1857 = vld [vmem:[#allocation3 + $0xe0] sm:$0xff]
        %v1858 = vld [vmem:[#allocation3 + $0xe8] sm:$0xff]
        %v1859 = vld [vmem:[#allocation3 + $0xf0] sm:$0xff]
        %v1860 = vld [vmem:[#allocation3 + $0xf8] sm:$0xff]
        %v1861 = vld [vmem:[%s282] sm:$0xff]
        %v1862 = vld [vmem:[%s282 + $0x8] sm:$0xf]
        %v1863 = vld [vmem:[%s282 + $0xc] sm:$0xff]
        %v1864 = vld [vmem:[%s282 + $0x14] sm:$0xf]
        %v1865 = vld [vmem:[%s282 + $0x18] sm:$0xff]
        %v1866 = vld [vmem:[%s282 + $0x20] sm:$0xf]
        %v1867 = vld [vmem:[%s282 + $0x24] sm:$0xff]
        %v1868 = vld [vmem:[%s282 + $0x2c] sm:$0xf]
        %v1869 = vld [vmem:[%s282 + $0x30] sm:$0xff]
        %v1870 = vld [vmem:[%s282 + $0x38] sm:$0xf]
        %v1871 = vld [vmem:[%s282 + $0x3c] sm:$0xff]
        %v1872 = vld [vmem:[%s282 + $0x44] sm:$0xf]
        %v1873 = vld [vmem:[%s282 + $0x48] sm:$0xff]
        %v1874 = vld [vmem:[%s282 + $0x50] sm:$0xf]
        %v1875 = vld [vmem:[%s282 + $0x54] sm:$0xff]
        %v1876 = vld [vmem:[%s282 + $0x5c] sm:$0xf]
        %v1877 = vld [vmem:[%s282 + $0x60] sm:$0xff]
        %v1878 = vld [vmem:[%s282 + $0x68] sm:$0xf]
        %v1879 = vld [vmem:[%s282 + $0x6c] sm:$0xff]
        %v1880 = vld [vmem:[%s282 + $0x74] sm:$0xf]
        %v1881 = vld [vmem:[%s282 + $0x78] sm:$0xff]
        %v1882 = vld [vmem:[%s282 + $0x80] sm:$0xf]
        %v1883 = vld [vmem:[%s282 + $0x84] sm:$0xff]
        %v1884 = vld [vmem:[%s282 + $0x8c] sm:$0xf]
        %v1885 = vld [vmem:[%s282 + $0x90] sm:$0xff]
        %v1886 = vld [vmem:[%s282 + $0x98] sm:$0xf]
        %v1887 = vld [vmem:[%s282 + $0x9c] sm:$0xff]
        %v1888 = vld [vmem:[%s282 + $0xa4] sm:$0xf]
        %v1889 = vld [vmem:[%s282 + $0xa8] sm:$0xff]
        %v1890 = vld [vmem:[%s282 + $0xb0] sm:$0xf]
        %v1891 = vld [vmem:[%s282 + $0xb4] sm:$0xff]
        %v1892 = vld [vmem:[%s282 + $0xbc] sm:$0xf]
        %v1893 = vld [vmem:[%s282 + $0xc0] sm:$0xff]
        %v1894 = vld [vmem:[%s282 + $0xc8] sm:$0xf]
        %v1895 = vld [vmem:[%s282 + $0xcc] sm:$0xff]
        %v1896 = vld [vmem:[%s282 + $0xd4] sm:$0xf]
        %v1897 = vld [vmem:[%s282 + $0xd8] sm:$0xff]
        %v1898 = vld [vmem:[%s282 + $0xe0] sm:$0xf]
        %v1899 = vld [vmem:[%s282 + $0xe4] sm:$0xff]
        %v1900 = vld [vmem:[%s282 + $0xec] sm:$0xf]
        %v1901 = vld [vmem:[%s282 + $0xf0] sm:$0xff]
        %v1902 = vld [vmem:[%s282 + $0xf8] sm:$0xf]
        %v1903 = vld [vmem:[%s282 + $0xfc] sm:$0xff]
        %v1904 = vld [vmem:[%s282 + $0x104] sm:$0xf]
        %v1905 = vld [vmem:[%s282 + $0x108] sm:$0xff]
        %v1906 = vld [vmem:[%s282 + $0x110] sm:$0xf]
        %v1907 = vld [vmem:[%s282 + $0x114] sm:$0xff]
        %v1908 = vld [vmem:[%s282 + $0x11c] sm:$0xf]
        %v1909 = vld [vmem:[%s282 + $0x120] sm:$0xff]
        %v1910 = vld [vmem:[%s282 + $0x128] sm:$0xf]
        %v1911 = vld [vmem:[%s282 + $0x12c] sm:$0xff]
        %v1912 = vld [vmem:[%s282 + $0x134] sm:$0xf]
        %v1913 = vld [vmem:[%s282 + $0x138] sm:$0xff]
        %v1914 = vld [vmem:[%s282 + $0x140] sm:$0xf]
        %v1915 = vld [vmem:[%s282 + $0x144] sm:$0xff]
        %v1916 = vld [vmem:[%s282 + $0x14c] sm:$0xf]
        %v1917 = vld [vmem:[%s282 + $0x150] sm:$0xff]
        %v1918 = vld [vmem:[%s282 + $0x158] sm:$0xf]
        %v1919 = vld [vmem:[%s282 + $0x15c] sm:$0xff]
        %v1920 = vld [vmem:[%s282 + $0x164] sm:$0xf]
        %v1921 = vld [vmem:[%s282 + $0x168] sm:$0xff]
        %v1922 = vld [vmem:[%s282 + $0x170] sm:$0xf]
        %v1923 = vld [vmem:[%s282 + $0x174] sm:$0xff]
        %v1924 = vld [vmem:[%s282 + $0x17c] sm:$0xf]
        %s1925 = scalar_lea.vmem [#allocation7], 192
        %v1926 = vld [vmem:[%s1925] sm:$0xf]
        %v1927 = vld [vmem:[%s1925 + $0x4] sm:$0xf]
        %v1928 = vld [vmem:[%s1925 + $0x8] sm:$0xf]
        %v1929 = vld [vmem:[%s1925 + $0xc] sm:$0xf]
        %v1930 = vld [vmem:[%s1925 + $0x10] sm:$0xf]
        %v1931 = vld [vmem:[%s1925 + $0x14] sm:$0xf]
        %v1932 = vld [vmem:[%s1925 + $0x18] sm:$0xf]
        %v1933 = vld [vmem:[%s1925 + $0x1c] sm:$0xf]
        %v1934 = vld [vmem:[%s1925 + $0x20] sm:$0xf]
        %v1935 = vld [vmem:[%s1925 + $0x24] sm:$0xf]
        %v1936 = vld [vmem:[%s1925 + $0x28] sm:$0xf]
        %v1937 = vld [vmem:[%s1925 + $0x2c] sm:$0xf]
        %v1938 = vld [vmem:[%s1925 + $0x30] sm:$0xf]
        %v1939 = vld [vmem:[%s1925 + $0x34] sm:$0xf]
        %v1940 = vld [vmem:[%s1925 + $0x38] sm:$0xf]
        %v1941 = vld [vmem:[%s1925 + $0x3c] sm:$0xf]
        %v1942 = vld [vmem:[%s1925 + $0x40] sm:$0xf]
        %v1943 = vld [vmem:[%s1925 + $0x44] sm:$0xf]
        %v1944 = vld [vmem:[%s1925 + $0x48] sm:$0xf]
        %v1945 = vld [vmem:[%s1925 + $0x4c] sm:$0xf]
        %v1946 = vld [vmem:[%s1925 + $0x50] sm:$0xf]
        %v1947 = vld [vmem:[%s1925 + $0x54] sm:$0xf]
        %v1948 = vld [vmem:[%s1925 + $0x58] sm:$0xf]
        %v1949 = vld [vmem:[%s1925 + $0x5c] sm:$0xf]
        %v1950 = vld [vmem:[%s1925 + $0x60] sm:$0xf]
        %v1951 = vld [vmem:[%s1925 + $0x64] sm:$0xf]
        %v1952 = vld [vmem:[%s1925 + $0x68] sm:$0xf]
        %v1953 = vld [vmem:[%s1925 + $0x6c] sm:$0xf]
        %v1954 = vld [vmem:[%s1925 + $0x70] sm:$0xf]
        %v1955 = vld [vmem:[%s1925 + $0x74] sm:$0xf]
        %v1956 = vld [vmem:[%s1925 + $0x78] sm:$0xf]
        %v1957 = vld [vmem:[%s1925 + $0x7c] sm:$0xf]
        %v1958 = vld [vmem:[%s1925 + $0x80] sm:$0xf]
        %v1959 = vld [vmem:[%s1925 + $0x84] sm:$0xf]
        %v1960 = vld [vmem:[%s1925 + $0x88] sm:$0xf]
        %v1961 = vld [vmem:[%s1925 + $0x8c] sm:$0xf]
        %v1962 = vld [vmem:[%s1925 + $0x90] sm:$0xf]
        %v1963 = vld [vmem:[%s1925 + $0x94] sm:$0xf]
        %v1964 = vld [vmem:[%s1925 + $0x98] sm:$0xf]
        %v1965 = vld [vmem:[%s1925 + $0x9c] sm:$0xf]
        %v1966 = vld [vmem:[%s1925 + $0xa0] sm:$0xf]
        %v1967 = vld [vmem:[%s1925 + $0xa4] sm:$0xf]
        %v1968 = vld [vmem:[%s1925 + $0xa8] sm:$0xf]
        %v1969 = vld [vmem:[%s1925 + $0xac] sm:$0xf]
        %v1970 = vld [vmem:[%s1925 + $0xb0] sm:$0xf]
        %v1971 = vld [vmem:[%s1925 + $0xb4] sm:$0xf]
        %v1972 = vld [vmem:[%s1925 + $0xb8] sm:$0xf]
        %v1973 = vld [vmem:[%s1925 + $0xbc] sm:$0xf]
        %v2038 = vunpack.c.l.b16 %v1861
        %v2039 = vunpack.c.h.b16 %v1861
        %v2040 = vunpack.c.l.b16 %v1862
        %v2041 = vunpack.c.l.b16 %v1863
        %v2042 = vunpack.c.h.b16 %v1863
        %v2043 = vunpack.c.l.b16 %v1864
        %v2044 = vunpack.c.l.b16 %v1865
        %v2045 = vunpack.c.h.b16 %v1865
        %v2046 = vunpack.c.l.b16 %v1866
        %v2047 = vunpack.c.l.b16 %v1867
        %v2048 = vunpack.c.h.b16 %v1867
        %v2049 = vunpack.c.l.b16 %v1868
        %v2050 = vunpack.c.l.b16 %v1869
        %v2051 = vunpack.c.h.b16 %v1869
        %v2052 = vunpack.c.l.b16 %v1870
        %v2053 = vunpack.c.l.b16 %v1871
        %v2054 = vunpack.c.h.b16 %v1871
        %v2055 = vunpack.c.l.b16 %v1872
        %v2056 = vunpack.c.l.b16 %v1873
        %v2057 = vunpack.c.h.b16 %v1873
        %v2058 = vunpack.c.l.b16 %v1874
        %v2059 = vunpack.c.l.b16 %v1875
        %v2060 = vunpack.c.h.b16 %v1875
        %v2061 = vunpack.c.l.b16 %v1876
        %v2062 = vunpack.c.l.b16 %v1877
        %v2063 = vunpack.c.h.b16 %v1877
        %v2064 = vunpack.c.l.b16 %v1878
        %v2065 = vunpack.c.l.b16 %v1879
        %v2066 = vunpack.c.h.b16 %v1879
        %v2067 = vunpack.c.l.b16 %v1880
        %v2068 = vunpack.c.l.b16 %v1881
        %v2069 = vunpack.c.h.b16 %v1881
        %v2070 = vunpack.c.l.b16 %v1882
        %v2071 = vunpack.c.l.b16 %v1883
        %v2072 = vunpack.c.h.b16 %v1883
        %v2073 = vunpack.c.l.b16 %v1884
        %v2074 = vunpack.c.l.b16 %v1885
        %v2075 = vunpack.c.h.b16 %v1885
        %v2076 = vunpack.c.l.b16 %v1886
        %v2077 = vunpack.c.l.b16 %v1887
        %v2078 = vunpack.c.h.b16 %v1887
        %v2079 = vunpack.c.l.b16 %v1888
        %v2080 = vunpack.c.l.b16 %v1889
        %v2081 = vunpack.c.h.b16 %v1889
        %v2082 = vunpack.c.l.b16 %v1890
        %v2083 = vunpack.c.l.b16 %v1891
        %v2084 = vunpack.c.h.b16 %v1891
        %v2085 = vunpack.c.l.b16 %v1892
        %v2086 = vunpack.c.l.b16 %v1893
        %v2087 = vunpack.c.h.b16 %v1893
        %v2088 = vunpack.c.l.b16 %v1894
        %v2089 = vunpack.c.l.b16 %v1895
        %v2090 = vunpack.c.h.b16 %v1895
        %v2091 = vunpack.c.l.b16 %v1896
        %v2092 = vunpack.c.l.b16 %v1897
        %v2093 = vunpack.c.h.b16 %v1897
        %v2094 = vunpack.c.l.b16 %v1898
        %v2095 = vunpack.c.l.b16 %v1899
        %v2096 = vunpack.c.h.b16 %v1899
        %v2097 = vunpack.c.l.b16 %v1900
        %v2098 = vunpack.c.l.b16 %v1901
        %v2099 = vunpack.c.h.b16 %v1901
        %v2100 = vunpack.c.l.b16 %v1902
        %v2101 = vunpack.c.l.b16 %v1903
        %v2102 = vunpack.c.h.b16 %v1903
        %v2103 = vunpack.c.l.b16 %v1904
        %v2104 = vunpack.c.l.b16 %v1905
        %v2105 = vunpack.c.h.b16 %v1905
        %v2106 = vunpack.c.l.b16 %v1906
        %v2107 = vunpack.c.l.b16 %v1907
        %v2108 = vunpack.c.h.b16 %v1907
        %v2109 = vunpack.c.l.b16 %v1908
        %v2110 = vunpack.c.l.b16 %v1909
        %v2111 = vunpack.c.h.b16 %v1909
        %v2112 = vunpack.c.l.b16 %v1910
        %v2113 = vunpack.c.l.b16 %v1911
        %v2114 = vunpack.c.h.b16 %v1911
        %v2115 = vunpack.c.l.b16 %v1912
        %v2116 = vunpack.c.l.b16 %v1913
        %v2117 = vunpack.c.h.b16 %v1913
        %v2118 = vunpack.c.l.b16 %v1914
        %v2119 = vunpack.c.l.b16 %v1915
        %v2120 = vunpack.c.h.b16 %v1915
        %v2121 = vunpack.c.l.b16 %v1916
        %v2122 = vunpack.c.l.b16 %v1917
        %v2123 = vunpack.c.h.b16 %v1917
        %v2124 = vunpack.c.l.b16 %v1918
        %v2125 = vunpack.c.l.b16 %v1919
        %v2126 = vunpack.c.h.b16 %v1919
        %v2127 = vunpack.c.l.b16 %v1920
        %v2128 = vunpack.c.l.b16 %v1921
        %v2129 = vunpack.c.h.b16 %v1921
        %v2130 = vunpack.c.l.b16 %v1922
        %v2131 = vunpack.c.l.b16 %v1923
        %v2132 = vunpack.c.h.b16 %v1923
        %v2133 = vunpack.c.l.b16 %v1924
        %v2134 = vpack.c.b16 %v2041, %v2038
        %v2135 = vpack.c.b16 %v2042, %v2039
        %v2136 = vpack.c.b16 %v2043, %v2040
        %v2137 = vpack.c.b16 %v2047, %v2044
        %v2138 = vpack.c.b16 %v2048, %v2045
        %v2139 = vpack.c.b16 %v2049, %v2046
        %v2140 = vpack.c.b16 %v2053, %v2050
        %v2141 = vpack.c.b16 %v2054, %v2051
        %v2142 = vpack.c.b16 %v2055, %v2052
        %v2143 = vpack.c.b16 %v2059, %v2056
        %v2144 = vpack.c.b16 %v2060, %v2057
        %v2145 = vpack.c.b16 %v2061, %v2058
        %v2146 = vpack.c.b16 %v2065, %v2062
        %v2147 = vpack.c.b16 %v2066, %v2063
        %v2148 = vpack.c.b16 %v2067, %v2064
        %v2149 = vpack.c.b16 %v2071, %v2068
        %v2150 = vpack.c.b16 %v2072, %v2069
        %v2151 = vpack.c.b16 %v2073, %v2070
        %v2152 = vpack.c.b16 %v2077, %v2074
        %v2153 = vpack.c.b16 %v2078, %v2075
        %v2154 = vpack.c.b16 %v2079, %v2076
        %v2155 = vpack.c.b16 %v2083, %v2080
        %v2156 = vpack.c.b16 %v2084, %v2081
        %v2157 = vpack.c.b16 %v2085, %v2082
        %v2158 = vpack.c.b16 %v2089, %v2086
        %v2159 = vpack.c.b16 %v2090, %v2087
        %v2160 = vpack.c.b16 %v2091, %v2088
        %v2161 = vpack.c.b16 %v2095, %v2092
        %v2162 = vpack.c.b16 %v2096, %v2093
        %v2163 = vpack.c.b16 %v2097, %v2094
        %v2164 = vpack.c.b16 %v2101, %v2098
        %v2165 = vpack.c.b16 %v2102, %v2099
        %v2166 = vpack.c.b16 %v2103, %v2100
        %v2167 = vpack.c.b16 %v2107, %v2104
        %v2168 = vpack.c.b16 %v2108, %v2105
        %v2169 = vpack.c.b16 %v2109, %v2106
        %v2170 = vpack.c.b16 %v2113, %v2110
        %v2171 = vpack.c.b16 %v2114, %v2111
        %v2172 = vpack.c.b16 %v2115, %v2112
        %v2173 = vpack.c.b16 %v2119, %v2116
        %v2174 = vpack.c.b16 %v2120, %v2117
        %v2175 = vpack.c.b16 %v2121, %v2118
        %v2176 = vpack.c.b16 %v2125, %v2122
        %v2177 = vpack.c.b16 %v2126, %v2123
        %v2178 = vpack.c.b16 %v2127, %v2124
        %v2179 = vpack.c.b16 %v2131, %v2128
        %v2180 = vpack.c.b16 %v2132, %v2129
        %v2181 = vpack.c.b16 %v2133, %v2130
        %v2278 = vunpack.c.l.b16 %v1926
        %v2279 = vunpack.c.l.b16 %v1927
        %v2280 = vunpack.c.l.b16 %v1928
        %v2281 = vunpack.c.l.b16 %v1929
        %v2282 = vunpack.c.l.b16 %v1930
        %v2283 = vunpack.c.l.b16 %v1931
        %v2284 = vunpack.c.l.b16 %v1932
        %v2285 = vunpack.c.l.b16 %v1933
        %v2286 = vunpack.c.l.b16 %v1934
        %v2287 = vunpack.c.l.b16 %v1935
        %v2288 = vunpack.c.l.b16 %v1936
        %v2289 = vunpack.c.l.b16 %v1937
        %v2290 = vunpack.c.l.b16 %v1938
        %v2291 = vunpack.c.l.b16 %v1939
        %v2292 = vunpack.c.l.b16 %v1940
        %v2293 = vunpack.c.l.b16 %v1941
        %v2294 = vunpack.c.l.b16 %v1942
        %v2295 = vunpack.c.l.b16 %v1943
        %v2296 = vunpack.c.l.b16 %v1944
        %v2297 = vunpack.c.l.b16 %v1945
        %v2298 = vunpack.c.l.b16 %v1946
        %v2299 = vunpack.c.l.b16 %v1947
        %v2300 = vunpack.c.l.b16 %v1948
        %v2301 = vunpack.c.l.b16 %v1949
        %v2302 = vunpack.c.l.b16 %v1950
        %v2303 = vunpack.c.l.b16 %v1951
        %v2304 = vunpack.c.l.b16 %v1952
        %v2305 = vunpack.c.l.b16 %v1953
        %v2306 = vunpack.c.l.b16 %v1954
        %v2307 = vunpack.c.l.b16 %v1955
        %v2308 = vunpack.c.l.b16 %v1956
        %v2309 = vunpack.c.l.b16 %v1957
        %v2310 = vunpack.c.l.b16 %v1958
        %v2311 = vunpack.c.l.b16 %v1959
        %v2312 = vunpack.c.l.b16 %v1960
        %v2313 = vunpack.c.l.b16 %v1961
        %v2314 = vunpack.c.l.b16 %v1962
        %v2315 = vunpack.c.l.b16 %v1963
        %v2316 = vunpack.c.l.b16 %v1964
        %v2317 = vunpack.c.l.b16 %v1965
        %v2318 = vunpack.c.l.b16 %v1966
        %v2319 = vunpack.c.l.b16 %v1967
        %v2320 = vunpack.c.l.b16 %v1968
        %v2321 = vunpack.c.l.b16 %v1969
        %v2322 = vunpack.c.l.b16 %v1970
        %v2323 = vunpack.c.l.b16 %v1971
        %v2324 = vunpack.c.l.b16 %v1972
        %v2325 = vunpack.c.l.b16 %v1973
        %v2326 = vpack.c.b16 %v2279, %v2278
        %v2327 = vpack.c.b16 %v2281, %v2280
        %v2328 = vpack.c.b16 %v2283, %v2282
        %v2329 = vpack.c.b16 %v2285, %v2284
        %v2330 = vpack.c.b16 %v2287, %v2286
        %v2331 = vpack.c.b16 %v2289, %v2288
        %v2332 = vpack.c.b16 %v2291, %v2290
        %v2333 = vpack.c.b16 %v2293, %v2292
        %v2334 = vpack.c.b16 %v2295, %v2294
        %v2335 = vpack.c.b16 %v2297, %v2296
        %v2336 = vpack.c.b16 %v2299, %v2298
        %v2337 = vpack.c.b16 %v2301, %v2300
        %v2338 = vpack.c.b16 %v2303, %v2302
        %v2339 = vpack.c.b16 %v2305, %v2304
        %v2340 = vpack.c.b16 %v2307, %v2306
        %v2341 = vpack.c.b16 %v2309, %v2308
        %v2342 = vpack.c.b16 %v2311, %v2310
        %v2343 = vpack.c.b16 %v2313, %v2312
        %v2344 = vpack.c.b16 %v2315, %v2314
        %v2345 = vpack.c.b16 %v2317, %v2316
        %v2346 = vpack.c.b16 %v2319, %v2318
        %v2347 = vpack.c.b16 %v2321, %v2320
        %v2348 = vpack.c.b16 %v2323, %v2322
        %v2349 = vpack.c.b16 %v2325, %v2324
        %2374 = vmatpush.bf16.msra.mxu0 %v2333
        %2375 = vmatpush.bf16.msra.mxu0 %v2332
        %2376 = vmatpush.bf16.msra.mxu0 %v2331
        %2377 = vmatpush.bf16.msra.mxu0 %v2330
        %2378 = vmatpush.bf16.msra.mxu0 %v2329
        %2379 = vmatpush.bf16.msra.mxu0 %v2328
        %2380 = vmatpush.bf16.msra.mxu0 %v2327
        %2381 = vmatpush.bf16.msra.mxu0 %v2326
        %2382 = vmatmul.bf16.gmra.mxu0 %v2134
        %v2383 = vpop.f32.mrf.mxu0
        %v2384 = vadd.f32 0.0, %v2383
        %v2385 = vpop.f32.mrf.mxu0
        %v2386 = vadd.f32 0.0, %v2385
        %2387 = vmatmul.bf16.gmra.mxu0 %v2137
        %v2388 = vpop.f32.mrf.mxu0
        %v2389 = vadd.f32 0.0, %v2388
        %v2390 = vpop.f32.mrf.mxu0
        %v2391 = vadd.f32 0.0, %v2390
        %2392 = vmatmul.bf16.gmra.mxu0 %v2140
        %v2393 = vpop.f32.mrf.mxu0
        %v2394 = vadd.f32 0.0, %v2393
        %v2395 = vpop.f32.mrf.mxu0
        %v2396 = vadd.f32 0.0, %v2395
        %2397 = vmatmul.bf16.gmra.mxu0 %v2143
        %v2398 = vpop.f32.mrf.mxu0
        %v2399 = vadd.f32 0.0, %v2398
        %v2400 = vpop.f32.mrf.mxu0
        %v2401 = vadd.f32 0.0, %v2400
        %2402 = vmatmul.bf16.gmra.mxu0 %v2146
        %v2403 = vpop.f32.mrf.mxu0
        %v2404 = vadd.f32 0.0, %v2403
        %v2405 = vpop.f32.mrf.mxu0
        %v2406 = vadd.f32 0.0, %v2405
        %2407 = vmatmul.bf16.gmra.mxu0 %v2149
        %v2408 = vpop.f32.mrf.mxu0
        %v2409 = vadd.f32 0.0, %v2408
        %v2410 = vpop.f32.mrf.mxu0
        %v2411 = vadd.f32 0.0, %v2410
        %2412 = vmatmul.bf16.gmra.mxu0 %v2152
        %v2413 = vpop.f32.mrf.mxu0
        %v2414 = vadd.f32 0.0, %v2413
        %v2415 = vpop.f32.mrf.mxu0
        %v2416 = vadd.f32 0.0, %v2415
        %2417 = vmatmul.bf16.gmra.mxu0 %v2155
        %v2418 = vpop.f32.mrf.mxu0
        %v2419 = vadd.f32 0.0, %v2418
        %v2420 = vpop.f32.mrf.mxu0
        %v2421 = vadd.f32 0.0, %v2420
        %2422 = vmatmul.bf16.gmra.mxu0 %v2158
        %v2423 = vpop.f32.mrf.mxu0
        %v2424 = vadd.f32 0.0, %v2423
        %v2425 = vpop.f32.mrf.mxu0
        %v2426 = vadd.f32 0.0, %v2425
        %2427 = vmatmul.bf16.gmra.mxu0 %v2161
        %v2428 = vpop.f32.mrf.mxu0
        %v2429 = vadd.f32 0.0, %v2428
        %v2430 = vpop.f32.mrf.mxu0
        %v2431 = vadd.f32 0.0, %v2430
        %2432 = vmatmul.bf16.gmra.mxu0 %v2164
        %v2433 = vpop.f32.mrf.mxu0
        %v2434 = vadd.f32 0.0, %v2433
        %v2435 = vpop.f32.mrf.mxu0
        %v2436 = vadd.f32 0.0, %v2435
        %2437 = vmatmul.bf16.gmra.mxu0 %v2167
        %v2438 = vpop.f32.mrf.mxu0
        %v2439 = vadd.f32 0.0, %v2438
        %v2440 = vpop.f32.mrf.mxu0
        %v2441 = vadd.f32 0.0, %v2440
        %2442 = vmatmul.bf16.gmra.mxu0 %v2170
        %v2443 = vpop.f32.mrf.mxu0
        %v2444 = vadd.f32 0.0, %v2443
        %v2445 = vpop.f32.mrf.mxu0
        %v2446 = vadd.f32 0.0, %v2445
        %2447 = vmatmul.bf16.gmra.mxu0 %v2173
        %v2448 = vpop.f32.mrf.mxu0
        %v2449 = vadd.f32 0.0, %v2448
        %v2450 = vpop.f32.mrf.mxu0
        %v2451 = vadd.f32 0.0, %v2450
        %2452 = vmatmul.bf16.gmra.mxu0 %v2176
        %v2453 = vpop.f32.mrf.mxu0
        %v2454 = vadd.f32 0.0, %v2453
        %v2455 = vpop.f32.mrf.mxu0
        %v2456 = vadd.f32 0.0, %v2455
        %2457 = vmatmul.bf16.gmra.mxu0 %v2179
        %v2458 = vpop.f32.mrf.mxu0
        %v2459 = vadd.f32 0.0, %v2458
        %v2460 = vpop.f32.mrf.mxu0
        %v2461 = vadd.f32 0.0, %v2460
        %2462 = vdwg.mxu0
        %2463 = vmatpush.bf16.msra.mxu0 %v2341
        %2464 = vmatpush.bf16.msra.mxu0 %v2340
        %2465 = vmatpush.bf16.msra.mxu0 %v2339
        %2466 = vmatpush.bf16.msra.mxu0 %v2338
        %2467 = vmatpush.bf16.msra.mxu0 %v2337
        %2468 = vmatpush.bf16.msra.mxu0 %v2336
        %2469 = vmatpush.bf16.msra.mxu0 %v2335
        %2470 = vmatpush.bf16.msra.mxu0 %v2334
        %2471 = vmatmul.bf16.gmra.mxu0 %v2135
        %v2472 = vpop.f32.mrf.mxu0
        %v2473 = vadd.f32 %v2384, %v2472
        %v2474 = vpop.f32.mrf.mxu0
        %v2475 = vadd.f32 %v2386, %v2474
        %2476 = vmatmul.bf16.gmra.mxu0 %v2138
        %v2477 = vpop.f32.mrf.mxu0
        %v2478 = vadd.f32 %v2389, %v2477
        %v2479 = vpop.f32.mrf.mxu0
        %v2480 = vadd.f32 %v2391, %v2479
        %2481 = vmatmul.bf16.gmra.mxu0 %v2141
        %v2482 = vpop.f32.mrf.mxu0
        %v2483 = vadd.f32 %v2394, %v2482
        %v2484 = vpop.f32.mrf.mxu0
        %v2485 = vadd.f32 %v2396, %v2484
        %2486 = vmatmul.bf16.gmra.mxu0 %v2144
        %v2487 = vpop.f32.mrf.mxu0
        %v2488 = vadd.f32 %v2399, %v2487
        %v2489 = vpop.f32.mrf.mxu0
        %v2490 = vadd.f32 %v2401, %v2489
        %2491 = vmatmul.bf16.gmra.mxu0 %v2147
        %v2492 = vpop.f32.mrf.mxu0
        %v2493 = vadd.f32 %v2404, %v2492
        %v2494 = vpop.f32.mrf.mxu0
        %v2495 = vadd.f32 %v2406, %v2494
        %2496 = vmatmul.bf16.gmra.mxu0 %v2150
        %v2497 = vpop.f32.mrf.mxu0
        %v2498 = vadd.f32 %v2409, %v2497
        %v2499 = vpop.f32.mrf.mxu0
        %v2500 = vadd.f32 %v2411, %v2499
        %2501 = vmatmul.bf16.gmra.mxu0 %v2153
        %v2502 = vpop.f32.mrf.mxu0
        %v2503 = vadd.f32 %v2414, %v2502
        %v2504 = vpop.f32.mrf.mxu0
        %v2505 = vadd.f32 %v2416, %v2504
        %2506 = vmatmul.bf16.gmra.mxu0 %v2156
        %v2507 = vpop.f32.mrf.mxu0
        %v2508 = vadd.f32 %v2419, %v2507
        %v2509 = vpop.f32.mrf.mxu0
        %v2510 = vadd.f32 %v2421, %v2509
        %2511 = vmatmul.bf16.gmra.mxu0 %v2159
        %v2512 = vpop.f32.mrf.mxu0
        %v2513 = vadd.f32 %v2424, %v2512
        %v2514 = vpop.f32.mrf.mxu0
        %v2515 = vadd.f32 %v2426, %v2514
        %2516 = vmatmul.bf16.gmra.mxu0 %v2162
        %v2517 = vpop.f32.mrf.mxu0
        %v2518 = vadd.f32 %v2429, %v2517
        %v2519 = vpop.f32.mrf.mxu0
        %v2520 = vadd.f32 %v2431, %v2519
        %2521 = vmatmul.bf16.gmra.mxu0 %v2165
        %v2522 = vpop.f32.mrf.mxu0
        %v2523 = vadd.f32 %v2434, %v2522
        %v2524 = vpop.f32.mrf.mxu0
        %v2525 = vadd.f32 %v2436, %v2524
        %2526 = vmatmul.bf16.gmra.mxu0 %v2168
        %v2527 = vpop.f32.mrf.mxu0
        %v2528 = vadd.f32 %v2439, %v2527
        %v2529 = vpop.f32.mrf.mxu0
        %v2530 = vadd.f32 %v2441, %v2529
        %2531 = vmatmul.bf16.gmra.mxu0 %v2171
        %v2532 = vpop.f32.mrf.mxu0
        %v2533 = vadd.f32 %v2444, %v2532
        %v2534 = vpop.f32.mrf.mxu0
        %v2535 = vadd.f32 %v2446, %v2534
        %2536 = vmatmul.bf16.gmra.mxu0 %v2174
        %v2537 = vpop.f32.mrf.mxu0
        %v2538 = vadd.f32 %v2449, %v2537
        %v2539 = vpop.f32.mrf.mxu0
        %v2540 = vadd.f32 %v2451, %v2539
        %2541 = vmatmul.bf16.gmra.mxu0 %v2177
        %v2542 = vpop.f32.mrf.mxu0
        %v2543 = vadd.f32 %v2454, %v2542
        %v2544 = vpop.f32.mrf.mxu0
        %v2545 = vadd.f32 %v2456, %v2544
        %2546 = vmatmul.bf16.gmra.mxu0 %v2180
        %v2547 = vpop.f32.mrf.mxu0
        %v2548 = vadd.f32 %v2459, %v2547
        %v2549 = vpop.f32.mrf.mxu0
        %v2550 = vadd.f32 %v2461, %v2549
        %2551 = vdwg.mxu0
        %2552 = vmatpush.bf16.msra.mxu0 %v2349
        %2553 = vmatpush.bf16.msra.mxu0 %v2348
        %2554 = vmatpush.bf16.msra.mxu0 %v2347
        %2555 = vmatpush.bf16.msra.mxu0 %v2346
        %2556 = vmatpush.bf16.msra.mxu0 %v2345
        %2557 = vmatpush.bf16.msra.mxu0 %v2344
        %2558 = vmatpush.bf16.msra.mxu0 %v2343
        %2559 = vmatpush.bf16.msra.mxu0 %v2342
        %2560 = vmatmul.bf16.gmra.mxu0 %v2136
        %v2561 = vpop.f32.mrf.mxu0
        %v2562 = vadd.f32 %v2473, %v2561
        %v2563 = vpop.f32.mrf.mxu0
        %v2564 = vadd.f32 %v2475, %v2563
        %2565 = vmatmul.bf16.gmra.mxu0 %v2139
        %v2566 = vpop.f32.mrf.mxu0
        %v2567 = vadd.f32 %v2478, %v2566
        %v2568 = vpop.f32.mrf.mxu0
        %v2569 = vadd.f32 %v2480, %v2568
        %2570 = vmatmul.bf16.gmra.mxu0 %v2142
        %v2571 = vpop.f32.mrf.mxu0
        %v2572 = vadd.f32 %v2483, %v2571
        %v2573 = vpop.f32.mrf.mxu0
        %v2574 = vadd.f32 %v2485, %v2573
        %2575 = vmatmul.bf16.gmra.mxu0 %v2145
        %v2576 = vpop.f32.mrf.mxu0
        %v2577 = vadd.f32 %v2488, %v2576
        %v2578 = vpop.f32.mrf.mxu0
        %v2579 = vadd.f32 %v2490, %v2578
        %2580 = vmatmul.bf16.gmra.mxu0 %v2148
        %v2581 = vpop.f32.mrf.mxu0
        %v2582 = vadd.f32 %v2493, %v2581
        %v2583 = vpop.f32.mrf.mxu0
        %v2584 = vadd.f32 %v2495, %v2583
        %2585 = vmatmul.bf16.gmra.mxu0 %v2151
        %v2586 = vpop.f32.mrf.mxu0
        %v2587 = vadd.f32 %v2498, %v2586
        %v2588 = vpop.f32.mrf.mxu0
        %v2589 = vadd.f32 %v2500, %v2588
        %2590 = vmatmul.bf16.gmra.mxu0 %v2154
        %v2591 = vpop.f32.mrf.mxu0
        %v2592 = vadd.f32 %v2503, %v2591
        %v2593 = vpop.f32.mrf.mxu0
        %v2594 = vadd.f32 %v2505, %v2593
        %2595 = vmatmul.bf16.gmra.mxu0 %v2157
        %v2596 = vpop.f32.mrf.mxu0
        %v2597 = vadd.f32 %v2508, %v2596
        %v2598 = vpop.f32.mrf.mxu0
        %v2599 = vadd.f32 %v2510, %v2598
        %2600 = vmatmul.bf16.gmra.mxu0 %v2160
        %v2601 = vpop.f32.mrf.mxu0
        %v2602 = vadd.f32 %v2513, %v2601
        %v2603 = vpop.f32.mrf.mxu0
        %v2604 = vadd.f32 %v2515, %v2603
        %2605 = vmatmul.bf16.gmra.mxu0 %v2163
        %v2606 = vpop.f32.mrf.mxu0
        %v2607 = vadd.f32 %v2518, %v2606
        %v2608 = vpop.f32.mrf.mxu0
        %v2609 = vadd.f32 %v2520, %v2608
        %2610 = vmatmul.bf16.gmra.mxu0 %v2166
        %v2611 = vpop.f32.mrf.mxu0
        %v2612 = vadd.f32 %v2523, %v2611
        %v2613 = vpop.f32.mrf.mxu0
        %v2614 = vadd.f32 %v2525, %v2613
        %2615 = vmatmul.bf16.gmra.mxu0 %v2169
        %v2616 = vpop.f32.mrf.mxu0
        %v2617 = vadd.f32 %v2528, %v2616
        %v2618 = vpop.f32.mrf.mxu0
        %v2619 = vadd.f32 %v2530, %v2618
        %2620 = vmatmul.bf16.gmra.mxu0 %v2172
        %v2621 = vpop.f32.mrf.mxu0
        %v2622 = vadd.f32 %v2533, %v2621
        %v2623 = vpop.f32.mrf.mxu0
        %v2624 = vadd.f32 %v2535, %v2623
        %2625 = vmatmul.bf16.gmra.mxu0 %v2175
        %v2626 = vpop.f32.mrf.mxu0
        %v2627 = vadd.f32 %v2538, %v2626
        %v2628 = vpop.f32.mrf.mxu0
        %v2629 = vadd.f32 %v2540, %v2628
        %2630 = vmatmul.bf16.gmra.mxu0 %v2178
        %v2631 = vpop.f32.mrf.mxu0
        %v2632 = vadd.f32 %v2543, %v2631
        %v2633 = vpop.f32.mrf.mxu0
        %v2634 = vadd.f32 %v2545, %v2633
        %2635 = vmatmul.bf16.gmra.mxu0 %v2181
        %v2636 = vpop.f32.mrf.mxu0
        %v2637 = vadd.f32 %v2548, %v2636
        %v2638 = vpop.f32.mrf.mxu0
        %v2639 = vadd.f32 %v2550, %v2638
        %2640 = vdwg.mxu0
        %v2641 = vadd.f32 %v1829, %v2562
        %v2642 = vadd.f32 %v1830, %v2564
        %v2643 = vadd.f32 %v1831, %v2567
        %v2644 = vadd.f32 %v1832, %v2569
        %v2645 = vadd.f32 %v1833, %v2572
        %v2646 = vadd.f32 %v1834, %v2574
        %v2647 = vadd.f32 %v1835, %v2577
        %v2648 = vadd.f32 %v1836, %v2579
        %v2649 = vadd.f32 %v1837, %v2582
        %v2650 = vadd.f32 %v1838, %v2584
        %v2651 = vadd.f32 %v1839, %v2587
        %v2652 = vadd.f32 %v1840, %v2589
        %v2653 = vadd.f32 %v1841, %v2592
        %v2654 = vadd.f32 %v1842, %v2594
        %v2655 = vadd.f32 %v1843, %v2597
        %v2656 = vadd.f32 %v1844, %v2599
        %v2657 = vadd.f32 %v1845, %v2602
        %v2658 = vadd.f32 %v1846, %v2604
        %v2659 = vadd.f32 %v1847, %v2607
        %v2660 = vadd.f32 %v1848, %v2609
        %v2661 = vadd.f32 %v1849, %v2612
        %v2662 = vadd.f32 %v1850, %v2614
        %v2663 = vadd.f32 %v1851, %v2617
        %v2664 = vadd.f32 %v1852, %v2619
        %v2665 = vadd.f32 %v1853, %v2622
        %v2666 = vadd.f32 %v1854, %v2624
        %v2667 = vadd.f32 %v1855, %v2627
        %v2668 = vadd.f32 %v1856, %v2629
        %v2669 = vadd.f32 %v1857, %v2632
        %v2670 = vadd.f32 %v1858, %v2634
        %v2671 = vadd.f32 %v1859, %v2637
        %v2672 = vadd.f32 %v1860, %v2639
        %2673 = vst [vmem:[#allocation3] sm:$0xff] %v2641
        %2674 = vst [vmem:[#allocation3 + $0x8] sm:$0xff] %v2642
        %2675 = vst [vmem:[#allocation3 + $0x10] sm:$0xff] %v2643
        %2676 = vst [vmem:[#allocation3 + $0x18] sm:$0xff] %v2644
        %2677 = vst [vmem:[#allocation3 + $0x20] sm:$0xff] %v2645
        %2678 = vst [vmem:[#allocation3 + $0x28] sm:$0xff] %v2646
        %2679 = vst [vmem:[#allocation3 + $0x30] sm:$0xff] %v2647
        %2680 = vst [vmem:[#allocation3 + $0x38] sm:$0xff] %v2648
        %2681 = vst [vmem:[#allocation3 + $0x40] sm:$0xff] %v2649
        %2682 = vst [vmem:[#allocation3 + $0x48] sm:$0xff] %v2650
        %2683 = vst [vmem:[#allocation3 + $0x50] sm:$0xff] %v2651
        %2684 = vst [vmem:[#allocation3 + $0x58] sm:$0xff] %v2652
        %2685 = vst [vmem:[#allocation3 + $0x60] sm:$0xff] %v2653
        %2686 = vst [vmem:[#allocation3 + $0x68] sm:$0xff] %v2654
        %2687 = vst [vmem:[#allocation3 + $0x70] sm:$0xff] %v2655
        %2688 = vst [vmem:[#allocation3 + $0x78] sm:$0xff] %v2656
        %2689 = vst [vmem:[#allocation3 + $0x80] sm:$0xff] %v2657
        %2690 = vst [vmem:[#allocation3 + $0x88] sm:$0xff] %v2658
        %2691 = vst [vmem:[#allocation3 + $0x90] sm:$0xff] %v2659
        %2692 = vst [vmem:[#allocation3 + $0x98] sm:$0xff] %v2660
        %2693 = vst [vmem:[#allocation3 + $0xa0] sm:$0xff] %v2661
        %2694 = vst [vmem:[#allocation3 + $0xa8] sm:$0xff] %v2662
        %2695 = vst [vmem:[#allocation3 + $0xb0] sm:$0xff] %v2663
        %2696 = vst [vmem:[#allocation3 + $0xb8] sm:$0xff] %v2664
        %2697 = vst [vmem:[#allocation3 + $0xc0] sm:$0xff] %v2665
        %2698 = vst [vmem:[#allocation3 + $0xc8] sm:$0xff] %v2666
        %2699 = vst [vmem:[#allocation3 + $0xd0] sm:$0xff] %v2667
        %2700 = vst [vmem:[#allocation3 + $0xd8] sm:$0xff] %v2668
        %2701 = vst [vmem:[#allocation3 + $0xe0] sm:$0xff] %v2669
        %2702 = vst [vmem:[#allocation3 + $0xe8] sm:$0xff] %v2670
        %2703 = vst [vmem:[#allocation3 + $0xf0] sm:$0xff] %v2671
        %2704 = vst [vmem:[#allocation3 + $0xf8] sm:$0xff] %v2672
        %v2705 = vld [vmem:[#allocation3] sm:$0xff]
        %v2706 = vld [vmem:[#allocation3 + $0x8] sm:$0xff]
        %v2707 = vld [vmem:[#allocation3 + $0x10] sm:$0xff]
        %v2708 = vld [vmem:[#allocation3 + $0x18] sm:$0xff]
        %v2709 = vld [vmem:[#allocation3 + $0x20] sm:$0xff]
        %v2710 = vld [vmem:[#allocation3 + $0x28] sm:$0xff]
        %v2711 = vld [vmem:[#allocation3 + $0x30] sm:$0xff]
        %v2712 = vld [vmem:[#allocation3 + $0x38] sm:$0xff]
        %v2713 = vld [vmem:[#allocation3 + $0x40] sm:$0xff]
        %v2714 = vld [vmem:[#allocation3 + $0x48] sm:$0xff]
        %v2715 = vld [vmem:[#allocation3 + $0x50] sm:$0xff]
        %v2716 = vld [vmem:[#allocation3 + $0x58] sm:$0xff]
        %v2717 = vld [vmem:[#allocation3 + $0x60] sm:$0xff]
        %v2718 = vld [vmem:[#allocation3 + $0x68] sm:$0xff]
        %v2719 = vld [vmem:[#allocation3 + $0x70] sm:$0xff]
        %v2720 = vld [vmem:[#allocation3 + $0x78] sm:$0xff]
        %v2721 = vld [vmem:[#allocation3 + $0x80] sm:$0xff]
        %v2722 = vld [vmem:[#allocation3 + $0x88] sm:$0xff]
        %v2723 = vld [vmem:[#allocation3 + $0x90] sm:$0xff]
        %v2724 = vld [vmem:[#allocation3 + $0x98] sm:$0xff]
        %v2725 = vld [vmem:[#allocation3 + $0xa0] sm:$0xff]
        %v2726 = vld [vmem:[#allocation3 + $0xa8] sm:$0xff]
        %v2727 = vld [vmem:[#allocation3 + $0xb0] sm:$0xff]
        %v2728 = vld [vmem:[#allocation3 + $0xb8] sm:$0xff]
        %v2729 = vld [vmem:[#allocation3 + $0xc0] sm:$0xff]
        %v2730 = vld [vmem:[#allocation3 + $0xc8] sm:$0xff]
        %v2731 = vld [vmem:[#allocation3 + $0xd0] sm:$0xff]
        %v2732 = vld [vmem:[#allocation3 + $0xd8] sm:$0xff]
        %v2733 = vld [vmem:[#allocation3 + $0xe0] sm:$0xff]
        %v2734 = vld [vmem:[#allocation3 + $0xe8] sm:$0xff]
        %v2735 = vld [vmem:[#allocation3 + $0xf0] sm:$0xff]
        %v2736 = vld [vmem:[#allocation3 + $0xf8] sm:$0xff]
        %s2737 = scalar_lea.vmem [#allocation2], 48
        %v2738 = vld [vmem:[%s2737] sm:$0xff]
        %v2739 = vld [vmem:[%s2737 + $0x8] sm:$0xf]
        %v2740 = vld [vmem:[%s2737 + $0xc] sm:$0xff]
        %v2741 = vld [vmem:[%s2737 + $0x14] sm:$0xf]
        %v2742 = vld [vmem:[%s2737 + $0x18] sm:$0xff]
        %v2743 = vld [vmem:[%s2737 + $0x20] sm:$0xf]
        %v2744 = vld [vmem:[%s2737 + $0x24] sm:$0xff]
        %v2745 = vld [vmem:[%s2737 + $0x2c] sm:$0xf]
        %v2746 = vld [vmem:[%s2737 + $0x30] sm:$0xff]
        %v2747 = vld [vmem:[%s2737 + $0x38] sm:$0xf]
        %v2748 = vld [vmem:[%s2737 + $0x3c] sm:$0xff]
        %v2749 = vld [vmem:[%s2737 + $0x44] sm:$0xf]
        %v2750 = vld [vmem:[%s2737 + $0x48] sm:$0xff]
        %v2751 = vld [vmem:[%s2737 + $0x50] sm:$0xf]
        %v2752 = vld [vmem:[%s2737 + $0x54] sm:$0xff]
        %v2753 = vld [vmem:[%s2737 + $0x5c] sm:$0xf]
        %v2754 = vld [vmem:[%s2737 + $0x60] sm:$0xff]
        %v2755 = vld [vmem:[%s2737 + $0x68] sm:$0xf]
        %v2756 = vld [vmem:[%s2737 + $0x6c] sm:$0xff]
        %v2757 = vld [vmem:[%s2737 + $0x74] sm:$0xf]
        %v2758 = vld [vmem:[%s2737 + $0x78] sm:$0xff]
        %v2759 = vld [vmem:[%s2737 + $0x80] sm:$0xf]
        %v2760 = vld [vmem:[%s2737 + $0x84] sm:$0xff]
        %v2761 = vld [vmem:[%s2737 + $0x8c] sm:$0xf]
        %v2762 = vld [vmem:[%s2737 + $0x90] sm:$0xff]
        %v2763 = vld [vmem:[%s2737 + $0x98] sm:$0xf]
        %v2764 = vld [vmem:[%s2737 + $0x9c] sm:$0xff]
        %v2765 = vld [vmem:[%s2737 + $0xa4] sm:$0xf]
        %v2766 = vld [vmem:[%s2737 + $0xa8] sm:$0xff]
        %v2767 = vld [vmem:[%s2737 + $0xb0] sm:$0xf]
        %v2768 = vld [vmem:[%s2737 + $0xb4] sm:$0xff]
        %v2769 = vld [vmem:[%s2737 + $0xbc] sm:$0xf]
        %v2770 = vld [vmem:[%s2737 + $0xc0] sm:$0xff]
        %v2771 = vld [vmem:[%s2737 + $0xc8] sm:$0xf]
        %v2772 = vld [vmem:[%s2737 + $0xcc] sm:$0xff]
        %v2773 = vld [vmem:[%s2737 + $0xd4] sm:$0xf]
        %v2774 = vld [vmem:[%s2737 + $0xd8] sm:$0xff]
        %v2775 = vld [vmem:[%s2737 + $0xe0] sm:$0xf]
        %v2776 = vld [vmem:[%s2737 + $0xe4] sm:$0xff]
        %v2777 = vld [vmem:[%s2737 + $0xec] sm:$0xf]
        %v2778 = vld [vmem:[%s2737 + $0xf0] sm:$0xff]
        %v2779 = vld [vmem:[%s2737 + $0xf8] sm:$0xf]
        %v2780 = vld [vmem:[%s2737 + $0xfc] sm:$0xff]
        %v2781 = vld [vmem:[%s2737 + $0x104] sm:$0xf]
        %v2782 = vld [vmem:[%s2737 + $0x108] sm:$0xff]
        %v2783 = vld [vmem:[%s2737 + $0x110] sm:$0xf]
        %v2784 = vld [vmem:[%s2737 + $0x114] sm:$0xff]
        %v2785 = vld [vmem:[%s2737 + $0x11c] sm:$0xf]
        %v2786 = vld [vmem:[%s2737 + $0x120] sm:$0xff]
        %v2787 = vld [vmem:[%s2737 + $0x128] sm:$0xf]
        %v2788 = vld [vmem:[%s2737 + $0x12c] sm:$0xff]
        %v2789 = vld [vmem:[%s2737 + $0x134] sm:$0xf]
        %v2790 = vld [vmem:[%s2737 + $0x138] sm:$0xff]
        %v2791 = vld [vmem:[%s2737 + $0x140] sm:$0xf]
        %v2792 = vld [vmem:[%s2737 + $0x144] sm:$0xff]
        %v2793 = vld [vmem:[%s2737 + $0x14c] sm:$0xf]
        %v2794 = vld [vmem:[%s2737 + $0x150] sm:$0xff]
        %v2795 = vld [vmem:[%s2737 + $0x158] sm:$0xf]
        %v2796 = vld [vmem:[%s2737 + $0x15c] sm:$0xff]
        %v2797 = vld [vmem:[%s2737 + $0x164] sm:$0xf]
        %v2798 = vld [vmem:[%s2737 + $0x168] sm:$0xff]
        %v2799 = vld [vmem:[%s2737 + $0x170] sm:$0xf]
        %v2800 = vld [vmem:[%s2737 + $0x174] sm:$0xff]
        %v2801 = vld [vmem:[%s2737 + $0x17c] sm:$0xf]
        %s2802 = scalar_lea.vmem [#allocation7], 384
        %v2803 = vld [vmem:[%s2802] sm:$0xf]
        %v2804 = vld [vmem:[%s2802 + $0x4] sm:$0xf]
        %v2805 = vld [vmem:[%s2802 + $0x8] sm:$0xf]
        %v2806 = vld [vmem:[%s2802 + $0xc] sm:$0xf]
        %v2807 = vld [vmem:[%s2802 + $0x10] sm:$0xf]
        %v2808 = vld [vmem:[%s2802 + $0x14] sm:$0xf]
        %v2809 = vld [vmem:[%s2802 + $0x18] sm:$0xf]
        %v2810 = vld [vmem:[%s2802 + $0x1c] sm:$0xf]
        %v2811 = vld [vmem:[%s2802 + $0x20] sm:$0xf]
        %v2812 = vld [vmem:[%s2802 + $0x24] sm:$0xf]
        %v2813 = vld [vmem:[%s2802 + $0x28] sm:$0xf]
        %v2814 = vld [vmem:[%s2802 + $0x2c] sm:$0xf]
        %v2815 = vld [vmem:[%s2802 + $0x30] sm:$0xf]
        %v2816 = vld [vmem:[%s2802 + $0x34] sm:$0xf]
        %v2817 = vld [vmem:[%s2802 + $0x38] sm:$0xf]
        %v2818 = vld [vmem:[%s2802 + $0x3c] sm:$0xf]
        %v2819 = vld [vmem:[%s2802 + $0x40] sm:$0xf]
        %v2820 = vld [vmem:[%s2802 + $0x44] sm:$0xf]
        %v2821 = vld [vmem:[%s2802 + $0x48] sm:$0xf]
        %v2822 = vld [vmem:[%s2802 + $0x4c] sm:$0xf]
        %v2823 = vld [vmem:[%s2802 + $0x50] sm:$0xf]
        %v2824 = vld [vmem:[%s2802 + $0x54] sm:$0xf]
        %v2825 = vld [vmem:[%s2802 + $0x58] sm:$0xf]
        %v2826 = vld [vmem:[%s2802 + $0x5c] sm:$0xf]
        %v2827 = vld [vmem:[%s2802 + $0x60] sm:$0xf]
        %v2828 = vld [vmem:[%s2802 + $0x64] sm:$0xf]
        %v2829 = vld [vmem:[%s2802 + $0x68] sm:$0xf]
        %v2830 = vld [vmem:[%s2802 + $0x6c] sm:$0xf]
        %v2831 = vld [vmem:[%s2802 + $0x70] sm:$0xf]
        %v2832 = vld [vmem:[%s2802 + $0x74] sm:$0xf]
        %v2833 = vld [vmem:[%s2802 + $0x78] sm:$0xf]
        %v2834 = vld [vmem:[%s2802 + $0x7c] sm:$0xf]
        %v2835 = vld [vmem:[%s2802 + $0x80] sm:$0xf]
        %v2836 = vld [vmem:[%s2802 + $0x84] sm:$0xf]
        %v2837 = vld [vmem:[%s2802 + $0x88] sm:$0xf]
        %v2838 = vld [vmem:[%s2802 + $0x8c] sm:$0xf]
        %v2839 = vld [vmem:[%s2802 + $0x90] sm:$0xf]
        %v2840 = vld [vmem:[%s2802 + $0x94] sm:$0xf]
        %v2841 = vld [vmem:[%s2802 + $0x98] sm:$0xf]
        %v2842 = vld [vmem:[%s2802 + $0x9c] sm:$0xf]
        %v2843 = vld [vmem:[%s2802 + $0xa0] sm:$0xf]
        %v2844 = vld [vmem:[%s2802 + $0xa4] sm:$0xf]
        %v2845 = vld [vmem:[%s2802 + $0xa8] sm:$0xf]
        %v2846 = vld [vmem:[%s2802 + $0xac] sm:$0xf]
        %v2847 = vld [vmem:[%s2802 + $0xb0] sm:$0xf]
        %v2848 = vld [vmem:[%s2802 + $0xb4] sm:$0xf]
        %v2849 = vld [vmem:[%s2802 + $0xb8] sm:$0xf]
        %v2850 = vld [vmem:[%s2802 + $0xbc] sm:$0xf]
        %v2915 = vunpack.c.l.b16 %v2738
        %v2916 = vunpack.c.h.b16 %v2738
        %v2917 = vunpack.c.l.b16 %v2739
        %v2918 = vunpack.c.l.b16 %v2740
        %v2919 = vunpack.c.h.b16 %v2740
        %v2920 = vunpack.c.l.b16 %v2741
        %v2921 = vunpack.c.l.b16 %v2742
        %v2922 = vunpack.c.h.b16 %v2742
        %v2923 = vunpack.c.l.b16 %v2743
        %v2924 = vunpack.c.l.b16 %v2744
        %v2925 = vunpack.c.h.b16 %v2744
        %v2926 = vunpack.c.l.b16 %v2745
        %v2927 = vunpack.c.l.b16 %v2746
        %v2928 = vunpack.c.h.b16 %v2746
        %v2929 = vunpack.c.l.b16 %v2747
        %v2930 = vunpack.c.l.b16 %v2748
        %v2931 = vunpack.c.h.b16 %v2748
        %v2932 = vunpack.c.l.b16 %v2749
        %v2933 = vunpack.c.l.b16 %v2750
        %v2934 = vunpack.c.h.b16 %v2750
        %v2935 = vunpack.c.l.b16 %v2751
        %v2936 = vunpack.c.l.b16 %v2752
        %v2937 = vunpack.c.h.b16 %v2752
        %v2938 = vunpack.c.l.b16 %v2753
        %v2939 = vunpack.c.l.b16 %v2754
        %v2940 = vunpack.c.h.b16 %v2754
        %v2941 = vunpack.c.l.b16 %v2755
        %v2942 = vunpack.c.l.b16 %v2756
        %v2943 = vunpack.c.h.b16 %v2756
        %v2944 = vunpack.c.l.b16 %v2757
        %v2945 = vunpack.c.l.b16 %v2758
        %v2946 = vunpack.c.h.b16 %v2758
        %v2947 = vunpack.c.l.b16 %v2759
        %v2948 = vunpack.c.l.b16 %v2760
        %v2949 = vunpack.c.h.b16 %v2760
        %v2950 = vunpack.c.l.b16 %v2761
        %v2951 = vunpack.c.l.b16 %v2762
        %v2952 = vunpack.c.h.b16 %v2762
        %v2953 = vunpack.c.l.b16 %v2763
        %v2954 = vunpack.c.l.b16 %v2764
        %v2955 = vunpack.c.h.b16 %v2764
        %v2956 = vunpack.c.l.b16 %v2765
        %v2957 = vunpack.c.l.b16 %v2766
        %v2958 = vunpack.c.h.b16 %v2766
        %v2959 = vunpack.c.l.b16 %v2767
        %v2960 = vunpack.c.l.b16 %v2768
        %v2961 = vunpack.c.h.b16 %v2768
        %v2962 = vunpack.c.l.b16 %v2769
        %v2963 = vunpack.c.l.b16 %v2770
        %v2964 = vunpack.c.h.b16 %v2770
        %v2965 = vunpack.c.l.b16 %v2771
        %v2966 = vunpack.c.l.b16 %v2772
        %v2967 = vunpack.c.h.b16 %v2772
        %v2968 = vunpack.c.l.b16 %v2773
        %v2969 = vunpack.c.l.b16 %v2774
        %v2970 = vunpack.c.h.b16 %v2774
        %v2971 = vunpack.c.l.b16 %v2775
        %v2972 = vunpack.c.l.b16 %v2776
        %v2973 = vunpack.c.h.b16 %v2776
        %v2974 = vunpack.c.l.b16 %v2777
        %v2975 = vunpack.c.l.b16 %v2778
        %v2976 = vunpack.c.h.b16 %v2778
        %v2977 = vunpack.c.l.b16 %v2779
        %v2978 = vunpack.c.l.b16 %v2780
        %v2979 = vunpack.c.h.b16 %v2780
        %v2980 = vunpack.c.l.b16 %v2781
        %v2981 = vunpack.c.l.b16 %v2782
        %v2982 = vunpack.c.h.b16 %v2782
        %v2983 = vunpack.c.l.b16 %v2783
        %v2984 = vunpack.c.l.b16 %v2784
        %v2985 = vunpack.c.h.b16 %v2784
        %v2986 = vunpack.c.l.b16 %v2785
        %v2987 = vunpack.c.l.b16 %v2786
        %v2988 = vunpack.c.h.b16 %v2786
        %v2989 = vunpack.c.l.b16 %v2787
        %v2990 = vunpack.c.l.b16 %v2788
        %v2991 = vunpack.c.h.b16 %v2788
        %v2992 = vunpack.c.l.b16 %v2789
        %v2993 = vunpack.c.l.b16 %v2790
        %v2994 = vunpack.c.h.b16 %v2790
        %v2995 = vunpack.c.l.b16 %v2791
        %v2996 = vunpack.c.l.b16 %v2792
        %v2997 = vunpack.c.h.b16 %v2792
        %v2998 = vunpack.c.l.b16 %v2793
        %v2999 = vunpack.c.l.b16 %v2794
        %v3000 = vunpack.c.h.b16 %v2794
        %v3001 = vunpack.c.l.b16 %v2795
        %v3002 = vunpack.c.l.b16 %v2796
        %v3003 = vunpack.c.h.b16 %v2796
        %v3004 = vunpack.c.l.b16 %v2797
        %v3005 = vunpack.c.l.b16 %v2798
        %v3006 = vunpack.c.h.b16 %v2798
        %v3007 = vunpack.c.l.b16 %v2799
        %v3008 = vunpack.c.l.b16 %v2800
        %v3009 = vunpack.c.h.b16 %v2800
        %v3010 = vunpack.c.l.b16 %v2801
        %v3011 = vpack.c.b16 %v2918, %v2915
        %v3012 = vpack.c.b16 %v2919, %v2916
        %v3013 = vpack.c.b16 %v2920, %v2917
        %v3014 = vpack.c.b16 %v2924, %v2921
        %v3015 = vpack.c.b16 %v2925, %v2922
        %v3016 = vpack.c.b16 %v2926, %v2923
        %v3017 = vpack.c.b16 %v2930, %v2927
        %v3018 = vpack.c.b16 %v2931, %v2928
        %v3019 = vpack.c.b16 %v2932, %v2929
        %v3020 = vpack.c.b16 %v2936, %v2933
        %v3021 = vpack.c.b16 %v2937, %v2934
        %v3022 = vpack.c.b16 %v2938, %v2935
        %v3023 = vpack.c.b16 %v2942, %v2939
        %v3024 = vpack.c.b16 %v2943, %v2940
        %v3025 = vpack.c.b16 %v2944, %v2941
        %v3026 = vpack.c.b16 %v2948, %v2945
        %v3027 = vpack.c.b16 %v2949, %v2946
        %v3028 = vpack.c.b16 %v2950, %v2947
        %v3029 = vpack.c.b16 %v2954, %v2951
        %v3030 = vpack.c.b16 %v2955, %v2952
        %v3031 = vpack.c.b16 %v2956, %v2953
        %v3032 = vpack.c.b16 %v2960, %v2957
        %v3033 = vpack.c.b16 %v2961, %v2958
        %v3034 = vpack.c.b16 %v2962, %v2959
        %v3035 = vpack.c.b16 %v2966, %v2963
        %v3036 = vpack.c.b16 %v2967, %v2964
        %v3037 = vpack.c.b16 %v2968, %v2965
        %v3038 = vpack.c.b16 %v2972, %v2969
        %v3039 = vpack.c.b16 %v2973, %v2970
        %v3040 = vpack.c.b16 %v2974, %v2971
        %v3041 = vpack.c.b16 %v2978, %v2975
        %v3042 = vpack.c.b16 %v2979, %v2976
        %v3043 = vpack.c.b16 %v2980, %v2977
        %v3044 = vpack.c.b16 %v2984, %v2981
        %v3045 = vpack.c.b16 %v2985, %v2982
        %v3046 = vpack.c.b16 %v2986, %v2983
        %v3047 = vpack.c.b16 %v2990, %v2987
        %v3048 = vpack.c.b16 %v2991, %v2988
        %v3049 = vpack.c.b16 %v2992, %v2989
        %v3050 = vpack.c.b16 %v2996, %v2993
        %v3051 = vpack.c.b16 %v2997, %v2994
        %v3052 = vpack.c.b16 %v2998, %v2995
        %v3053 = vpack.c.b16 %v3002, %v2999
        %v3054 = vpack.c.b16 %v3003, %v3000
        %v3055 = vpack.c.b16 %v3004, %v3001
        %v3056 = vpack.c.b16 %v3008, %v3005
        %v3057 = vpack.c.b16 %v3009, %v3006
        %v3058 = vpack.c.b16 %v3010, %v3007
        %v3155 = vunpack.c.l.b16 %v2803
        %v3156 = vunpack.c.l.b16 %v2804
        %v3157 = vunpack.c.l.b16 %v2805
        %v3158 = vunpack.c.l.b16 %v2806
        %v3159 = vunpack.c.l.b16 %v2807
        %v3160 = vunpack.c.l.b16 %v2808
        %v3161 = vunpack.c.l.b16 %v2809
        %v3162 = vunpack.c.l.b16 %v2810
        %v3163 = vunpack.c.l.b16 %v2811
        %v3164 = vunpack.c.l.b16 %v2812
        %v3165 = vunpack.c.l.b16 %v2813
        %v3166 = vunpack.c.l.b16 %v2814
        %v3167 = vunpack.c.l.b16 %v2815
        %v3168 = vunpack.c.l.b16 %v2816
        %v3169 = vunpack.c.l.b16 %v2817
        %v3170 = vunpack.c.l.b16 %v2818
        %v3171 = vunpack.c.l.b16 %v2819
        %v3172 = vunpack.c.l.b16 %v2820
        %v3173 = vunpack.c.l.b16 %v2821
        %v3174 = vunpack.c.l.b16 %v2822
        %v3175 = vunpack.c.l.b16 %v2823
        %v3176 = vunpack.c.l.b16 %v2824
        %v3177 = vunpack.c.l.b16 %v2825
        %v3178 = vunpack.c.l.b16 %v2826
        %v3179 = vunpack.c.l.b16 %v2827
        %v3180 = vunpack.c.l.b16 %v2828
        %v3181 = vunpack.c.l.b16 %v2829
        %v3182 = vunpack.c.l.b16 %v2830
        %v3183 = vunpack.c.l.b16 %v2831
        %v3184 = vunpack.c.l.b16 %v2832
        %v3185 = vunpack.c.l.b16 %v2833
        %v3186 = vunpack.c.l.b16 %v2834
        %v3187 = vunpack.c.l.b16 %v2835
        %v3188 = vunpack.c.l.b16 %v2836
        %v3189 = vunpack.c.l.b16 %v2837
        %v3190 = vunpack.c.l.b16 %v2838
        %v3191 = vunpack.c.l.b16 %v2839
        %v3192 = vunpack.c.l.b16 %v2840
        %v3193 = vunpack.c.l.b16 %v2841
        %v3194 = vunpack.c.l.b16 %v2842
        %v3195 = vunpack.c.l.b16 %v2843
        %v3196 = vunpack.c.l.b16 %v2844
        %v3197 = vunpack.c.l.b16 %v2845
        %v3198 = vunpack.c.l.b16 %v2846
        %v3199 = vunpack.c.l.b16 %v2847
        %v3200 = vunpack.c.l.b16 %v2848
        %v3201 = vunpack.c.l.b16 %v2849
        %v3202 = vunpack.c.l.b16 %v2850
        %v3203 = vpack.c.b16 %v3156, %v3155
        %v3204 = vpack.c.b16 %v3158, %v3157
        %v3205 = vpack.c.b16 %v3160, %v3159
        %v3206 = vpack.c.b16 %v3162, %v3161
        %v3207 = vpack.c.b16 %v3164, %v3163
        %v3208 = vpack.c.b16 %v3166, %v3165
        %v3209 = vpack.c.b16 %v3168, %v3167
        %v3210 = vpack.c.b16 %v3170, %v3169
        %v3211 = vpack.c.b16 %v3172, %v3171
        %v3212 = vpack.c.b16 %v3174, %v3173
        %v3213 = vpack.c.b16 %v3176, %v3175
        %v3214 = vpack.c.b16 %v3178, %v3177
        %v3215 = vpack.c.b16 %v3180, %v3179
        %v3216 = vpack.c.b16 %v3182, %v3181
        %v3217 = vpack.c.b16 %v3184, %v3183
        %v3218 = vpack.c.b16 %v3186, %v3185
        %v3219 = vpack.c.b16 %v3188, %v3187
        %v3220 = vpack.c.b16 %v3190, %v3189
        %v3221 = vpack.c.b16 %v3192, %v3191
        %v3222 = vpack.c.b16 %v3194, %v3193
        %v3223 = vpack.c.b16 %v3196, %v3195
        %v3224 = vpack.c.b16 %v3198, %v3197
        %v3225 = vpack.c.b16 %v3200, %v3199
        %v3226 = vpack.c.b16 %v3202, %v3201
        %3251 = vmatpush.bf16.msra.mxu0 %v3210
        %3252 = vmatpush.bf16.msra.mxu0 %v3209
        %3253 = vmatpush.bf16.msra.mxu0 %v3208
        %3254 = vmatpush.bf16.msra.mxu0 %v3207
        %3255 = vmatpush.bf16.msra.mxu0 %v3206
        %3256 = vmatpush.bf16.msra.mxu0 %v3205
        %3257 = vmatpush.bf16.msra.mxu0 %v3204
        %3258 = vmatpush.bf16.msra.mxu0 %v3203
        %3259 = vmatmul.bf16.gmra.mxu0 %v3011
        %v3260 = vpop.f32.mrf.mxu0
        %v3261 = vadd.f32 0.0, %v3260
        %v3262 = vpop.f32.mrf.mxu0
        %v3263 = vadd.f32 0.0, %v3262
        %3264 = vmatmul.bf16.gmra.mxu0 %v3014
        %v3265 = vpop.f32.mrf.mxu0
        %v3266 = vadd.f32 0.0, %v3265
        %v3267 = vpop.f32.mrf.mxu0
        %v3268 = vadd.f32 0.0, %v3267
        %3269 = vmatmul.bf16.gmra.mxu0 %v3017
        %v3270 = vpop.f32.mrf.mxu0
        %v3271 = vadd.f32 0.0, %v3270
        %v3272 = vpop.f32.mrf.mxu0
        %v3273 = vadd.f32 0.0, %v3272
        %3274 = vmatmul.bf16.gmra.mxu0 %v3020
        %v3275 = vpop.f32.mrf.mxu0
        %v3276 = vadd.f32 0.0, %v3275
        %v3277 = vpop.f32.mrf.mxu0
        %v3278 = vadd.f32 0.0, %v3277
        %3279 = vmatmul.bf16.gmra.mxu0 %v3023
        %v3280 = vpop.f32.mrf.mxu0
        %v3281 = vadd.f32 0.0, %v3280
        %v3282 = vpop.f32.mrf.mxu0
        %v3283 = vadd.f32 0.0, %v3282
        %3284 = vmatmul.bf16.gmra.mxu0 %v3026
        %v3285 = vpop.f32.mrf.mxu0
        %v3286 = vadd.f32 0.0, %v3285
        %v3287 = vpop.f32.mrf.mxu0
        %v3288 = vadd.f32 0.0, %v3287
        %3289 = vmatmul.bf16.gmra.mxu0 %v3029
        %v3290 = vpop.f32.mrf.mxu0
        %v3291 = vadd.f32 0.0, %v3290
        %v3292 = vpop.f32.mrf.mxu0
        %v3293 = vadd.f32 0.0, %v3292
        %3294 = vmatmul.bf16.gmra.mxu0 %v3032
        %v3295 = vpop.f32.mrf.mxu0
        %v3296 = vadd.f32 0.0, %v3295
        %v3297 = vpop.f32.mrf.mxu0
        %v3298 = vadd.f32 0.0, %v3297
        %3299 = vmatmul.bf16.gmra.mxu0 %v3035
        %v3300 = vpop.f32.mrf.mxu0
        %v3301 = vadd.f32 0.0, %v3300
        %v3302 = vpop.f32.mrf.mxu0
        %v3303 = vadd.f32 0.0, %v3302
        %3304 = vmatmul.bf16.gmra.mxu0 %v3038
        %v3305 = vpop.f32.mrf.mxu0
        %v3306 = vadd.f32 0.0, %v3305
        %v3307 = vpop.f32.mrf.mxu0
        %v3308 = vadd.f32 0.0, %v3307
        %3309 = vmatmul.bf16.gmra.mxu0 %v3041
        %v3310 = vpop.f32.mrf.mxu0
        %v3311 = vadd.f32 0.0, %v3310
        %v3312 = vpop.f32.mrf.mxu0
        %v3313 = vadd.f32 0.0, %v3312
        %3314 = vmatmul.bf16.gmra.mxu0 %v3044
        %v3315 = vpop.f32.mrf.mxu0
        %v3316 = vadd.f32 0.0, %v3315
        %v3317 = vpop.f32.mrf.mxu0
        %v3318 = vadd.f32 0.0, %v3317
        %3319 = vmatmul.bf16.gmra.mxu0 %v3047
        %v3320 = vpop.f32.mrf.mxu0
        %v3321 = vadd.f32 0.0, %v3320
        %v3322 = vpop.f32.mrf.mxu0
        %v3323 = vadd.f32 0.0, %v3322
        %3324 = vmatmul.bf16.gmra.mxu0 %v3050
        %v3325 = vpop.f32.mrf.mxu0
        %v3326 = vadd.f32 0.0, %v3325
        %v3327 = vpop.f32.mrf.mxu0
        %v3328 = vadd.f32 0.0, %v3327
        %3329 = vmatmul.bf16.gmra.mxu0 %v3053
        %v3330 = vpop.f32.mrf.mxu0
        %v3331 = vadd.f32 0.0, %v3330
        %v3332 = vpop.f32.mrf.mxu0
        %v3333 = vadd.f32 0.0, %v3332
        %3334 = vmatmul.bf16.gmra.mxu0 %v3056
        %v3335 = vpop.f32.mrf.mxu0
        %v3336 = vadd.f32 0.0, %v3335
        %v3337 = vpop.f32.mrf.mxu0
        %v3338 = vadd.f32 0.0, %v3337
        %3339 = vdwg.mxu0
        %3340 = vmatpush.bf16.msra.mxu0 %v3218
        %3341 = vmatpush.bf16.msra.mxu0 %v3217
        %3342 = vmatpush.bf16.msra.mxu0 %v3216
        %3343 = vmatpush.bf16.msra.mxu0 %v3215
        %3344 = vmatpush.bf16.msra.mxu0 %v3214
        %3345 = vmatpush.bf16.msra.mxu0 %v3213
        %3346 = vmatpush.bf16.msra.mxu0 %v3212
        %3347 = vmatpush.bf16.msra.mxu0 %v3211
        %3348 = vmatmul.bf16.gmra.mxu0 %v3012
        %v3349 = vpop.f32.mrf.mxu0
        %v3350 = vadd.f32 %v3261, %v3349
        %v3351 = vpop.f32.mrf.mxu0
        %v3352 = vadd.f32 %v3263, %v3351
        %3353 = vmatmul.bf16.gmra.mxu0 %v3015
        %v3354 = vpop.f32.mrf.mxu0
        %v3355 = vadd.f32 %v3266, %v3354
        %v3356 = vpop.f32.mrf.mxu0
        %v3357 = vadd.f32 %v3268, %v3356
        %3358 = vmatmul.bf16.gmra.mxu0 %v3018
        %v3359 = vpop.f32.mrf.mxu0
        %v3360 = vadd.f32 %v3271, %v3359
        %v3361 = vpop.f32.mrf.mxu0
        %v3362 = vadd.f32 %v3273, %v3361
        %3363 = vmatmul.bf16.gmra.mxu0 %v3021
        %v3364 = vpop.f32.mrf.mxu0
        %v3365 = vadd.f32 %v3276, %v3364
        %v3366 = vpop.f32.mrf.mxu0
        %v3367 = vadd.f32 %v3278, %v3366
        %3368 = vmatmul.bf16.gmra.mxu0 %v3024
        %v3369 = vpop.f32.mrf.mxu0
        %v3370 = vadd.f32 %v3281, %v3369
        %v3371 = vpop.f32.mrf.mxu0
        %v3372 = vadd.f32 %v3283, %v3371
        %3373 = vmatmul.bf16.gmra.mxu0 %v3027
        %v3374 = vpop.f32.mrf.mxu0
        %v3375 = vadd.f32 %v3286, %v3374
        %v3376 = vpop.f32.mrf.mxu0
        %v3377 = vadd.f32 %v3288, %v3376
        %3378 = vmatmul.bf16.gmra.mxu0 %v3030
        %v3379 = vpop.f32.mrf.mxu0
        %v3380 = vadd.f32 %v3291, %v3379
        %v3381 = vpop.f32.mrf.mxu0
        %v3382 = vadd.f32 %v3293, %v3381
        %3383 = vmatmul.bf16.gmra.mxu0 %v3033
        %v3384 = vpop.f32.mrf.mxu0
        %v3385 = vadd.f32 %v3296, %v3384
        %v3386 = vpop.f32.mrf.mxu0
        %v3387 = vadd.f32 %v3298, %v3386
        %3388 = vmatmul.bf16.gmra.mxu0 %v3036
        %v3389 = vpop.f32.mrf.mxu0
        %v3390 = vadd.f32 %v3301, %v3389
        %v3391 = vpop.f32.mrf.mxu0
        %v3392 = vadd.f32 %v3303, %v3391
        %3393 = vmatmul.bf16.gmra.mxu0 %v3039
        %v3394 = vpop.f32.mrf.mxu0
        %v3395 = vadd.f32 %v3306, %v3394
        %v3396 = vpop.f32.mrf.mxu0
        %v3397 = vadd.f32 %v3308, %v3396
        %3398 = vmatmul.bf16.gmra.mxu0 %v3042
        %v3399 = vpop.f32.mrf.mxu0
        %v3400 = vadd.f32 %v3311, %v3399
        %v3401 = vpop.f32.mrf.mxu0
        %v3402 = vadd.f32 %v3313, %v3401
        %3403 = vmatmul.bf16.gmra.mxu0 %v3045
        %v3404 = vpop.f32.mrf.mxu0
        %v3405 = vadd.f32 %v3316, %v3404
        %v3406 = vpop.f32.mrf.mxu0
        %v3407 = vadd.f32 %v3318, %v3406
        %3408 = vmatmul.bf16.gmra.mxu0 %v3048
        %v3409 = vpop.f32.mrf.mxu0
        %v3410 = vadd.f32 %v3321, %v3409
        %v3411 = vpop.f32.mrf.mxu0
        %v3412 = vadd.f32 %v3323, %v3411
        %3413 = vmatmul.bf16.gmra.mxu0 %v3051
        %v3414 = vpop.f32.mrf.mxu0
        %v3415 = vadd.f32 %v3326, %v3414
        %v3416 = vpop.f32.mrf.mxu0
        %v3417 = vadd.f32 %v3328, %v3416
        %3418 = vmatmul.bf16.gmra.mxu0 %v3054
        %v3419 = vpop.f32.mrf.mxu0
        %v3420 = vadd.f32 %v3331, %v3419
        %v3421 = vpop.f32.mrf.mxu0
        %v3422 = vadd.f32 %v3333, %v3421
        %3423 = vmatmul.bf16.gmra.mxu0 %v3057
        %v3424 = vpop.f32.mrf.mxu0
        %v3425 = vadd.f32 %v3336, %v3424
        %v3426 = vpop.f32.mrf.mxu0
        %v3427 = vadd.f32 %v3338, %v3426
        %3428 = vdwg.mxu0
        %3429 = vmatpush.bf16.msra.mxu0 %v3226
        %3430 = vmatpush.bf16.msra.mxu0 %v3225
        %3431 = vmatpush.bf16.msra.mxu0 %v3224
        %3432 = vmatpush.bf16.msra.mxu0 %v3223
        %3433 = vmatpush.bf16.msra.mxu0 %v3222
        %3434 = vmatpush.bf16.msra.mxu0 %v3221
        %3435 = vmatpush.bf16.msra.mxu0 %v3220
        %3436 = vmatpush.bf16.msra.mxu0 %v3219
        %3437 = vmatmul.bf16.gmra.mxu0 %v3013
        %v3438 = vpop.f32.mrf.mxu0
        %v3439 = vadd.f32 %v3350, %v3438
        %v3440 = vpop.f32.mrf.mxu0
        %v3441 = vadd.f32 %v3352, %v3440
        %3442 = vmatmul.bf16.gmra.mxu0 %v3016
        %v3443 = vpop.f32.mrf.mxu0
        %v3444 = vadd.f32 %v3355, %v3443
        %v3445 = vpop.f32.mrf.mxu0
        %v3446 = vadd.f32 %v3357, %v3445
        %3447 = vmatmul.bf16.gmra.mxu0 %v3019
        %v3448 = vpop.f32.mrf.mxu0
        %v3449 = vadd.f32 %v3360, %v3448
        %v3450 = vpop.f32.mrf.mxu0
        %v3451 = vadd.f32 %v3362, %v3450
        %3452 = vmatmul.bf16.gmra.mxu0 %v3022
        %v3453 = vpop.f32.mrf.mxu0
        %v3454 = vadd.f32 %v3365, %v3453
        %v3455 = vpop.f32.mrf.mxu0
        %v3456 = vadd.f32 %v3367, %v3455
        %3457 = vmatmul.bf16.gmra.mxu0 %v3025
        %v3458 = vpop.f32.mrf.mxu0
        %v3459 = vadd.f32 %v3370, %v3458
        %v3460 = vpop.f32.mrf.mxu0
        %v3461 = vadd.f32 %v3372, %v3460
        %3462 = vmatmul.bf16.gmra.mxu0 %v3028
        %v3463 = vpop.f32.mrf.mxu0
        %v3464 = vadd.f32 %v3375, %v3463
        %v3465 = vpop.f32.mrf.mxu0
        %v3466 = vadd.f32 %v3377, %v3465
        %3467 = vmatmul.bf16.gmra.mxu0 %v3031
        %v3468 = vpop.f32.mrf.mxu0
        %v3469 = vadd.f32 %v3380, %v3468
        %v3470 = vpop.f32.mrf.mxu0
        %v3471 = vadd.f32 %v3382, %v3470
        %3472 = vmatmul.bf16.gmra.mxu0 %v3034
        %v3473 = vpop.f32.mrf.mxu0
        %v3474 = vadd.f32 %v3385, %v3473
        %v3475 = vpop.f32.mrf.mxu0
        %v3476 = vadd.f32 %v3387, %v3475
        %3477 = vmatmul.bf16.gmra.mxu0 %v3037
        %v3478 = vpop.f32.mrf.mxu0
        %v3479 = vadd.f32 %v3390, %v3478
        %v3480 = vpop.f32.mrf.mxu0
        %v3481 = vadd.f32 %v3392, %v3480
        %3482 = vmatmul.bf16.gmra.mxu0 %v3040
        %v3483 = vpop.f32.mrf.mxu0
        %v3484 = vadd.f32 %v3395, %v3483
        %v3485 = vpop.f32.mrf.mxu0
        %v3486 = vadd.f32 %v3397, %v3485
        %3487 = vmatmul.bf16.gmra.mxu0 %v3043
        %v3488 = vpop.f32.mrf.mxu0
        %v3489 = vadd.f32 %v3400, %v3488
        %v3490 = vpop.f32.mrf.mxu0
        %v3491 = vadd.f32 %v3402, %v3490
        %3492 = vmatmul.bf16.gmra.mxu0 %v3046
        %v3493 = vpop.f32.mrf.mxu0
        %v3494 = vadd.f32 %v3405, %v3493
        %v3495 = vpop.f32.mrf.mxu0
        %v3496 = vadd.f32 %v3407, %v3495
        %3497 = vmatmul.bf16.gmra.mxu0 %v3049
        %v3498 = vpop.f32.mrf.mxu0
        %v3499 = vadd.f32 %v3410, %v3498
        %v3500 = vpop.f32.mrf.mxu0
        %v3501 = vadd.f32 %v3412, %v3500
        %3502 = vmatmul.bf16.gmra.mxu0 %v3052
        %v3503 = vpop.f32.mrf.mxu0
        %v3504 = vadd.f32 %v3415, %v3503
        %v3505 = vpop.f32.mrf.mxu0
        %v3506 = vadd.f32 %v3417, %v3505
        %3507 = vmatmul.bf16.gmra.mxu0 %v3055
        %v3508 = vpop.f32.mrf.mxu0
        %v3509 = vadd.f32 %v3420, %v3508
        %v3510 = vpop.f32.mrf.mxu0
        %v3511 = vadd.f32 %v3422, %v3510
        %3512 = vmatmul.bf16.gmra.mxu0 %v3058
        %v3513 = vpop.f32.mrf.mxu0
        %v3514 = vadd.f32 %v3425, %v3513
        %v3515 = vpop.f32.mrf.mxu0
        %v3516 = vadd.f32 %v3427, %v3515
        %3517 = vdwg.mxu0
        %v3518 = vadd.f32 %v2705, %v3439
        %v3519 = vadd.f32 %v2706, %v3441
        %v3520 = vadd.f32 %v2707, %v3444
        %v3521 = vadd.f32 %v2708, %v3446
        %v3522 = vadd.f32 %v2709, %v3449
        %v3523 = vadd.f32 %v2710, %v3451
        %v3524 = vadd.f32 %v2711, %v3454
        %v3525 = vadd.f32 %v2712, %v3456
        %v3526 = vadd.f32 %v2713, %v3459
        %v3527 = vadd.f32 %v2714, %v3461
        %v3528 = vadd.f32 %v2715, %v3464
        %v3529 = vadd.f32 %v2716, %v3466
        %v3530 = vadd.f32 %v2717, %v3469
        %v3531 = vadd.f32 %v2718, %v3471
        %v3532 = vadd.f32 %v2719, %v3474
        %v3533 = vadd.f32 %v2720, %v3476
        %v3534 = vadd.f32 %v2721, %v3479
        %v3535 = vadd.f32 %v2722, %v3481
        %v3536 = vadd.f32 %v2723, %v3484
        %v3537 = vadd.f32 %v2724, %v3486
        %v3538 = vadd.f32 %v2725, %v3489
        %v3539 = vadd.f32 %v2726, %v3491
        %v3540 = vadd.f32 %v2727, %v3494
        %v3541 = vadd.f32 %v2728, %v3496
        %v3542 = vadd.f32 %v2729, %v3499
        %v3543 = vadd.f32 %v2730, %v3501
        %v3544 = vadd.f32 %v2731, %v3504
        %v3545 = vadd.f32 %v2732, %v3506
        %v3546 = vadd.f32 %v2733, %v3509
        %v3547 = vadd.f32 %v2734, %v3511
        %v3548 = vadd.f32 %v2735, %v3514
        %v3549 = vadd.f32 %v2736, %v3516
        %3550 = vst [vmem:[#allocation3] sm:$0xff] %v3518
        %3551 = vst [vmem:[#allocation3 + $0x8] sm:$0xff] %v3519
        %3552 = vst [vmem:[#allocation3 + $0x10] sm:$0xff] %v3520
        %3553 = vst [vmem:[#allocation3 + $0x18] sm:$0xff] %v3521
        %3554 = vst [vmem:[#allocation3 + $0x20] sm:$0xff] %v3522
        %3555 = vst [vmem:[#allocation3 + $0x28] sm:$0xff] %v3523
        %3556 = vst [vmem:[#allocation3 + $0x30] sm:$0xff] %v3524
        %3557 = vst [vmem:[#allocation3 + $0x38] sm:$0xff] %v3525
        %3558 = vst [vmem:[#allocation3 + $0x40] sm:$0xff] %v3526
        %3559 = vst [vmem:[#allocation3 + $0x48] sm:$0xff] %v3527
        %3560 = vst [vmem:[#allocation3 + $0x50] sm:$0xff] %v3528
        %3561 = vst [vmem:[#allocation3 + $0x58] sm:$0xff] %v3529
        %3562 = vst [vmem:[#allocation3 + $0x60] sm:$0xff] %v3530
        %3563 = vst [vmem:[#allocation3 + $0x68] sm:$0xff] %v3531
        %3564 = vst [vmem:[#allocation3 + $0x70] sm:$0xff] %v3532
        %3565 = vst [vmem:[#allocation3 + $0x78] sm:$0xff] %v3533
        %3566 = vst [vmem:[#allocation3 + $0x80] sm:$0xff] %v3534
        %3567 = vst [vmem:[#allocation3 + $0x88] sm:$0xff] %v3535
        %3568 = vst [vmem:[#allocation3 + $0x90] sm:$0xff] %v3536
        %3569 = vst [vmem:[#allocation3 + $0x98] sm:$0xff] %v3537
        %3570 = vst [vmem:[#allocation3 + $0xa0] sm:$0xff] %v3538
        %3571 = vst [vmem:[#allocation3 + $0xa8] sm:$0xff] %v3539
        %3572 = vst [vmem:[#allocation3 + $0xb0] sm:$0xff] %v3540
        %3573 = vst [vmem:[#allocation3 + $0xb8] sm:$0xff] %v3541
        %3574 = vst [vmem:[#allocation3 + $0xc0] sm:$0xff] %v3542
        %3575 = vst [vmem:[#allocation3 + $0xc8] sm:$0xff] %v3543
        %3576 = vst [vmem:[#allocation3 + $0xd0] sm:$0xff] %v3544
        %3577 = vst [vmem:[#allocation3 + $0xd8] sm:$0xff] %v3545
        %3578 = vst [vmem:[#allocation3 + $0xe0] sm:$0xff] %v3546
        %3579 = vst [vmem:[#allocation3 + $0xe8] sm:$0xff] %v3547
        %3580 = vst [vmem:[#allocation3 + $0xf0] sm:$0xff] %v3548
        %3581 = vst [vmem:[#allocation3 + $0xf8] sm:$0xff] %v3549
        %v3582 = vld [vmem:[#allocation3] sm:$0xff]
        %v3583 = vld [vmem:[#allocation3 + $0x8] sm:$0xff]
        %v3584 = vld [vmem:[#allocation3 + $0x10] sm:$0xff]
        %v3585 = vld [vmem:[#allocation3 + $0x18] sm:$0xff]
        %v3586 = vld [vmem:[#allocation3 + $0x20] sm:$0xff]
        %v3587 = vld [vmem:[#allocation3 + $0x28] sm:$0xff]
        %v3588 = vld [vmem:[#allocation3 + $0x30] sm:$0xff]
        %v3589 = vld [vmem:[#allocation3 + $0x38] sm:$0xff]
        %v3590 = vld [vmem:[#allocation3 + $0x40] sm:$0xff]
        %v3591 = vld [vmem:[#allocation3 + $0x48] sm:$0xff]
        %v3592 = vld [vmem:[#allocation3 + $0x50] sm:$0xff]
        %v3593 = vld [vmem:[#allocation3 + $0x58] sm:$0xff]
        %v3594 = vld [vmem:[#allocation3 + $0x60] sm:$0xff]
        %v3595 = vld [vmem:[#allocation3 + $0x68] sm:$0xff]
        %v3596 = vld [vmem:[#allocation3 + $0x70] sm:$0xff]
        %v3597 = vld [vmem:[#allocation3 + $0x78] sm:$0xff]
        %v3598 = vld [vmem:[#allocation3 + $0x80] sm:$0xff]
        %v3599 = vld [vmem:[#allocation3 + $0x88] sm:$0xff]
        %v3600 = vld [vmem:[#allocation3 + $0x90] sm:$0xff]
        %v3601 = vld [vmem:[#allocation3 + $0x98] sm:$0xff]
        %v3602 = vld [vmem:[#allocation3 + $0xa0] sm:$0xff]
        %v3603 = vld [vmem:[#allocation3 + $0xa8] sm:$0xff]
        %v3604 = vld [vmem:[#allocation3 + $0xb0] sm:$0xff]
        %v3605 = vld [vmem:[#allocation3 + $0xb8] sm:$0xff]
        %v3606 = vld [vmem:[#allocation3 + $0xc0] sm:$0xff]
        %v3607 = vld [vmem:[#allocation3 + $0xc8] sm:$0xff]
        %v3608 = vld [vmem:[#allocation3 + $0xd0] sm:$0xff]
        %v3609 = vld [vmem:[#allocation3 + $0xd8] sm:$0xff]
        %v3610 = vld [vmem:[#allocation3 + $0xe0] sm:$0xff]
        %v3611 = vld [vmem:[#allocation3 + $0xe8] sm:$0xff]
        %v3612 = vld [vmem:[#allocation3 + $0xf0] sm:$0xff]
        %v3613 = vld [vmem:[#allocation3 + $0xf8] sm:$0xff]
        %v3614 = vld [vmem:[%s2] sm:$0x1]
        %v3616 = vperm.slane %v3614, 0
        %v3618 = vadd.f32 %v3582, %v3616
        %v3619 = vadd.f32 %v3583, %v3616
        %v3620 = vadd.f32 %v3584, %v3616
        %v3621 = vadd.f32 %v3585, %v3616
        %v3622 = vadd.f32 %v3586, %v3616
        %v3623 = vadd.f32 %v3587, %v3616
        %v3624 = vadd.f32 %v3588, %v3616
        %v3625 = vadd.f32 %v3589, %v3616
        %v3626 = vadd.f32 %v3590, %v3616
        %v3627 = vadd.f32 %v3591, %v3616
        %v3628 = vadd.f32 %v3592, %v3616
        %v3629 = vadd.f32 %v3593, %v3616
        %v3630 = vadd.f32 %v3594, %v3616
        %v3631 = vadd.f32 %v3595, %v3616
        %v3632 = vadd.f32 %v3596, %v3616
        %v3633 = vadd.f32 %v3597, %v3616
        %v3634 = vadd.f32 %v3598, %v3616
        %v3635 = vadd.f32 %v3599, %v3616
        %v3636 = vadd.f32 %v3600, %v3616
        %v3637 = vadd.f32 %v3601, %v3616
        %v3638 = vadd.f32 %v3602, %v3616
        %v3639 = vadd.f32 %v3603, %v3616
        %v3640 = vadd.f32 %v3604, %v3616
        %v3641 = vadd.f32 %v3605, %v3616
        %v3642 = vadd.f32 %v3606, %v3616
        %v3643 = vadd.f32 %v3607, %v3616
        %v3644 = vadd.f32 %v3608, %v3616
        %v3645 = vadd.f32 %v3609, %v3616
        %v3646 = vadd.f32 %v3610, %v3616
        %v3647 = vadd.f32 %v3611, %v3616
        %v3648 = vadd.f32 %v3612, %v3616
        %v3649 = vadd.f32 %v3613, %v3616
        %v3650 = vsub.f32 0.0, %v3618
        %v3651 = vsub.f32 0.0, %v3619
        %v3652 = vsub.f32 0.0, %v3620
        %v3653 = vsub.f32 0.0, %v3621
        %v3654 = vsub.f32 0.0, %v3622
        %v3655 = vsub.f32 0.0, %v3623
        %v3656 = vsub.f32 0.0, %v3624
        %v3657 = vsub.f32 0.0, %v3625
        %v3658 = vsub.f32 0.0, %v3626
        %v3659 = vsub.f32 0.0, %v3627
        %v3660 = vsub.f32 0.0, %v3628
        %v3661 = vsub.f32 0.0, %v3629
        %v3662 = vsub.f32 0.0, %v3630
        %v3663 = vsub.f32 0.0, %v3631
        %v3664 = vsub.f32 0.0, %v3632
        %v3665 = vsub.f32 0.0, %v3633
        %v3666 = vsub.f32 0.0, %v3634
        %v3667 = vsub.f32 0.0, %v3635
        %v3668 = vsub.f32 0.0, %v3636
        %v3669 = vsub.f32 0.0, %v3637
        %v3670 = vsub.f32 0.0, %v3638
        %v3671 = vsub.f32 0.0, %v3639
        %v3672 = vsub.f32 0.0, %v3640
        %v3673 = vsub.f32 0.0, %v3641
        %v3674 = vsub.f32 0.0, %v3642
        %v3675 = vsub.f32 0.0, %v3643
        %v3676 = vsub.f32 0.0, %v3644
        %v3677 = vsub.f32 0.0, %v3645
        %v3678 = vsub.f32 0.0, %v3646
        %v3679 = vsub.f32 0.0, %v3647
        %v3680 = vsub.f32 0.0, %v3648
        %v3681 = vsub.f32 0.0, %v3649
        %v3682 = vmul.f32 %v3650, 1.442695
        %v3683 = vpow.pop %v3682
        %v3684 = vmul.f32 %v3651, 1.442695
        %v3685 = vpow.pop %v3684
        %v3686 = vmul.f32 %v3652, 1.442695
        %v3687 = vpow.pop %v3686
        %v3688 = vmul.f32 %v3653, 1.442695
        %v3689 = vpow.pop %v3688
        %v3690 = vmul.f32 %v3654, 1.442695
        %v3691 = vpow.pop %v3690
        %v3692 = vmul.f32 %v3655, 1.442695
        %v3693 = vpow.pop %v3692
        %v3694 = vmul.f32 %v3656, 1.442695
        %v3695 = vpow.pop %v3694
        %v3696 = vmul.f32 %v3657, 1.442695
        %v3697 = vpow.pop %v3696
        %v3698 = vmul.f32 %v3658, 1.442695
        %v3699 = vpow.pop %v3698
        %v3700 = vmul.f32 %v3659, 1.442695
        %v3701 = vpow.pop %v3700
        %v3702 = vmul.f32 %v3660, 1.442695
        %v3703 = vpow.pop %v3702
        %v3704 = vmul.f32 %v3661, 1.442695
        %v3705 = vpow.pop %v3704
        %v3706 = vmul.f32 %v3662, 1.442695
        %v3707 = vpow.pop %v3706
        %v3708 = vmul.f32 %v3663, 1.442695
        %v3709 = vpow.pop %v3708
        %v3710 = vmul.f32 %v3664, 1.442695
        %v3711 = vpow.pop %v3710
        %v3712 = vmul.f32 %v3665, 1.442695
        %v3713 = vpow.pop %v3712
        %v3714 = vmul.f32 %v3666, 1.442695
        %v3715 = vpow.pop %v3714
        %v3716 = vmul.f32 %v3667, 1.442695
        %v3717 = vpow.pop %v3716
        %v3718 = vmul.f32 %v3668, 1.442695
        %v3719 = vpow.pop %v3718
        %v3720 = vmul.f32 %v3669, 1.442695
        %v3721 = vpow.pop %v3720
        %v3722 = vmul.f32 %v3670, 1.442695
        %v3723 = vpow.pop %v3722
        %v3724 = vmul.f32 %v3671, 1.442695
        %v3725 = vpow.pop %v3724
        %v3726 = vmul.f32 %v3672, 1.442695
        %v3727 = vpow.pop %v3726
        %v3728 = vmul.f32 %v3673, 1.442695
        %v3729 = vpow.pop %v3728
        %v3730 = vmul.f32 %v3674, 1.442695
        %v3731 = vpow.pop %v3730
        %v3732 = vmul.f32 %v3675, 1.442695
        %v3733 = vpow.pop %v3732
        %v3734 = vmul.f32 %v3676, 1.442695
        %v3735 = vpow.pop %v3734
        %v3736 = vmul.f32 %v3677, 1.442695
        %v3737 = vpow.pop %v3736
        %v3738 = vmul.f32 %v3678, 1.442695
        %v3739 = vpow.pop %v3738
        %v3740 = vmul.f32 %v3679, 1.442695
        %v3741 = vpow.pop %v3740
        %v3742 = vmul.f32 %v3680, 1.442695
        %v3743 = vpow.pop %v3742
        %v3744 = vmul.f32 %v3681, 1.442695
        %v3745 = vpow.pop %v3744
        %v3746 = vadd.f32 %v3683, 1.0
        %v3747 = vadd.f32 %v3685, 1.0
        %v3748 = vadd.f32 %v3687, 1.0
        %v3749 = vadd.f32 %v3689, 1.0
        %v3750 = vadd.f32 %v3691, 1.0
        %v3751 = vadd.f32 %v3693, 1.0
        %v3752 = vadd.f32 %v3695, 1.0
        %v3753 = vadd.f32 %v3697, 1.0
        %v3754 = vadd.f32 %v3699, 1.0
        %v3755 = vadd.f32 %v3701, 1.0
        %v3756 = vadd.f32 %v3703, 1.0
        %v3757 = vadd.f32 %v3705, 1.0
        %v3758 = vadd.f32 %v3707, 1.0
        %v3759 = vadd.f32 %v3709, 1.0
        %v3760 = vadd.f32 %v3711, 1.0
        %v3761 = vadd.f32 %v3713, 1.0
        %v3762 = vadd.f32 %v3715, 1.0
        %v3763 = vadd.f32 %v3717, 1.0
        %v3764 = vadd.f32 %v3719, 1.0
        %v3765 = vadd.f32 %v3721, 1.0
        %v3766 = vadd.f32 %v3723, 1.0
        %v3767 = vadd.f32 %v3725, 1.0
        %v3768 = vadd.f32 %v3727, 1.0
        %v3769 = vadd.f32 %v3729, 1.0
        %v3770 = vadd.f32 %v3731, 1.0
        %v3771 = vadd.f32 %v3733, 1.0
        %v3772 = vadd.f32 %v3735, 1.0
        %v3773 = vadd.f32 %v3737, 1.0
        %v3774 = vadd.f32 %v3739, 1.0
        %v3775 = vadd.f32 %v3741, 1.0
        %v3776 = vadd.f32 %v3743, 1.0
        %v3777 = vadd.f32 %v3745, 1.0
        %v3778 = vrcp.pop %v3746
        %v3779 = vrcp.pop %v3747
        %v3780 = vrcp.pop %v3748
        %v3781 = vrcp.pop %v3749
        %v3782 = vrcp.pop %v3750
        %v3783 = vrcp.pop %v3751
        %v3784 = vrcp.pop %v3752
        %v3785 = vrcp.pop %v3753
        %v3786 = vrcp.pop %v3754
        %v3787 = vrcp.pop %v3755
        %v3788 = vrcp.pop %v3756
        %v3789 = vrcp.pop %v3757
        %v3790 = vrcp.pop %v3758
        %v3791 = vrcp.pop %v3759
        %v3792 = vrcp.pop %v3760
        %v3793 = vrcp.pop %v3761
        %v3794 = vrcp.pop %v3762
        %v3795 = vrcp.pop %v3763
        %v3796 = vrcp.pop %v3764
        %v3797 = vrcp.pop %v3765
        %v3798 = vrcp.pop %v3766
        %v3799 = vrcp.pop %v3767
        %v3800 = vrcp.pop %v3768
        %v3801 = vrcp.pop %v3769
        %v3802 = vrcp.pop %v3770
        %v3803 = vrcp.pop %v3771
        %v3804 = vrcp.pop %v3772
        %v3805 = vrcp.pop %v3773
        %v3806 = vrcp.pop %v3774
        %v3807 = vrcp.pop %v3775
        %v3808 = vrcp.pop %v3776
        %v3809 = vrcp.pop %v3777
        %v3810 = vmul.f32 %v209, %v3778
        %v3811 = vmul.f32 %v210, %v3779
        %v3812 = vmul.f32 %v211, %v3780
        %v3813 = vmul.f32 %v212, %v3781
        %v3814 = vmul.f32 %v213, %v3782
        %v3815 = vmul.f32 %v214, %v3783
        %v3816 = vmul.f32 %v215, %v3784
        %v3817 = vmul.f32 %v216, %v3785
        %v3818 = vmul.f32 %v217, %v3786
        %v3819 = vmul.f32 %v218, %v3787
        %v3820 = vmul.f32 %v219, %v3788
        %v3821 = vmul.f32 %v220, %v3789
        %v3822 = vmul.f32 %v221, %v3790
        %v3823 = vmul.f32 %v222, %v3791
        %v3824 = vmul.f32 %v223, %v3792
        %v3825 = vmul.f32 %v224, %v3793
        %v3826 = vmul.f32 %v225, %v3794
        %v3827 = vmul.f32 %v226, %v3795
        %v3828 = vmul.f32 %v227, %v3796
        %v3829 = vmul.f32 %v228, %v3797
        %v3830 = vmul.f32 %v229, %v3798
        %v3831 = vmul.f32 %v230, %v3799
        %v3832 = vmul.f32 %v231, %v3800
        %v3833 = vmul.f32 %v232, %v3801
        %v3834 = vmul.f32 %v233, %v3802
        %v3835 = vmul.f32 %v234, %v3803
        %v3836 = vmul.f32 %v235, %v3804
        %v3837 = vmul.f32 %v236, %v3805
        %v3838 = vmul.f32 %v237, %v3806
        %v3839 = vmul.f32 %v238, %v3807
        %v3840 = vmul.f32 %v239, %v3808
        %v3841 = vmul.f32 %v240, %v3809
        %3842 = vst [vmem:[%s207] sm:$0xff] %v3810
        %3843 = vst [vmem:[%s207 + $0x8] sm:$0xff] %v3811
        %3844 = vst [vmem:[%s207 + $0x10] sm:$0xff] %v3812
        %3845 = vst [vmem:[%s207 + $0x18] sm:$0xff] %v3813
        %3846 = vst [vmem:[%s207 + $0x20] sm:$0xff] %v3814
        %3847 = vst [vmem:[%s207 + $0x28] sm:$0xff] %v3815
        %3848 = vst [vmem:[%s207 + $0x30] sm:$0xff] %v3816
        %3849 = vst [vmem:[%s207 + $0x38] sm:$0xff] %v3817
        %3850 = vst [vmem:[%s207 + $0x40] sm:$0xff] %v3818
        %3851 = vst [vmem:[%s207 + $0x48] sm:$0xff] %v3819
        %3852 = vst [vmem:[%s207 + $0x50] sm:$0xff] %v3820
        %3853 = vst [vmem:[%s207 + $0x58] sm:$0xff] %v3821
        %3854 = vst [vmem:[%s207 + $0x60] sm:$0xff] %v3822
        %3855 = vst [vmem:[%s207 + $0x68] sm:$0xff] %v3823
        %3856 = vst [vmem:[%s207 + $0x70] sm:$0xff] %v3824
        %3857 = vst [vmem:[%s207 + $0x78] sm:$0xff] %v3825
        %3858 = vst [vmem:[%s207 + $0x80] sm:$0xff] %v3826
        %3859 = vst [vmem:[%s207 + $0x88] sm:$0xff] %v3827
        %3860 = vst [vmem:[%s207 + $0x90] sm:$0xff] %v3828
        %3861 = vst [vmem:[%s207 + $0x98] sm:$0xff] %v3829
        %3862 = vst [vmem:[%s207 + $0xa0] sm:$0xff] %v3830
        %3863 = vst [vmem:[%s207 + $0xa8] sm:$0xff] %v3831
        %3864 = vst [vmem:[%s207 + $0xb0] sm:$0xff] %v3832
        %3865 = vst [vmem:[%s207 + $0xb8] sm:$0xff] %v3833
        %3866 = vst [vmem:[%s207 + $0xc0] sm:$0xff] %v3834
        %3867 = vst [vmem:[%s207 + $0xc8] sm:$0xff] %v3835
        %3868 = vst [vmem:[%s207 + $0xd0] sm:$0xff] %v3836
        %3869 = vst [vmem:[%s207 + $0xd8] sm:$0xff] %v3837
        %3870 = vst [vmem:[%s207 + $0xe0] sm:$0xff] %v3838
        %3871 = vst [vmem:[%s207 + $0xe8] sm:$0xff] %v3839
        %3872 = vst [vmem:[%s207 + $0xf0] sm:$0xff] %v3840
        %3873 = vst [vmem:[%s207 + $0xf8] sm:$0xff] %v3841
        %s3874 = sand.u32 %s97, 1
        %s3875 = scalar_lea.sflag [#allocation6], %s3874
        %s3876 = sand.u32 %s97, 1
        %s3877 = smul.addr %s3876, 256
        %s3878 = scalar_lea.vmem [#allocation9], %s3877
        // Predicated region
        $region41: #{ba_forward_nhwc.1} parent=31 // pred_check
          %p3879 = pneg %p107
        $region42: #{ba_forward_nhwc.1} parent=31 // pred_check_branch
          %3881 = sbr.rel (%p3879) target = $region44
        $region43: #{ba_forward_nhwc.1} parent=31 // pred_region
          %3883 = vsyncadd %s3875, 0
          %s3884 = smul.addr %s21, 32
          %s3885 = smul.addr %s3884, 8
          %s3886 = scalar_lea.hbm %s3, %s3885
          %s3887 = sshll.u32 %s3878, 4
          %s3888 = int_to_ptr.vmem [resolvable:$true] %s3887
          %s3889 = sshll.u32 %s3886, 4
          %s3890 = int_to_ptr.hbm [resolvable:$true] %s3889
          %3895 = dma.vmem_to_hbm [thread:$0]  %s3888, 4096, %s3890, %s3875, 128, 128, 8
        $region44: #{ba_forward_nhwc.1} parent=31 // pred_fallthru
          _
      $region32: #{ba_forward_nhwc.1} parent=5 // pred_fallthru
        _
      %p3896 = scmp.le.s32.totalorder 2, %s16
      // Predicated region
      $region45: #{ba_forward_nhwc.1} parent=5 // pred_check
        %p3897 = pneg %p3896
      $region46: #{ba_forward_nhwc.1} parent=5 // pred_check_branch
        %3899 = sbr.rel (%p3897) target = $region48
      $region47: #{ba_forward_nhwc.1} parent=5 // pred_region
        %s3900 = ssub.s32 %s16, 2
        // Predicated region
        $region49: #{ba_forward_nhwc.1} parent=47 // pred_check
          %p3901 = pneg %p113
        $region50: #{ba_forward_nhwc.1} parent=47 // pred_check_branch
          %3903 = sbr.rel (%p3901) target = $region52
        $region51: #{ba_forward_nhwc.1} parent=47 // pred_region
          %s3904 = sand.u32 %s98, 1
          %s3905 = scalar_lea.sflag [#allocation6], %s3904
          %s3906 = sand.u32 %s98, 1
          %s3907 = smul.addr %s3906, 256
          %s3908 = scalar_lea.vmem [#allocation9], %s3907
          %3910 = dma.done %s3905, 4096
        $region52: #{ba_forward_nhwc.1} parent=47 // pred_fallthru
          _
      $region48: #{ba_forward_nhwc.1} parent=5 // pred_fallthru
        _
    $region6: #{ba_forward_nhwc.1} parent=1 // loop_footer
      %s20 = sadd.s32 1, %s16
    $region7: #{ba_forward_nhwc.1} parent=1 // loop_footer_branch
      %15 = sbr.rel target = $region3
    $region8: #{ba_forward_nhwc.1} parent=1 // loop_exit
      _
    %3911 = vsyncpa [#allocation5], 1
    %s3912 = scalar_lea.sflag [#allocation5], 1
    %3913 = vsyncpa %s3912, 1
    %3914 = vsyncpa [#allocation8], 1
    %3915 = vsyncpa [#allocation6], 1
    %s3916 = scalar_lea.sflag [#allocation6], 1
    %3917 = vsyncpa %s3916, 1

</llo_original>
